<compile_context>
chip_gen: v7x
topology: tpu7x:2x2x1
jax: 0.10.0
libtpu: 0.0.40
codegen_flags: <defaults>
</compile_context>

<pallas_src>
import functools

import jax
import jax.numpy as jnp
import numpy as np
from jax import lax
from jax.experimental import pallas as pl
from jax.experimental.pallas import tpu as pltpu


# ----------------------------------------------------------------------------
# Pallas kernel: GRU recurrence of one AGCRN layer.
# grid = (batch tiles [parallel], time chunks [arbitrary, sequential]).
# ----------------------------------------------------------------------------
def agcrn_recurrence_kernel(xg_ref, xu_ref, h0_ref, s2_ref, phg_ref, phu_ref,
                            egx_ref, eux_ref, out_ref, state_ref,
                            *, TT, Bt, N, K, De, H, mxu_dtype):
    # (Re-)initialise the persistent state at time-chunk 0 of every batch tile.
    @pl.when(pl.program_id(1) == 0)
    def _init():
        state_ref[...] = h0_ref[...]

    s2 = s2_ref[...]          # [(K-1)*N, N]   Chebyshev supports k>=1 (mxu dtype)
    egx = egx_ref[...]        # [N, De*2H]     E pre-expanded for the gate
    eux = eux_ref[...]        # [N, De*H]      E pre-expanded for the candidate

    def avwgcn_state(v, ph_ref, O, e_exp):
        """E-weighted graph conv of one batch element's state v [N, H] -> [N, O]."""
        vb = v.astype(mxu_dtype)
        # All Chebyshev terms k>=1 in one MXU matmul; k=0 is the identity (v).
        gs = jnp.dot(s2, vb, preferred_element_type=jnp.float32)        # [(K-1)N, H]
        tmp = jnp.dot(vb, ph_ref[0], preferred_element_type=jnp.float32)  # [N, De*O]
        for k in range(1, K):                                           # K small, static
            gk = gs[(k - 1) * N:k * N, :].astype(mxu_dtype)
            tmp = tmp + jnp.dot(gk, ph_ref[k], preferred_element_type=jnp.float32)
        # low-rank e-contract: out[n, o] = sum_d E[n, d] * tmp[n, d*O + o]
        prod = tmp * e_exp                       # E already lane-expanded (no bcasts)
        acc = prod[:, :O]
        for d in range(1, De):                   # De small, static
            acc = acc + prod[:, d * O:(d + 1) * O]
        return acc

    def step(tt, carry):
        xg_t = xg_ref[tt]                        # [Bt*N, 2H] hoisted x-path + gate bias
        xu_t = xu_ref[tt]                        # [Bt*N, H]  hoisted x-path + upd bias
        h_all = state_ref[...]                   # [Bt*N, H]
        new_states = []
        for b in range(Bt):                      # Bt is a small compile-time constant
            rows = slice(b * N, (b + 1) * N)
            h = h_all[rows, :]
            zr = jax.nn.sigmoid(avwgcn_state(h, phg_ref, 2 * H, egx) + xg_t[rows, :])
            z = zr[:, :H]
            r = zr[:, H:]
            hc = jnp.tanh(avwgcn_state(z * h, phu_ref, H, eux) + xu_t[rows, :])
            new_states.append(r * h + (1.0 - r) * hc)
        h_next = new_states[0] if Bt == 1 else jnp.concatenate(new_states, axis=0)
        state_ref[...] = h_next
        out_ref[tt] = h_next.astype(out_ref.dtype)
        return carry

    lax.fori_loop(0, TT, step, 0, unroll=True)   # drop unroll if spilling on v5e


def run_agcrn_layer(xg, xu, h0, s2, phg, phu, egx, eux,
                    *, N, H, K, De, TT, n_tiles):
    """Run the GRU recurrence over the full sequence for one layer."""
    T, BN, _ = xg.shape
    Bt = BN // (N * n_tiles)
    BtN = Bt * N
    mxu_dtype = s2.dtype

    kernel = functools.partial(agcrn_recurrence_kernel, TT=TT, Bt=Bt, N=N, K=K,
                               De=De, H=H, mxu_dtype=mxu_dtype)
    return pl.pallas_call(
        kernel,
        out_shape=jax.ShapeDtypeStruct((T, BN, H), jnp.float32),
        grid_spec=pltpu.PrefetchScalarGridSpec(
            num_scalar_prefetch=0,
            grid=(n_tiles, T // TT),
            in_specs=[
                pl.BlockSpec((TT, BtN, 2 * H), lambda bt, c: (c, bt, 0)),   # x-path (gate)
                pl.BlockSpec((TT, BtN, H), lambda bt, c: (c, bt, 0)),       # x-path (cand)
                pl.BlockSpec((BtN, H), lambda bt, c: (bt, 0)),              # init state
                pl.BlockSpec(((K - 1) * N, N), lambda bt, c: (0, 0)),       # supports k>=1
                pl.BlockSpec((K, H, De * 2 * H), lambda bt, c: (0, 0, 0)),  # gate pool (h)
                pl.BlockSpec((K, H, De * H), lambda bt, c: (0, 0, 0)),      # upd pool (h)
                pl.BlockSpec((N, De * 2 * H), lambda bt, c: (0, 0)),        # E exp (gate)
                pl.BlockSpec((N, De * H), lambda bt, c: (0, 0)),            # E exp (upd)
            ],
            out_specs=pl.BlockSpec((TT, BtN, H), lambda bt, c: (c, bt, 0)),
            scratch_shapes=[pltpu.VMEM((BtN, H), jnp.float32)],             # GRU state
        ),
        compiler_params=pltpu.CompilerParams(
            dimension_semantics=("parallel", "arbitrary"),   # batch tiles || time seq
            vmem_limit_bytes=32 * 1024 * 1024),
    )(xg, xu, h0, s2, phg, phu, egx, eux)


# ----------------------------------------------------------------------------
# Plain-JAX glue: one-time per-layer preparation (constant over time) and the
# hoisted, time-parallel x path.
# ----------------------------------------------------------------------------
def compute_supports(E, cheb_k):
    N = E.shape[0]
    A = jax.nn.softmax(jax.nn.relu(E @ E.T), axis=1)
    support_set = [jnp.eye(N, dtype=E.dtype), A]
    for _ in range(2, cheb_k):
        support_set.append(2.0 * A @ support_set[-1] - support_set[-2])
    return jnp.stack(support_set, axis=0)                    # [K, N, N]


def prep_state_pool(w, Cin):
    # w: [De, K, Cin+H, O] -> state part rearranged to [K, H, De*O] (lane = d*O+o)
    De, K, C, O = w.shape
    return jnp.transpose(w[:, :, Cin:, :], (1, 2, 0, 3)).reshape(K, C - Cin, De * O)


def compute_x_path(x_tbn, B, N, E, supports, gw, gb, uw, ub, H):
    """Hoisted non-recurrent path: x graph conv + pool + e-contract + biases,
    for all T timesteps and both gates at once.  Returns [T, B*N, 2H], [T, B*N, H]."""
    T, BN, Cin = x_tbn.shape
    x4 = x_tbn.reshape(T, B, N, Cin)
    xg_k = jnp.einsum('knm,tbmc->tbknc', supports, x4)                    # [T,B,K,N,Cin]
    # fuse gate and candidate x-side pools along the output (lane) axis
    wx = jnp.concatenate([gw[:, :, :Cin, :], uw[:, :, :Cin, :]], axis=-1)  # [De,K,Cin,3H]
    Wx = jnp.einsum('nd,dkio->nkio', E, wx)                                # [N,K,Cin,3H]
    xc = jnp.einsum('tbknc,nkco->tbno', xg_k, Wx)                          # [T,B,N,3H]
    x_gate = (xc[..., :2 * H] + E @ gb).reshape(T, BN, 2 * H)
    x_cand = (xc[..., 2 * H:] + E @ ub).reshape(T, BN, H)
    return x_gate.astype(jnp.float32), x_cand.astype(jnp.float32)


def avwdcrnn_forward(x, init_state, node_embeddings, params, cheb_k, hidden_dim,
                     *, time_chunk=4, num_batch_tiles=2, mxu_dtype=jnp.bfloat16):
    """x: [B, T, N, dim_in]; init_state: [L, B, N, H]; returns (output, hidden)."""
    B, T, N, Cin0 = x.shape
    H = hidden_dim
    De = node_embeddings.shape[1]
    assert cheb_k >= 2, "cheb_k must be >= 2 (matches the PyTorch module's usage)"

    TT = max(1, min(time_chunk, T))
    while T % TT:
        TT -= 1
    n_tiles = max(1, min(num_batch_tiles, B))
    while B % n_tiles:
        n_tiles -= 1

    supports = compute_supports(node_embeddings, cheb_k)                   # [K, N, N]
    s2 = supports[1:].reshape((cheb_k - 1) * N, N).astype(mxu_dtype)       # no identity
    egx = jnp.repeat(node_embeddings, 2 * H, axis=1).astype(jnp.float32)   # [N, De*2H]
    eux = jnp.repeat(node_embeddings, H, axis=1).astype(jnp.float32)       # [N, De*H]

    # layout plumbing: [B, T, N, C] -> [T, B*N, C]; layer outputs feed the next
    # layer in this same layout with no transposes.
    current = jnp.transpose(x, (1, 0, 2, 3)).reshape(T, B * N, Cin0).astype(jnp.float32)
    output_hidden = []
    for i, p in enumerate(params):
        Cin = current.shape[-1]
        xg, xu = compute_x_path(current, B, N, node_embeddings, supports,
                                p['gw'], p['gb'], p['uw'], p['ub'], H)
        phg = prep_state_pool(p['gw'], Cin).astype(mxu_dtype)
        phu = prep_state_pool(p['uw'], Cin).astype(mxu_dtype)
        h0 = init_state[i].reshape(B * N, H).astype(jnp.float32)
        current = run_agcrn_layer(xg, xu, h0, s2, phg, phu, egx, eux,
                                  N=N, H=H, K=cheb_k, De=De, TT=TT, n_tiles=n_tiles)
        output_hidden.append(current[-1].reshape(B, N, H))
    output = current.reshape(T, B, N, H).transpose(1, 0, 2, 3)
    return output, output_hidden


# ----------------------------------------------------------------------------
# Pure-JAX reference (mirrors the PyTorch module) for validation
# ----------------------------------------------------------------------------
def ref_avwgcn(x, E, weights_pool, bias_pool, cheb_k):
    N = E.shape[0]
    A = jax.nn.softmax(jax.nn.relu(E @ E.T), axis=1)
    support_set = [jnp.eye(N, dtype=x.dtype), A]
    for _ in range(2, cheb_k):
        support_set.append(2.0 * A @ support_set[-1] - support_set[-2])
    supports = jnp.stack(support_set, axis=0)
    weights = jnp.einsum('nd,dkio->nkio', E, weights_pool)
    bias = E @ bias_pool
    x_g = jnp.einsum('knm,bmc->bknc', supports, x)
    x_g = jnp.transpose(x_g, (0, 2, 1, 3))
    return jnp.einsum('bnki,nkio->bno', x_g, weights) + bias


def ref_cell(x, state, E, gw, gb, uw, ub, cheb_k, H):
    inp = jnp.concatenate([x, state], axis=-1)
    zr = jax.nn.sigmoid(ref_avwgcn(inp, E, gw, gb, cheb_k))
    z, r = zr[..., :H], zr[..., H:]
    cand = jnp.concatenate([x, z * state], axis=-1)
    hc = jnp.tanh(ref_avwgcn(cand, E, uw, ub, cheb_k))
    return r * state + (1.0 - r) * hc


def ref_forward(x, init_state, E, params, cheb_k, H):
    B, T, N, _ = x.shape
    current = x
    hiddens = []
    for i, p in enumerate(params):
        state = init_state[i]
        states = []
        for t in range(T):
            state = ref_cell(current[:, t], state, E,
                             p['gw'], p['gb'], p['uw'], p['ub'], cheb_k, H)
            states.append(state)
        hiddens.append(state)
        current = jnp.stack(states, axis=1)
    return current, hiddens


# ----------------------------------------------------------------------------
if __name__ == "__main__":
    # small shapes: batch=2, seq=8, nodes=16, dim_in=4, hidden=32, cheb_k=3,
    # embed_dim=8, num_layers=2
    B, T, N, Cin, H, K, De, L = 2, 8, 16, 4, 32, 3, 8, 2

    key = jax.random.PRNGKey(0)
    keys = jax.random.split(key, 2 + 4 * L)
    x = jax.random.normal(keys[0], (B, T, N, Cin), jnp.float32)
    E = jax.random.normal(keys[1], (N, De), jnp.float32)        # node embeddings
    init_state = jnp.zeros((L, B, N, H), jnp.float32)           # init_hidden()

    params = []
    ki = 2
    for layer in range(L):
        din = Cin if layer == 0 else H
        c = din + H
        gw = 0.1 * jax.random.normal(keys[ki], (De, K, c, 2 * H), jnp.float32); ki += 1
        gb = 0.1 * jax.random.normal(keys[ki], (De, 2 * H), jnp.float32); ki += 1
        uw = 0.1 * jax.random.normal(keys[ki], (De, K, c, H), jnp.float32); ki += 1
        ub = 0.1 * jax.random.normal(keys[ki], (De, H), jnp.float32); ki += 1
        params.append(dict(gw=gw, gb=gb, uw=uw, ub=ub))

    out_ref, hidden_ref = ref_forward(x, init_state, E, params, K, H)

    # 1) f32 MXU path: tight structural/indexing check against the reference.
    out32, hid32 = avwdcrnn_forward(x, init_state, E, params, K, H,
                                    time_chunk=4, num_batch_tiles=2,
                                    mxu_dtype=jnp.float32)
    out32 = jax.block_until_ready(out32)
    hid32 = [jax.block_until_ready(h) for h in hid32]
    np.testing.assert_allclose(np.asarray(out32), np.asarray(out_ref),
                               rtol=2e-3, atol=2e-3)
    for h_k, h_r in zip(hid32, hidden_ref):
        np.testing.assert_allclose(np.asarray(h_k), np.asarray(h_r),
                                   rtol=2e-3, atol=2e-3)

    # 2) bf16-operand MXU path (v6e/v7x perf config, f32 accumulate): loose check.
    outbf, _ = avwdcrnn_forward(x, init_state, E, params, K, H,
                                time_chunk=4, num_batch_tiles=2,
                                mxu_dtype=jnp.bfloat16)
    outbf = jax.block_until_ready(outbf)
    np.testing.assert_allclose(np.asarray(outbf), np.asarray(out_ref),
                               rtol=0.0, atol=0.25)

    print("KERNEL_OK")
</pallas_src>

<mosaic_0001>
module attributes {stable_mosaic.version = 11 : i64} {
  func.func @agcrn_recurrence_kernel(%arg0: i32, %arg1: i32, %arg2: memref<4x16x64xf32, #tpu.memory_space<vmem>>, %arg3: memref<4x16x32xf32, #tpu.memory_space<vmem>>, %arg4: memref<16x32xf32, #tpu.memory_space<vmem>>, %arg5: memref<32x16xf32, #tpu.memory_space<vmem>>, %arg6: memref<3x32x512xf32, #tpu.memory_space<vmem>>, %arg7: memref<3x32x256xf32, #tpu.memory_space<vmem>>, %arg8: memref<16x512xf32, #tpu.memory_space<vmem>>, %arg9: memref<16x256xf32, #tpu.memory_space<vmem>>, %arg10: memref<4x16x32xf32, #tpu.memory_space<vmem>>, %arg11: memref<16x32xf32, #tpu.memory_space<vmem>>) attributes {dimension_semantics = [#tpu.dimension_semantics<parallel>, #tpu.dimension_semantics<arbitrary>], iteration_bounds = array<i64: 2, 2>, scalar_prefetch = 0 : i64, scratch_operands = 1 : i64, tpu.core_type = #tpu.core_type<tc>, window_params = [{transform_indices = @transform_0, window_bounds = array<i64: 4, 16, 64>}, {transform_indices = @transform_1, window_bounds = array<i64: 4, 16, 32>}, {transform_indices = @transform_2, window_bounds = array<i64: 16, 32>}, {pipeline_mode = #tpu.pipeline_mode<synchronous>, transform_indices = @transform_3, window_bounds = array<i64: 32, 16>}, {pipeline_mode = #tpu.pipeline_mode<synchronous>, transform_indices = @transform_4, window_bounds = array<i64: 3, 32, 512>}, {pipeline_mode = #tpu.pipeline_mode<synchronous>, transform_indices = @transform_5, window_bounds = array<i64: 3, 32, 256>}, {pipeline_mode = #tpu.pipeline_mode<synchronous>, transform_indices = @transform_6, window_bounds = array<i64: 16, 512>}, {pipeline_mode = #tpu.pipeline_mode<synchronous>, transform_indices = @transform_7, window_bounds = array<i64: 16, 256>}, {transform_indices = @transform_8, window_bounds = array<i64: 4, 16, 32>}]} {
    %c0_i32 = arith.constant 0 : i32
    %0 = arith.cmpi eq, %arg1, %c0_i32 : i32
    %1 = arith.extui %0 : i1 to i32
    %c0_i32_0 = arith.constant 0 : i32
    %2 = arith.cmpi ne, %1, %c0_i32_0 : i32
    scf.if %2 {
      %c0_156 = arith.constant 0 : index
      %c0_157 = arith.constant 0 : index
      %358 = vector.load %arg4[%c0_156, %c0_157] : memref<16x32xf32, #tpu.memory_space<vmem>>, vector<16x32xf32>
      %c0_158 = arith.constant 0 : index
      %c0_159 = arith.constant 0 : index
      %359 = vector.load %arg11[%c0_158, %c0_159] : memref<16x32xf32, #tpu.memory_space<vmem>>, vector<16x32xf32>
      tpu.vector_store %arg11[%c0_158, %c0_159], %358 {strides = array<i32>} : memref<16x32xf32, #tpu.memory_space<vmem>>, vector<16x32xf32>,
    } else {
    }
    %c0 = arith.constant 0 : index
    %c0_1 = arith.constant 0 : index
    %3 = vector.load %arg5[%c0, %c0_1] : memref<32x16xf32, #tpu.memory_space<vmem>>, vector<32x16xf32>
    %c0_2 = arith.constant 0 : index
    %c0_3 = arith.constant 0 : index
    %4 = vector.load %arg8[%c0_2, %c0_3] : memref<16x512xf32, #tpu.memory_space<vmem>>, vector<16x512xf32>
    %c0_4 = arith.constant 0 : index
    %c0_5 = arith.constant 0 : index
    %5 = vector.load %arg9[%c0_4, %c0_5] : memref<16x256xf32, #tpu.memory_space<vmem>>, vector<16x256xf32>
    %c0_i32_6 = arith.constant 0 : i32
    %6 = arith.index_cast %c0_i32_6 : i32 to index
    %c0_7 = arith.constant 0 : index
    %c0_8 = arith.constant 0 : index
    %7 = vector.load %arg2[%6, %c0_7, %c0_8] : memref<4x16x64xf32, #tpu.memory_space<vmem>>, vector<1x16x64xf32>
    %8 = vector.shape_cast %7 : vector<1x16x64xf32> to vector<16x64xf32>
    %9 = arith.index_cast %c0_i32_6 : i32 to index
    %c0_9 = arith.constant 0 : index
    %c0_10 = arith.constant 0 : index
    %10 = vector.load %arg3[%9, %c0_9, %c0_10] : memref<4x16x32xf32, #tpu.memory_space<vmem>>, vector<1x16x32xf32>
    %11 = vector.shape_cast %10 : vector<1x16x32xf32> to vector<16x32xf32>
    %c0_11 = arith.constant 0 : index
    %c0_12 = arith.constant 0 : index
    %12 = vector.load %arg11[%c0_11, %c0_12] : memref<16x32xf32, #tpu.memory_space<vmem>>, vector<16x32xf32>
    %cst = arith.constant dense<0.000000e+00> : vector<32x32xf32>
    %13 = tpu.matmul %3, %12, %cst {dimension_numbers = #tpu.dot_dimension_numbers<[1], [0], [0], [1], [0, 0, 1, 1], [], []>} : vector<32x16xf32>, vector<16x32xf32>, vector<32x32xf32> -> vector<32x32xf32>
    %c0_13 = arith.constant 0 : index
    %c0_14 = arith.constant 0 : index
    %c0_15 = arith.constant 0 : index
    %14 = vector.load %arg6[%c0_13, %c0_14, %c0_15] : memref<3x32x512xf32, #tpu.memory_space<vmem>>, vector<1x32x512xf32>
    %15 = vector.shape_cast %14 : vector<1x32x512xf32> to vector<32x512xf32>
    %cst_16 = arith.constant dense<0.000000e+00> : vector<16x512xf32>
    %16 = tpu.matmul %12, %15, %cst_16 {dimension_numbers = #tpu.dot_dimension_numbers<[1], [0], [0], [1], [0, 0, 1, 1], [], []>} : vector<16x32xf32>, vector<32x512xf32>, vector<16x512xf32> -> vector<16x512xf32>
    %17 = vector.extract_strided_slice %13 {offsets = [0, 0], sizes = [16, 32], strides = [1, 1]} : vector<32x32xf32> to vector<16x32xf32>
    %c1 = arith.constant 1 : index
    %c0_17 = arith.constant 0 : index
    %c0_18 = arith.constant 0 : index
    %18 = vector.load %arg6[%c1, %c0_17, %c0_18] : memref<3x32x512xf32, #tpu.memory_space<vmem>>, vector<1x32x512xf32>
    %19 = vector.shape_cast %18 : vector<1x32x512xf32> to vector<32x512xf32>
    %cst_19 = arith.constant dense<0.000000e+00> : vector<16x512xf32>
    %20 = tpu.matmul %17, %19, %cst_19 {dimension_numbers = #tpu.dot_dimension_numbers<[1], [0], [0], [1], [0, 0, 1, 1], [], []>} : vector<16x32xf32>, vector<32x512xf32>, vector<16x512xf32> -> vector<16x512xf32>
    %21 = arith.addf %16, %20 : vector<16x512xf32>
    %22 = vector.extract_strided_slice %13 {offsets = [16, 0], sizes = [16, 32], strides = [1, 1]} : vector<32x32xf32> to vector<16x32xf32>
    %c2 = arith.constant 2 : index
    %c0_20 = arith.constant 0 : index
    %c0_21 = arith.constant 0 : index
    %23 = vector.load %arg6[%c2, %c0_20, %c0_21] : memref<3x32x512xf32, #tpu.memory_space<vmem>>, vector<1x32x512xf32>
    %24 = vector.shape_cast %23 : vector<1x32x512xf32> to vector<32x512xf32>
    %cst_22 = arith.constant dense<0.000000e+00> : vector<16x512xf32>
    %25 = tpu.matmul %22, %24, %cst_22 {dimension_numbers = #tpu.dot_dimension_numbers<[1], [0], [0], [1], [0, 0, 1, 1], [], []>} : vector<16x32xf32>, vector<32x512xf32>, vector<16x512xf32> -> vector<16x512xf32>
    %26 = arith.addf %21, %25 : vector<16x512xf32>
    %27 = arith.mulf %26, %4 : vector<16x512xf32>
    %28 = vector.extract_strided_slice %27 {offsets = [0, 0], sizes = [16, 64], strides = [1, 1]} : vector<16x512xf32> to vector<16x64xf32>
    %29 = vector.extract_strided_slice %27 {offsets = [0, 64], sizes = [16, 64], strides = [1, 1]} : vector<16x512xf32> to vector<16x64xf32>
    %30 = arith.addf %28, %29 : vector<16x64xf32>
    %31 = vector.extract_strided_slice %27 {offsets = [0, 128], sizes = [16, 64], strides = [1, 1]} : vector<16x512xf32> to vector<16x64xf32>
    %32 = arith.addf %30, %31 : vector<16x64xf32>
    %33 = vector.extract_strided_slice %27 {offsets = [0, 192], sizes = [16, 64], strides = [1, 1]} : vector<16x512xf32> to vector<16x64xf32>
    %34 = arith.addf %32, %33 : vector<16x64xf32>
    %35 = vector.extract_strided_slice %27 {offsets = [0, 256], sizes = [16, 64], strides = [1, 1]} : vector<16x512xf32> to vector<16x64xf32>
    %36 = arith.addf %34, %35 : vector<16x64xf32>
    %37 = vector.extract_strided_slice %27 {offsets = [0, 320], sizes = [16, 64], strides = [1, 1]} : vector<16x512xf32> to vector<16x64xf32>
    %38 = arith.addf %36, %37 : vector<16x64xf32>
    %39 = vector.extract_strided_slice %27 {offsets = [0, 384], sizes = [16, 64], strides = [1, 1]} : vector<16x512xf32> to vector<16x64xf32>
    %40 = arith.addf %38, %39 : vector<16x64xf32>
    %41 = vector.extract_strided_slice %27 {offsets = [0, 448], sizes = [16, 64], strides = [1, 1]} : vector<16x512xf32> to vector<16x64xf32>
    %42 = arith.addf %40, %41 : vector<16x64xf32>
    %43 = arith.addf %42, %8 : vector<16x64xf32>
    %44 = arith.negf %43 : vector<16x64xf32>
    %45 = math.exp %44 : vector<16x64xf32>
    %cst_23 = arith.constant 1.000000e+00 : f32
    %46 = vector.broadcast %cst_23 : f32 to vector<16x64xf32>
    %47 = arith.addf %46, %45 : vector<16x64xf32>
    %48 = arith.divf %46, %47 : vector<16x64xf32>
    %49 = vector.extract_strided_slice %48 {offsets = [0, 0], sizes = [16, 32], strides = [1, 1]} : vector<16x64xf32> to vector<16x32xf32>
    %50 = vector.extract_strided_slice %48 {offsets = [0, 32], sizes = [16, 32], strides = [1, 1]} : vector<16x64xf32> to vector<16x32xf32>
    %51 = arith.mulf %49, %12 : vector<16x32xf32>
    %cst_24 = arith.constant dense<0.000000e+00> : vector<32x32xf32>
    %52 = tpu.matmul %3, %51, %cst_24 {dimension_numbers = #tpu.dot_dimension_numbers<[1], [0], [0], [1], [0, 0, 1, 1], [], []>} : vector<32x16xf32>, vector<16x32xf32>, vector<32x32xf32> -> vector<32x32xf32>
    %c0_25 = arith.constant 0 : index
    %c0_26 = arith.constant 0 : index
    %c0_27 = arith.constant 0 : index
    %53 = vector.load %arg7[%c0_25, %c0_26, %c0_27] : memref<3x32x256xf32, #tpu.memory_space<vmem>>, vector<1x32x256xf32>
    %54 = vector.shape_cast %53 : vector<1x32x256xf32> to vector<32x256xf32>
    %cst_28 = arith.constant dense<0.000000e+00> : vector<16x256xf32>
    %55 = tpu.matmul %51, %54, %cst_28 {dimension_numbers = #tpu.dot_dimension_numbers<[1], [0], [0], [1], [0, 0, 1, 1], [], []>} : vector<16x32xf32>, vector<32x256xf32>, vector<16x256xf32> -> vector<16x256xf32>
    %56 = vector.extract_strided_slice %52 {offsets = [0, 0], sizes = [16, 32], strides = [1, 1]} : vector<32x32xf32> to vector<16x32xf32>
    %c1_29 = arith.constant 1 : index
    %c0_30 = arith.constant 0 : index
    %c0_31 = arith.constant 0 : index
    %57 = vector.load %arg7[%c1_29, %c0_30, %c0_31] : memref<3x32x256xf32, #tpu.memory_space<vmem>>, vector<1x32x256xf32>
    %58 = vector.shape_cast %57 : vector<1x32x256xf32> to vector<32x256xf32>
    %cst_32 = arith.constant dense<0.000000e+00> : vector<16x256xf32>
    %59 = tpu.matmul %56, %58, %cst_32 {dimension_numbers = #tpu.dot_dimension_numbers<[1], [0], [0], [1], [0, 0, 1, 1], [], []>} : vector<16x32xf32>, vector<32x256xf32>, vector<16x256xf32> -> vector<16x256xf32>
    %60 = arith.addf %55, %59 : vector<16x256xf32>
    %61 = vector.extract_strided_slice %52 {offsets = [16, 0], sizes = [16, 32], strides = [1, 1]} : vector<32x32xf32> to vector<16x32xf32>
    %c2_33 = arith.constant 2 : index
    %c0_34 = arith.constant 0 : index
    %c0_35 = arith.constant 0 : index
    %62 = vector.load %arg7[%c2_33, %c0_34, %c0_35] : memref<3x32x256xf32, #tpu.memory_space<vmem>>, vector<1x32x256xf32>
    %63 = vector.shape_cast %62 : vector<1x32x256xf32> to vector<32x256xf32>
    %cst_36 = arith.constant dense<0.000000e+00> : vector<16x256xf32>
    %64 = tpu.matmul %61, %63, %cst_36 {dimension_numbers = #tpu.dot_dimension_numbers<[1], [0], [0], [1], [0, 0, 1, 1], [], []>} : vector<16x32xf32>, vector<32x256xf32>, vector<16x256xf32> -> vector<16x256xf32>
    %65 = arith.addf %60, %64 : vector<16x256xf32>
    %66 = arith.mulf %65, %5 : vector<16x256xf32>
    %67 = vector.extract_strided_slice %66 {offsets = [0, 0], sizes = [16, 32], strides = [1, 1]} : vector<16x256xf32> to vector<16x32xf32>
    %68 = vector.extract_strided_slice %66 {offsets = [0, 32], sizes = [16, 32], strides = [1, 1]} : vector<16x256xf32> to vector<16x32xf32>
    %69 = arith.addf %67, %68 : vector<16x32xf32>
    %70 = vector.extract_strided_slice %66 {offsets = [0, 64], sizes = [16, 32], strides = [1, 1]} : vector<16x256xf32> to vector<16x32xf32>
    %71 = arith.addf %69, %70 : vector<16x32xf32>
    %72 = vector.extract_strided_slice %66 {offsets = [0, 96], sizes = [16, 32], strides = [1, 1]} : vector<16x256xf32> to vector<16x32xf32>
    %73 = arith.addf %71, %72 : vector<16x32xf32>
    %74 = vector.extract_strided_slice %66 {offsets = [0, 128], sizes = [16, 32], strides = [1, 1]} : vector<16x256xf32> to vector<16x32xf32>
    %75 = arith.addf %73, %74 : vector<16x32xf32>
    %76 = vector.extract_strided_slice %66 {offsets = [0, 160], sizes = [16, 32], strides = [1, 1]} : vector<16x256xf32> to vector<16x32xf32>
    %77 = arith.addf %75, %76 : vector<16x32xf32>
    %78 = vector.extract_strided_slice %66 {offsets = [0, 192], sizes = [16, 32], strides = [1, 1]} : vector<16x256xf32> to vector<16x32xf32>
    %79 = arith.addf %77, %78 : vector<16x32xf32>
    %80 = vector.extract_strided_slice %66 {offsets = [0, 224], sizes = [16, 32], strides = [1, 1]} : vector<16x256xf32> to vector<16x32xf32>
    %81 = arith.addf %79, %80 : vector<16x32xf32>
    %82 = arith.addf %81, %11 : vector<16x32xf32>
    %83 = math.tanh %82 : vector<16x32xf32>
    %84 = arith.mulf %50, %12 : vector<16x32xf32>
    %cst_37 = arith.constant 1.000000e+00 : f32
    %85 = vector.broadcast %cst_37 : f32 to vector<16x32xf32>
    %86 = arith.subf %85, %50 : vector<16x32xf32>
    %87 = arith.mulf %86, %83 : vector<16x32xf32>
    %88 = arith.addf %84, %87 : vector<16x32xf32>
    %c0_38 = arith.constant 0 : index
    %c0_39 = arith.constant 0 : index
    %89 = vector.load %arg11[%c0_38, %c0_39] : memref<16x32xf32, #tpu.memory_space<vmem>>, vector<16x32xf32>
    tpu.vector_store %arg11[%c0_38, %c0_39], %88 {strides = array<i32>} : memref<16x32xf32, #tpu.memory_space<vmem>>, vector<16x32xf32>,
    %90 = arith.index_cast %c0_i32_6 : i32 to index
    %c0_40 = arith.constant 0 : index
    %c0_41 = arith.constant 0 : index
    %91 = vector.load %arg10[%90, %c0_40, %c0_41] : memref<4x16x32xf32, #tpu.memory_space<vmem>>, vector<1x16x32xf32>
    %92 = vector.shape_cast %91 : vector<1x16x32xf32> to vector<16x32xf32>
    %93 = vector.shape_cast %88 : vector<16x32xf32> to vector<1x16x32xf32>
    tpu.vector_store %arg10[%90, %c0_40, %c0_41], %93 {strides = array<i32>} : memref<4x16x32xf32, #tpu.memory_space<vmem>>, vector<1x16x32xf32>,
    %c1_i32 = arith.constant 1 : i32
    %94 = arith.index_cast %c1_i32 : i32 to index
    %c0_42 = arith.constant 0 : index
    %c0_43 = arith.constant 0 : index
    %95 = vector.load %arg2[%94, %c0_42, %c0_43] : memref<4x16x64xf32, #tpu.memory_space<vmem>>, vector<1x16x64xf32>
    %96 = vector.shape_cast %95 : vector<1x16x64xf32> to vector<16x64xf32>
    %97 = arith.index_cast %c1_i32 : i32 to index
    %c0_44 = arith.constant 0 : index
    %c0_45 = arith.constant 0 : index
    %98 = vector.load %arg3[%97, %c0_44, %c0_45] : memref<4x16x32xf32, #tpu.memory_space<vmem>>, vector<1x16x32xf32>
    %99 = vector.shape_cast %98 : vector<1x16x32xf32> to vector<16x32xf32>
    %c0_46 = arith.constant 0 : index
    %c0_47 = arith.constant 0 : index
    %100 = vector.load %arg11[%c0_46, %c0_47] : memref<16x32xf32, #tpu.memory_space<vmem>>, vector<16x32xf32>
    %cst_48 = arith.constant dense<0.000000e+00> : vector<32x32xf32>
    %101 = tpu.matmul %3, %100, %cst_48 {dimension_numbers = #tpu.dot_dimension_numbers<[1], [0], [0], [1], [0, 0, 1, 1], [], []>} : vector<32x16xf32>, vector<16x32xf32>, vector<32x32xf32> -> vector<32x32xf32>
    %c0_49 = arith.constant 0 : index
    %c0_50 = arith.constant 0 : index
    %c0_51 = arith.constant 0 : index
    %102 = vector.load %arg6[%c0_49, %c0_50, %c0_51] : memref<3x32x512xf32, #tpu.memory_space<vmem>>, vector<1x32x512xf32>
    %103 = vector.shape_cast %102 : vector<1x32x512xf32> to vector<32x512xf32>
    %cst_52 = arith.constant dense<0.000000e+00> : vector<16x512xf32>
    %104 = tpu.matmul %100, %103, %cst_52 {dimension_numbers = #tpu.dot_dimension_numbers<[1], [0], [0], [1], [0, 0, 1, 1], [], []>} : vector<16x32xf32>, vector<32x512xf32>, vector<16x512xf32> -> vector<16x512xf32>
    %105 = vector.extract_strided_slice %101 {offsets = [0, 0], sizes = [16, 32], strides = [1, 1]} : vector<32x32xf32> to vector<16x32xf32>
    %c1_53 = arith.constant 1 : index
    %c0_54 = arith.constant 0 : index
    %c0_55 = arith.constant 0 : index
    %106 = vector.load %arg6[%c1_53, %c0_54, %c0_55] : memref<3x32x512xf32, #tpu.memory_space<vmem>>, vector<1x32x512xf32>
    %107 = vector.shape_cast %106 : vector<1x32x512xf32> to vector<32x512xf32>
    %cst_56 = arith.constant dense<0.000000e+00> : vector<16x512xf32>
    %108 = tpu.matmul %105, %107, %cst_56 {dimension_numbers = #tpu.dot_dimension_numbers<[1], [0], [0], [1], [0, 0, 1, 1], [], []>} : vector<16x32xf32>, vector<32x512xf32>, vector<16x512xf32> -> vector<16x512xf32>
    %109 = arith.addf %104, %108 : vector<16x512xf32>
    %110 = vector.extract_strided_slice %101 {offsets = [16, 0], sizes = [16, 32], strides = [1, 1]} : vector<32x32xf32> to vector<16x32xf32>
    %c2_57 = arith.constant 2 : index
    %c0_58 = arith.constant 0 : index
    %c0_59 = arith.constant 0 : index
    %111 = vector.load %arg6[%c2_57, %c0_58, %c0_59] : memref<3x32x512xf32, #tpu.memory_space<vmem>>, vector<1x32x512xf32>
    %112 = vector.shape_cast %111 : vector<1x32x512xf32> to vector<32x512xf32>
    %cst_60 = arith.constant dense<0.000000e+00> : vector<16x512xf32>
    %113 = tpu.matmul %110, %112, %cst_60 {dimension_numbers = #tpu.dot_dimension_numbers<[1], [0], [0], [1], [0, 0, 1, 1], [], []>} : vector<16x32xf32>, vector<32x512xf32>, vector<16x512xf32> -> vector<16x512xf32>
    %114 = arith.addf %109, %113 : vector<16x512xf32>
    %115 = arith.mulf %114, %4 : vector<16x512xf32>
    %116 = vector.extract_strided_slice %115 {offsets = [0, 0], sizes = [16, 64], strides = [1, 1]} : vector<16x512xf32> to vector<16x64xf32>
    %117 = vector.extract_strided_slice %115 {offsets = [0, 64], sizes = [16, 64], strides = [1, 1]} : vector<16x512xf32> to vector<16x64xf32>
    %118 = arith.addf %116, %117 : vector<16x64xf32>
    %119 = vector.extract_strided_slice %115 {offsets = [0, 128], sizes = [16, 64], strides = [1, 1]} : vector<16x512xf32> to vector<16x64xf32>
    %120 = arith.addf %118, %119 : vector<16x64xf32>
    %121 = vector.extract_strided_slice %115 {offsets = [0, 192], sizes = [16, 64], strides = [1, 1]} : vector<16x512xf32> to vector<16x64xf32>
    %122 = arith.addf %120, %121 : vector<16x64xf32>
    %123 = vector.extract_strided_slice %115 {offsets = [0, 256], sizes = [16, 64], strides = [1, 1]} : vector<16x512xf32> to vector<16x64xf32>
    %124 = arith.addf %122, %123 : vector<16x64xf32>
    %125 = vector.extract_strided_slice %115 {offsets = [0, 320], sizes = [16, 64], strides = [1, 1]} : vector<16x512xf32> to vector<16x64xf32>
    %126 = arith.addf %124, %125 : vector<16x64xf32>
    %127 = vector.extract_strided_slice %115 {offsets = [0, 384], sizes = [16, 64], strides = [1, 1]} : vector<16x512xf32> to vector<16x64xf32>
    %128 = arith.addf %126, %127 : vector<16x64xf32>
    %129 = vector.extract_strided_slice %115 {offsets = [0, 448], sizes = [16, 64], strides = [1, 1]} : vector<16x512xf32> to vector<16x64xf32>
    %130 = arith.addf %128, %129 : vector<16x64xf32>
    %131 = arith.addf %130, %96 : vector<16x64xf32>
    %132 = arith.negf %131 : vector<16x64xf32>
    %133 = math.exp %132 : vector<16x64xf32>
    %cst_61 = arith.constant 1.000000e+00 : f32
    %134 = vector.broadcast %cst_61 : f32 to vector<16x64xf32>
    %135 = arith.addf %134, %133 : vector<16x64xf32>
    %136 = arith.divf %134, %135 : vector<16x64xf32>
    %137 = vector.extract_strided_slice %136 {offsets = [0, 0], sizes = [16, 32], strides = [1, 1]} : vector<16x64xf32> to vector<16x32xf32>
    %138 = vector.extract_strided_slice %136 {offsets = [0, 32], sizes = [16, 32], strides = [1, 1]} : vector<16x64xf32> to vector<16x32xf32>
    %139 = arith.mulf %137, %100 : vector<16x32xf32>
    %cst_62 = arith.constant dense<0.000000e+00> : vector<32x32xf32>
    %140 = tpu.matmul %3, %139, %cst_62 {dimension_numbers = #tpu.dot_dimension_numbers<[1], [0], [0], [1], [0, 0, 1, 1], [], []>} : vector<32x16xf32>, vector<16x32xf32>, vector<32x32xf32> -> vector<32x32xf32>
    %c0_63 = arith.constant 0 : index
    %c0_64 = arith.constant 0 : index
    %c0_65 = arith.constant 0 : index
    %141 = vector.load %arg7[%c0_63, %c0_64, %c0_65] : memref<3x32x256xf32, #tpu.memory_space<vmem>>, vector<1x32x256xf32>
    %142 = vector.shape_cast %141 : vector<1x32x256xf32> to vector<32x256xf32>
    %cst_66 = arith.constant dense<0.000000e+00> : vector<16x256xf32>
    %143 = tpu.matmul %139, %142, %cst_66 {dimension_numbers = #tpu.dot_dimension_numbers<[1], [0], [0], [1], [0, 0, 1, 1], [], []>} : vector<16x32xf32>, vector<32x256xf32>, vector<16x256xf32> -> vector<16x256xf32>
    %144 = vector.extract_strided_slice %140 {offsets = [0, 0], sizes = [16, 32], strides = [1, 1]} : vector<32x32xf32> to vector<16x32xf32>
    %c1_67 = arith.constant 1 : index
    %c0_68 = arith.constant 0 : index
    %c0_69 = arith.constant 0 : index
    %145 = vector.load %arg7[%c1_67, %c0_68, %c0_69] : memref<3x32x256xf32, #tpu.memory_space<vmem>>, vector<1x32x256xf32>
    %146 = vector.shape_cast %145 : vector<1x32x256xf32> to vector<32x256xf32>
    %cst_70 = arith.constant dense<0.000000e+00> : vector<16x256xf32>
    %147 = tpu.matmul %144, %146, %cst_70 {dimension_numbers = #tpu.dot_dimension_numbers<[1], [0], [0], [1], [0, 0, 1, 1], [], []>} : vector<16x32xf32>, vector<32x256xf32>, vector<16x256xf32> -> vector<16x256xf32>
    %148 = arith.addf %143, %147 : vector<16x256xf32>
    %149 = vector.extract_strided_slice %140 {offsets = [16, 0], sizes = [16, 32], strides = [1, 1]} : vector<32x32xf32> to vector<16x32xf32>
    %c2_71 = arith.constant 2 : index
    %c0_72 = arith.constant 0 : index
    %c0_73 = arith.constant 0 : index
    %150 = vector.load %arg7[%c2_71, %c0_72, %c0_73] : memref<3x32x256xf32, #tpu.memory_space<vmem>>, vector<1x32x256xf32>
    %151 = vector.shape_cast %150 : vector<1x32x256xf32> to vector<32x256xf32>
    %cst_74 = arith.constant dense<0.000000e+00> : vector<16x256xf32>
    %152 = tpu.matmul %149, %151, %cst_74 {dimension_numbers = #tpu.dot_dimension_numbers<[1], [0], [0], [1], [0, 0, 1, 1], [], []>} : vector<16x32xf32>, vector<32x256xf32>, vector<16x256xf32> -> vector<16x256xf32>
    %153 = arith.addf %148, %152 : vector<16x256xf32>
    %154 = arith.mulf %153, %5 : vector<16x256xf32>
    %155 = vector.extract_strided_slice %154 {offsets = [0, 0], sizes = [16, 32], strides = [1, 1]} : vector<16x256xf32> to vector<16x32xf32>
    %156 = vector.extract_strided_slice %154 {offsets = [0, 32], sizes = [16, 32], strides = [1, 1]} : vector<16x256xf32> to vector<16x32xf32>
    %157 = arith.addf %155, %156 : vector<16x32xf32>
    %158 = vector.extract_strided_slice %154 {offsets = [0, 64], sizes = [16, 32], strides = [1, 1]} : vector<16x256xf32> to vector<16x32xf32>
    %159 = arith.addf %157, %158 : vector<16x32xf32>
    %160 = vector.extract_strided_slice %154 {offsets = [0, 96], sizes = [16, 32], strides = [1, 1]} : vector<16x256xf32> to vector<16x32xf32>
    %161 = arith.addf %159, %160 : vector<16x32xf32>
    %162 = vector.extract_strided_slice %154 {offsets = [0, 128], sizes = [16, 32], strides = [1, 1]} : vector<16x256xf32> to vector<16x32xf32>
    %163 = arith.addf %161, %162 : vector<16x32xf32>
    %164 = vector.extract_strided_slice %154 {offsets = [0, 160], sizes = [16, 32], strides = [1, 1]} : vector<16x256xf32> to vector<16x32xf32>
    %165 = arith.addf %163, %164 : vector<16x32xf32>
    %166 = vector.extract_strided_slice %154 {offsets = [0, 192], sizes = [16, 32], strides = [1, 1]} : vector<16x256xf32> to vector<16x32xf32>
    %167 = arith.addf %165, %166 : vector<16x32xf32>
    %168 = vector.extract_strided_slice %154 {offsets = [0, 224], sizes = [16, 32], strides = [1, 1]} : vector<16x256xf32> to vector<16x32xf32>
    %169 = arith.addf %167, %168 : vector<16x32xf32>
    %170 = arith.addf %169, %99 : vector<16x32xf32>
    %171 = math.tanh %170 : vector<16x32xf32>
    %172 = arith.mulf %138, %100 : vector<16x32xf32>
    %cst_75 = arith.constant 1.000000e+00 : f32
    %173 = vector.broadcast %cst_75 : f32 to vector<16x32xf32>
    %174 = arith.subf %173, %138 : vector<16x32xf32>
    %175 = arith.mulf %174, %171 : vector<16x32xf32>
    %176 = arith.addf %172, %175 : vector<16x32xf32>
    %c0_76 = arith.constant 0 : index
    %c0_77 = arith.constant 0 : index
    %177 = vector.load %arg11[%c0_76, %c0_77] : memref<16x32xf32, #tpu.memory_space<vmem>>, vector<16x32xf32>
    tpu.vector_store %arg11[%c0_76, %c0_77], %176 {strides = array<i32>} : memref<16x32xf32, #tpu.memory_space<vmem>>, vector<16x32xf32>,
    %178 = arith.index_cast %c1_i32 : i32 to index
    %c0_78 = arith.constant 0 : index
    %c0_79 = arith.constant 0 : index
    %179 = vector.load %arg10[%178, %c0_78, %c0_79] : memref<4x16x32xf32, #tpu.memory_space<vmem>>, vector<1x16x32xf32>
    %180 = vector.shape_cast %179 : vector<1x16x32xf32> to vector<16x32xf32>
    %181 = vector.shape_cast %176 : vector<16x32xf32> to vector<1x16x32xf32>
    tpu.vector_store %arg10[%178, %c0_78, %c0_79], %181 {strides = array<i32>} : memref<4x16x32xf32, #tpu.memory_space<vmem>>, vector<1x16x32xf32>,
    %c2_i32 = arith.constant 2 : i32
    %182 = arith.index_cast %c2_i32 : i32 to index
    %c0_80 = arith.constant 0 : index
    %c0_81 = arith.constant 0 : index
    %183 = vector.load %arg2[%182, %c0_80, %c0_81] : memref<4x16x64xf32, #tpu.memory_space<vmem>>, vector<1x16x64xf32>
    %184 = vector.shape_cast %183 : vector<1x16x64xf32> to vector<16x64xf32>
    %185 = arith.index_cast %c2_i32 : i32 to index
    %c0_82 = arith.constant 0 : index
    %c0_83 = arith.constant 0 : index
    %186 = vector.load %arg3[%185, %c0_82, %c0_83] : memref<4x16x32xf32, #tpu.memory_space<vmem>>, vector<1x16x32xf32>
    %187 = vector.shape_cast %186 : vector<1x16x32xf32> to vector<16x32xf32>
    %c0_84 = arith.constant 0 : index
    %c0_85 = arith.constant 0 : index
    %188 = vector.load %arg11[%c0_84, %c0_85] : memref<16x32xf32, #tpu.memory_space<vmem>>, vector<16x32xf32>
    %cst_86 = arith.constant dense<0.000000e+00> : vector<32x32xf32>
    %189 = tpu.matmul %3, %188, %cst_86 {dimension_numbers = #tpu.dot_dimension_numbers<[1], [0], [0], [1], [0, 0, 1, 1], [], []>} : vector<32x16xf32>, vector<16x32xf32>, vector<32x32xf32> -> vector<32x32xf32>
    %c0_87 = arith.constant 0 : index
    %c0_88 = arith.constant 0 : index
    %c0_89 = arith.constant 0 : index
    %190 = vector.load %arg6[%c0_87, %c0_88, %c0_89] : memref<3x32x512xf32, #tpu.memory_space<vmem>>, vector<1x32x512xf32>
    %191 = vector.shape_cast %190 : vector<1x32x512xf32> to vector<32x512xf32>
    %cst_90 = arith.constant dense<0.000000e+00> : vector<16x512xf32>
    %192 = tpu.matmul %188, %191, %cst_90 {dimension_numbers = #tpu.dot_dimension_numbers<[1], [0], [0], [1], [0, 0, 1, 1], [], []>} : vector<16x32xf32>, vector<32x512xf32>, vector<16x512xf32> -> vector<16x512xf32>
    %193 = vector.extract_strided_slice %189 {offsets = [0, 0], sizes = [16, 32], strides = [1, 1]} : vector<32x32xf32> to vector<16x32xf32>
    %c1_91 = arith.constant 1 : index
    %c0_92 = arith.constant 0 : index
    %c0_93 = arith.constant 0 : index
    %194 = vector.load %arg6[%c1_91, %c0_92, %c0_93] : memref<3x32x512xf32, #tpu.memory_space<vmem>>, vector<1x32x512xf32>
    %195 = vector.shape_cast %194 : vector<1x32x512xf32> to vector<32x512xf32>
    %cst_94 = arith.constant dense<0.000000e+00> : vector<16x512xf32>
    %196 = tpu.matmul %193, %195, %cst_94 {dimension_numbers = #tpu.dot_dimension_numbers<[1], [0], [0], [1], [0, 0, 1, 1], [], []>} : vector<16x32xf32>, vector<32x512xf32>, vector<16x512xf32> -> vector<16x512xf32>
    %197 = arith.addf %192, %196 : vector<16x512xf32>
    %198 = vector.extract_strided_slice %189 {offsets = [16, 0], sizes = [16, 32], strides = [1, 1]} : vector<32x32xf32> to vector<16x32xf32>
    %c2_95 = arith.constant 2 : index
    %c0_96 = arith.constant 0 : index
    %c0_97 = arith.constant 0 : index
    %199 = vector.load %arg6[%c2_95, %c0_96, %c0_97] : memref<3x32x512xf32, #tpu.memory_space<vmem>>, vector<1x32x512xf32>
    %200 = vector.shape_cast %199 : vector<1x32x512xf32> to vector<32x512xf32>
    %cst_98 = arith.constant dense<0.000000e+00> : vector<16x512xf32>
    %201 = tpu.matmul %198, %200, %cst_98 {dimension_numbers = #tpu.dot_dimension_numbers<[1], [0], [0], [1], [0, 0, 1, 1], [], []>} : vector<16x32xf32>, vector<32x512xf32>, vector<16x512xf32> -> vector<16x512xf32>
    %202 = arith.addf %197, %201 : vector<16x512xf32>
    %203 = arith.mulf %202, %4 : vector<16x512xf32>
    %204 = vector.extract_strided_slice %203 {offsets = [0, 0], sizes = [16, 64], strides = [1, 1]} : vector<16x512xf32> to vector<16x64xf32>
    %205 = vector.extract_strided_slice %203 {offsets = [0, 64], sizes = [16, 64], strides = [1, 1]} : vector<16x512xf32> to vector<16x64xf32>
    %206 = arith.addf %204, %205 : vector<16x64xf32>
    %207 = vector.extract_strided_slice %203 {offsets = [0, 128], sizes = [16, 64], strides = [1, 1]} : vector<16x512xf32> to vector<16x64xf32>
    %208 = arith.addf %206, %207 : vector<16x64xf32>
    %209 = vector.extract_strided_slice %203 {offsets = [0, 192], sizes = [16, 64], strides = [1, 1]} : vector<16x512xf32> to vector<16x64xf32>
    %210 = arith.addf %208, %209 : vector<16x64xf32>
    %211 = vector.extract_strided_slice %203 {offsets = [0, 256], sizes = [16, 64], strides = [1, 1]} : vector<16x512xf32> to vector<16x64xf32>
    %212 = arith.addf %210, %211 : vector<16x64xf32>
    %213 = vector.extract_strided_slice %203 {offsets = [0, 320], sizes = [16, 64], strides = [1, 1]} : vector<16x512xf32> to vector<16x64xf32>
    %214 = arith.addf %212, %213 : vector<16x64xf32>
    %215 = vector.extract_strided_slice %203 {offsets = [0, 384], sizes = [16, 64], strides = [1, 1]} : vector<16x512xf32> to vector<16x64xf32>
    %216 = arith.addf %214, %215 : vector<16x64xf32>
    %217 = vector.extract_strided_slice %203 {offsets = [0, 448], sizes = [16, 64], strides = [1, 1]} : vector<16x512xf32> to vector<16x64xf32>
    %218 = arith.addf %216, %217 : vector<16x64xf32>
    %219 = arith.addf %218, %184 : vector<16x64xf32>
    %220 = arith.negf %219 : vector<16x64xf32>
    %221 = math.exp %220 : vector<16x64xf32>
    %cst_99 = arith.constant 1.000000e+00 : f32
    %222 = vector.broadcast %cst_99 : f32 to vector<16x64xf32>
    %223 = arith.addf %222, %221 : vector<16x64xf32>
    %224 = arith.divf %222, %223 : vector<16x64xf32>
    %225 = vector.extract_strided_slice %224 {offsets = [0, 0], sizes = [16, 32], strides = [1, 1]} : vector<16x64xf32> to vector<16x32xf32>
    %226 = vector.extract_strided_slice %224 {offsets = [0, 32], sizes = [16, 32], strides = [1, 1]} : vector<16x64xf32> to vector<16x32xf32>
    %227 = arith.mulf %225, %188 : vector<16x32xf32>
    %cst_100 = arith.constant dense<0.000000e+00> : vector<32x32xf32>
    %228 = tpu.matmul %3, %227, %cst_100 {dimension_numbers = #tpu.dot_dimension_numbers<[1], [0], [0], [1], [0, 0, 1, 1], [], []>} : vector<32x16xf32>, vector<16x32xf32>, vector<32x32xf32> -> vector<32x32xf32>
    %c0_101 = arith.constant 0 : index
    %c0_102 = arith.constant 0 : index
    %c0_103 = arith.constant 0 : index
    %229 = vector.load %arg7[%c0_101, %c0_102, %c0_103] : memref<3x32x256xf32, #tpu.memory_space<vmem>>, vector<1x32x256xf32>
    %230 = vector.shape_cast %229 : vector<1x32x256xf32> to vector<32x256xf32>
    %cst_104 = arith.constant dense<0.000000e+00> : vector<16x256xf32>
    %231 = tpu.matmul %227, %230, %cst_104 {dimension_numbers = #tpu.dot_dimension_numbers<[1], [0], [0], [1], [0, 0, 1, 1], [], []>} : vector<16x32xf32>, vector<32x256xf32>, vector<16x256xf32> -> vector<16x256xf32>
    %232 = vector.extract_strided_slice %228 {offsets = [0, 0], sizes = [16, 32], strides = [1, 1]} : vector<32x32xf32> to vector<16x32xf32>
    %c1_105 = arith.constant 1 : index
    %c0_106 = arith.constant 0 : index
    %c0_107 = arith.constant 0 : index
    %233 = vector.load %arg7[%c1_105, %c0_106, %c0_107] : memref<3x32x256xf32, #tpu.memory_space<vmem>>, vector<1x32x256xf32>
    %234 = vector.shape_cast %233 : vector<1x32x256xf32> to vector<32x256xf32>
    %cst_108 = arith.constant dense<0.000000e+00> : vector<16x256xf32>
    %235 = tpu.matmul %232, %234, %cst_108 {dimension_numbers = #tpu.dot_dimension_numbers<[1], [0], [0], [1], [0, 0, 1, 1], [], []>} : vector<16x32xf32>, vector<32x256xf32>, vector<16x256xf32> -> vector<16x256xf32>
    %236 = arith.addf %231, %235 : vector<16x256xf32>
    %237 = vector.extract_strided_slice %228 {offsets = [16, 0], sizes = [16, 32], strides = [1, 1]} : vector<32x32xf32> to vector<16x32xf32>
    %c2_109 = arith.constant 2 : index
    %c0_110 = arith.constant 0 : index
    %c0_111 = arith.constant 0 : index
    %238 = vector.load %arg7[%c2_109, %c0_110, %c0_111] : memref<3x32x256xf32, #tpu.memory_space<vmem>>, vector<1x32x256xf32>
    %239 = vector.shape_cast %238 : vector<1x32x256xf32> to vector<32x256xf32>
    %cst_112 = arith.constant dense<0.000000e+00> : vector<16x256xf32>
    %240 = tpu.matmul %237, %239, %cst_112 {dimension_numbers = #tpu.dot_dimension_numbers<[1], [0], [0], [1], [0, 0, 1, 1], [], []>} : vector<16x32xf32>, vector<32x256xf32>, vector<16x256xf32> -> vector<16x256xf32>
    %241 = arith.addf %236, %240 : vector<16x256xf32>
    %242 = arith.mulf %241, %5 : vector<16x256xf32>
    %243 = vector.extract_strided_slice %242 {offsets = [0, 0], sizes = [16, 32], strides = [1, 1]} : vector<16x256xf32> to vector<16x32xf32>
    %244 = vector.extract_strided_slice %242 {offsets = [0, 32], sizes = [16, 32], strides = [1, 1]} : vector<16x256xf32> to vector<16x32xf32>
    %245 = arith.addf %243, %244 : vector<16x32xf32>
    %246 = vector.extract_strided_slice %242 {offsets = [0, 64], sizes = [16, 32], strides = [1, 1]} : vector<16x256xf32> to vector<16x32xf32>
    %247 = arith.addf %245, %246 : vector<16x32xf32>
    %248 = vector.extract_strided_slice %242 {offsets = [0, 96], sizes = [16, 32], strides = [1, 1]} : vector<16x256xf32> to vector<16x32xf32>
    %249 = arith.addf %247, %248 : vector<16x32xf32>
    %250 = vector.extract_strided_slice %242 {offsets = [0, 128], sizes = [16, 32], strides = [1, 1]} : vector<16x256xf32> to vector<16x32xf32>
    %251 = arith.addf %249, %250 : vector<16x32xf32>
    %252 = vector.extract_strided_slice %242 {offsets = [0, 160], sizes = [16, 32], strides = [1, 1]} : vector<16x256xf32> to vector<16x32xf32>
    %253 = arith.addf %251, %252 : vector<16x32xf32>
    %254 = vector.extract_strided_slice %242 {offsets = [0, 192], sizes = [16, 32], strides = [1, 1]} : vector<16x256xf32> to vector<16x32xf32>
    %255 = arith.addf %253, %254 : vector<16x32xf32>
    %256 = vector.extract_strided_slice %242 {offsets = [0, 224], sizes = [16, 32], strides = [1, 1]} : vector<16x256xf32> to vector<16x32xf32>
    %257 = arith.addf %255, %256 : vector<16x32xf32>
    %258 = arith.addf %257, %187 : vector<16x32xf32>
    %259 = math.tanh %258 : vector<16x32xf32>
    %260 = arith.mulf %226, %188 : vector<16x32xf32>
    %cst_113 = arith.constant 1.000000e+00 : f32
    %261 = vector.broadcast %cst_113 : f32 to vector<16x32xf32>
    %262 = arith.subf %261, %226 : vector<16x32xf32>
    %263 = arith.mulf %262, %259 : vector<16x32xf32>
    %264 = arith.addf %260, %263 : vector<16x32xf32>
    %c0_114 = arith.constant 0 : index
    %c0_115 = arith.constant 0 : index
    %265 = vector.load %arg11[%c0_114, %c0_115] : memref<16x32xf32, #tpu.memory_space<vmem>>, vector<16x32xf32>
    tpu.vector_store %arg11[%c0_114, %c0_115], %264 {strides = array<i32>} : memref<16x32xf32, #tpu.memory_space<vmem>>, vector<16x32xf32>,
    %266 = arith.index_cast %c2_i32 : i32 to index
    %c0_116 = arith.constant 0 : index
    %c0_117 = arith.constant 0 : index
    %267 = vector.load %arg10[%266, %c0_116, %c0_117] : memref<4x16x32xf32, #tpu.memory_space<vmem>>, vector<1x16x32xf32>
    %268 = vector.shape_cast %267 : vector<1x16x32xf32> to vector<16x32xf32>
    %269 = vector.shape_cast %264 : vector<16x32xf32> to vector<1x16x32xf32>
    tpu.vector_store %arg10[%266, %c0_116, %c0_117], %269 {strides = array<i32>} : memref<4x16x32xf32, #tpu.memory_space<vmem>>, vector<1x16x32xf32>,
    %c3_i32 = arith.constant 3 : i32
    %270 = arith.index_cast %c3_i32 : i32 to index
    %c0_118 = arith.constant 0 : index
    %c0_119 = arith.constant 0 : index
    %271 = vector.load %arg2[%270, %c0_118, %c0_119] : memref<4x16x64xf32, #tpu.memory_space<vmem>>, vector<1x16x64xf32>
    %272 = vector.shape_cast %271 : vector<1x16x64xf32> to vector<16x64xf32>
    %273 = arith.index_cast %c3_i32 : i32 to index
    %c0_120 = arith.constant 0 : index
    %c0_121 = arith.constant 0 : index
    %274 = vector.load %arg3[%273, %c0_120, %c0_121] : memref<4x16x32xf32, #tpu.memory_space<vmem>>, vector<1x16x32xf32>
    %275 = vector.shape_cast %274 : vector<1x16x32xf32> to vector<16x32xf32>
    %c0_122 = arith.constant 0 : index
    %c0_123 = arith.constant 0 : index
    %276 = vector.load %arg11[%c0_122, %c0_123] : memref<16x32xf32, #tpu.memory_space<vmem>>, vector<16x32xf32>
    %cst_124 = arith.constant dense<0.000000e+00> : vector<32x32xf32>
    %277 = tpu.matmul %3, %276, %cst_124 {dimension_numbers = #tpu.dot_dimension_numbers<[1], [0], [0], [1], [0, 0, 1, 1], [], []>} : vector<32x16xf32>, vector<16x32xf32>, vector<32x32xf32> -> vector<32x32xf32>
    %c0_125 = arith.constant 0 : index
    %c0_126 = arith.constant 0 : index
    %c0_127 = arith.constant 0 : index
    %278 = vector.load %arg6[%c0_125, %c0_126, %c0_127] : memref<3x32x512xf32, #tpu.memory_space<vmem>>, vector<1x32x512xf32>
    %279 = vector.shape_cast %278 : vector<1x32x512xf32> to vector<32x512xf32>
    %cst_128 = arith.constant dense<0.000000e+00> : vector<16x512xf32>
    %280 = tpu.matmul %276, %279, %cst_128 {dimension_numbers = #tpu.dot_dimension_numbers<[1], [0], [0], [1], [0, 0, 1, 1], [], []>} : vector<16x32xf32>, vector<32x512xf32>, vector<16x512xf32> -> vector<16x512xf32>
    %281 = vector.extract_strided_slice %277 {offsets = [0, 0], sizes = [16, 32], strides = [1, 1]} : vector<32x32xf32> to vector<16x32xf32>
    %c1_129 = arith.constant 1 : index
    %c0_130 = arith.constant 0 : index
    %c0_131 = arith.constant 0 : index
    %282 = vector.load %arg6[%c1_129, %c0_130, %c0_131] : memref<3x32x512xf32, #tpu.memory_space<vmem>>, vector<1x32x512xf32>
    %283 = vector.shape_cast %282 : vector<1x32x512xf32> to vector<32x512xf32>
    %cst_132 = arith.constant dense<0.000000e+00> : vector<16x512xf32>
    %284 = tpu.matmul %281, %283, %cst_132 {dimension_numbers = #tpu.dot_dimension_numbers<[1], [0], [0], [1], [0, 0, 1, 1], [], []>} : vector<16x32xf32>, vector<32x512xf32>, vector<16x512xf32> -> vector<16x512xf32>
    %285 = arith.addf %280, %284 : vector<16x512xf32>
    %286 = vector.extract_strided_slice %277 {offsets = [16, 0], sizes = [16, 32], strides = [1, 1]} : vector<32x32xf32> to vector<16x32xf32>
    %c2_133 = arith.constant 2 : index
    %c0_134 = arith.constant 0 : index
    %c0_135 = arith.constant 0 : index
    %287 = vector.load %arg6[%c2_133, %c0_134, %c0_135] : memref<3x32x512xf32, #tpu.memory_space<vmem>>, vector<1x32x512xf32>
    %288 = vector.shape_cast %287 : vector<1x32x512xf32> to vector<32x512xf32>
    %cst_136 = arith.constant dense<0.000000e+00> : vector<16x512xf32>
    %289 = tpu.matmul %286, %288, %cst_136 {dimension_numbers = #tpu.dot_dimension_numbers<[1], [0], [0], [1], [0, 0, 1, 1], [], []>} : vector<16x32xf32>, vector<32x512xf32>, vector<16x512xf32> -> vector<16x512xf32>
    %290 = arith.addf %285, %289 : vector<16x512xf32>
    %291 = arith.mulf %290, %4 : vector<16x512xf32>
    %292 = vector.extract_strided_slice %291 {offsets = [0, 0], sizes = [16, 64], strides = [1, 1]} : vector<16x512xf32> to vector<16x64xf32>
    %293 = vector.extract_strided_slice %291 {offsets = [0, 64], sizes = [16, 64], strides = [1, 1]} : vector<16x512xf32> to vector<16x64xf32>
    %294 = arith.addf %292, %293 : vector<16x64xf32>
    %295 = vector.extract_strided_slice %291 {offsets = [0, 128], sizes = [16, 64], strides = [1, 1]} : vector<16x512xf32> to vector<16x64xf32>
    %296 = arith.addf %294, %295 : vector<16x64xf32>
    %297 = vector.extract_strided_slice %291 {offsets = [0, 192], sizes = [16, 64], strides = [1, 1]} : vector<16x512xf32> to vector<16x64xf32>
    %298 = arith.addf %296, %297 : vector<16x64xf32>
    %299 = vector.extract_strided_slice %291 {offsets = [0, 256], sizes = [16, 64], strides = [1, 1]} : vector<16x512xf32> to vector<16x64xf32>
    %300 = arith.addf %298, %299 : vector<16x64xf32>
    %301 = vector.extract_strided_slice %291 {offsets = [0, 320], sizes = [16, 64], strides = [1, 1]} : vector<16x512xf32> to vector<16x64xf32>
    %302 = arith.addf %300, %301 : vector<16x64xf32>
    %303 = vector.extract_strided_slice %291 {offsets = [0, 384], sizes = [16, 64], strides = [1, 1]} : vector<16x512xf32> to vector<16x64xf32>
    %304 = arith.addf %302, %303 : vector<16x64xf32>
    %305 = vector.extract_strided_slice %291 {offsets = [0, 448], sizes = [16, 64], strides = [1, 1]} : vector<16x512xf32> to vector<16x64xf32>
    %306 = arith.addf %304, %305 : vector<16x64xf32>
    %307 = arith.addf %306, %272 : vector<16x64xf32>
    %308 = arith.negf %307 : vector<16x64xf32>
    %309 = math.exp %308 : vector<16x64xf32>
    %cst_137 = arith.constant 1.000000e+00 : f32
    %310 = vector.broadcast %cst_137 : f32 to vector<16x64xf32>
    %311 = arith.addf %310, %309 : vector<16x64xf32>
    %312 = arith.divf %310, %311 : vector<16x64xf32>
    %313 = vector.extract_strided_slice %312 {offsets = [0, 0], sizes = [16, 32], strides = [1, 1]} : vector<16x64xf32> to vector<16x32xf32>
    %314 = vector.extract_strided_slice %312 {offsets = [0, 32], sizes = [16, 32], strides = [1, 1]} : vector<16x64xf32> to vector<16x32xf32>
    %315 = arith.mulf %313, %276 : vector<16x32xf32>
    %cst_138 = arith.constant dense<0.000000e+00> : vector<32x32xf32>
    %316 = tpu.matmul %3, %315, %cst_138 {dimension_numbers = #tpu.dot_dimension_numbers<[1], [0], [0], [1], [0, 0, 1, 1], [], []>} : vector<32x16xf32>, vector<16x32xf32>, vector<32x32xf32> -> vector<32x32xf32>
    %c0_139 = arith.constant 0 : index
    %c0_140 = arith.constant 0 : index
    %c0_141 = arith.constant 0 : index
    %317 = vector.load %arg7[%c0_139, %c0_140, %c0_141] : memref<3x32x256xf32, #tpu.memory_space<vmem>>, vector<1x32x256xf32>
    %318 = vector.shape_cast %317 : vector<1x32x256xf32> to vector<32x256xf32>
    %cst_142 = arith.constant dense<0.000000e+00> : vector<16x256xf32>
    %319 = tpu.matmul %315, %318, %cst_142 {dimension_numbers = #tpu.dot_dimension_numbers<[1], [0], [0], [1], [0, 0, 1, 1], [], []>} : vector<16x32xf32>, vector<32x256xf32>, vector<16x256xf32> -> vector<16x256xf32>
    %320 = vector.extract_strided_slice %316 {offsets = [0, 0], sizes = [16, 32], strides = [1, 1]} : vector<32x32xf32> to vector<16x32xf32>
    %c1_143 = arith.constant 1 : index
    %c0_144 = arith.constant 0 : index
    %c0_145 = arith.constant 0 : index
    %321 = vector.load %arg7[%c1_143, %c0_144, %c0_145] : memref<3x32x256xf32, #tpu.memory_space<vmem>>, vector<1x32x256xf32>
    %322 = vector.shape_cast %321 : vector<1x32x256xf32> to vector<32x256xf32>
    %cst_146 = arith.constant dense<0.000000e+00> : vector<16x256xf32>
    %323 = tpu.matmul %320, %322, %cst_146 {dimension_numbers = #tpu.dot_dimension_numbers<[1], [0], [0], [1], [0, 0, 1, 1], [], []>} : vector<16x32xf32>, vector<32x256xf32>, vector<16x256xf32> -> vector<16x256xf32>
    %324 = arith.addf %319, %323 : vector<16x256xf32>
    %325 = vector.extract_strided_slice %316 {offsets = [16, 0], sizes = [16, 32], strides = [1, 1]} : vector<32x32xf32> to vector<16x32xf32>
    %c2_147 = arith.constant 2 : index
    %c0_148 = arith.constant 0 : index
    %c0_149 = arith.constant 0 : index
    %326 = vector.load %arg7[%c2_147, %c0_148, %c0_149] : memref<3x32x256xf32, #tpu.memory_space<vmem>>, vector<1x32x256xf32>
    %327 = vector.shape_cast %326 : vector<1x32x256xf32> to vector<32x256xf32>
    %cst_150 = arith.constant dense<0.000000e+00> : vector<16x256xf32>
    %328 = tpu.matmul %325, %327, %cst_150 {dimension_numbers = #tpu.dot_dimension_numbers<[1], [0], [0], [1], [0, 0, 1, 1], [], []>} : vector<16x32xf32>, vector<32x256xf32>, vector<16x256xf32> -> vector<16x256xf32>
    %329 = arith.addf %324, %328 : vector<16x256xf32>
    %330 = arith.mulf %329, %5 : vector<16x256xf32>
    %331 = vector.extract_strided_slice %330 {offsets = [0, 0], sizes = [16, 32], strides = [1, 1]} : vector<16x256xf32> to vector<16x32xf32>
    %332 = vector.extract_strided_slice %330 {offsets = [0, 32], sizes = [16, 32], strides = [1, 1]} : vector<16x256xf32> to vector<16x32xf32>
    %333 = arith.addf %331, %332 : vector<16x32xf32>
    %334 = vector.extract_strided_slice %330 {offsets = [0, 64], sizes = [16, 32], strides = [1, 1]} : vector<16x256xf32> to vector<16x32xf32>
    %335 = arith.addf %333, %334 : vector<16x32xf32>
    %336 = vector.extract_strided_slice %330 {offsets = [0, 96], sizes = [16, 32], strides = [1, 1]} : vector<16x256xf32> to vector<16x32xf32>
    %337 = arith.addf %335, %336 : vector<16x32xf32>
    %338 = vector.extract_strided_slice %330 {offsets = [0, 128], sizes = [16, 32], strides = [1, 1]} : vector<16x256xf32> to vector<16x32xf32>
    %339 = arith.addf %337, %338 : vector<16x32xf32>
    %340 = vector.extract_strided_slice %330 {offsets = [0, 160], sizes = [16, 32], strides = [1, 1]} : vector<16x256xf32> to vector<16x32xf32>
    %341 = arith.addf %339, %340 : vector<16x32xf32>
    %342 = vector.extract_strided_slice %330 {offsets = [0, 192], sizes = [16, 32], strides = [1, 1]} : vector<16x256xf32> to vector<16x32xf32>
    %343 = arith.addf %341, %342 : vector<16x32xf32>
    %344 = vector.extract_strided_slice %330 {offsets = [0, 224], sizes = [16, 32], strides = [1, 1]} : vector<16x256xf32> to vector<16x32xf32>
    %345 = arith.addf %343, %344 : vector<16x32xf32>
    %346 = arith.addf %345, %275 : vector<16x32xf32>
    %347 = math.tanh %346 : vector<16x32xf32>
    %348 = arith.mulf %314, %276 : vector<16x32xf32>
    %cst_151 = arith.constant 1.000000e+00 : f32
    %349 = vector.broadcast %cst_151 : f32 to vector<16x32xf32>
    %350 = arith.subf %349, %314 : vector<16x32xf32>
    %351 = arith.mulf %350, %347 : vector<16x32xf32>
    %352 = arith.addf %348, %351 : vector<16x32xf32>
    %c0_152 = arith.constant 0 : index
    %c0_153 = arith.constant 0 : index
    %353 = vector.load %arg11[%c0_152, %c0_153] : memref<16x32xf32, #tpu.memory_space<vmem>>, vector<16x32xf32>
    tpu.vector_store %arg11[%c0_152, %c0_153], %352 {strides = array<i32>} : memref<16x32xf32, #tpu.memory_space<vmem>>, vector<16x32xf32>,
    %354 = arith.index_cast %c3_i32 : i32 to index
    %c0_154 = arith.constant 0 : index
    %c0_155 = arith.constant 0 : index
    %355 = vector.load %arg10[%354, %c0_154, %c0_155] : memref<4x16x32xf32, #tpu.memory_space<vmem>>, vector<1x16x32xf32>
    %356 = vector.shape_cast %355 : vector<1x16x32xf32> to vector<16x32xf32>
    %357 = vector.shape_cast %352 : vector<16x32xf32> to vector<1x16x32xf32>
    tpu.vector_store %arg10[%354, %c0_154, %c0_155], %357 {strides = array<i32>} : memref<4x16x32xf32, #tpu.memory_space<vmem>>, vector<1x16x32xf32>,
    %c4_i32 = arith.constant 4 : i32
    return
  }
  func.func @transform_0(%arg0: i32, %arg1: i32) -> (i32, i32, i32) {
    %c0_i32 = arith.constant 0 : i32
    %c0_i32_0 = arith.constant 0 : i32
    return %arg1, %arg0, %c0_i32 : i32, i32, i32
  }
  func.func @transform_1(%arg0: i32, %arg1: i32) -> (i32, i32, i32) {
    %c0_i32 = arith.constant 0 : i32
    %c0_i32_0 = arith.constant 0 : i32
    return %arg1, %arg0, %c0_i32 : i32, i32, i32
  }
  func.func @transform_2(%arg0: i32, %arg1: i32) -> (i32, i32) {
    %c0_i32 = arith.constant 0 : i32
    %c0_i32_0 = arith.constant 0 : i32
    return %arg0, %c0_i32 : i32, i32
  }
  func.func @transform_3(%arg0: i32, %arg1: i32) -> (i32, i32) {
    %c0_i32 = arith.constant 0 : i32
    %c0_i32_0 = arith.constant 0 : i32
    %c0_i32_1 = arith.constant 0 : i32
    return %c0_i32, %c0_i32_0 : i32, i32
  }
  func.func @transform_4(%arg0: i32, %arg1: i32) -> (i32, i32, i32) {
    %c0_i32 = arith.constant 0 : i32
    %c0_i32_0 = arith.constant 0 : i32
    %c0_i32_1 = arith.constant 0 : i32
    %c0_i32_2 = arith.constant 0 : i32
    return %c0_i32, %c0_i32_0, %c0_i32_1 : i32, i32, i32
  }
  func.func @transform_5(%arg0: i32, %arg1: i32) -> (i32, i32, i32) {
    %c0_i32 = arith.constant 0 : i32
    %c0_i32_0 = arith.constant 0 : i32
    %c0_i32_1 = arith.constant 0 : i32
    %c0_i32_2 = arith.constant 0 : i32
    return %c0_i32, %c0_i32_0, %c0_i32_1 : i32, i32, i32
  }
  func.func @transform_6(%arg0: i32, %arg1: i32) -> (i32, i32) {
    %c0_i32 = arith.constant 0 : i32
    %c0_i32_0 = arith.constant 0 : i32
    %c0_i32_1 = arith.constant 0 : i32
    return %c0_i32, %c0_i32_0 : i32, i32
  }
  func.func @transform_7(%arg0: i32, %arg1: i32) -> (i32, i32) {
    %c0_i32 = arith.constant 0 : i32
    %c0_i32_0 = arith.constant 0 : i32
    %c0_i32_1 = arith.constant 0 : i32
    return %c0_i32, %c0_i32_0 : i32, i32
  }
  func.func @transform_8(%arg0: i32, %arg1: i32) -> (i32, i32, i32) {
    %c0_i32 = arith.constant 0 : i32
    %c0_i32_0 = arith.constant 0 : i32
    return %arg1, %arg0, %c0_i32 : i32, i32, i32
  }
}

</mosaic_0001>

<llo_original>
// kernel: tpu_custom_call.1
$region0: #{tpu_custom_call.1}
  #allocation0 [shape = 'u32[]', space=smem, size = 0x4, offset = 0x4, fixed_abs, tag = 'smem constant byte address 0x4 - core index']
  #allocation1 [shape = 'u32[144,128]{1,0:T(1,128)}', space=vmem, size = 0x12000, scoped, tag = 'internal scratch']
  #allocation2 [shape = 'f32[16,32]{1,0:T(8,128)}', space=vmem, size = 0x2000, scoped, tag = 'scratch operand']
  #allocation15 [shape = 's32[]', space=sflag, size = 0x4, offset = 0, fixed_abs, tag = 'sflag constant byte address 0x0 - dummy sync flag']
  #allocation17 [shape = 's32[]', space=sflag, size = 0x4, offset = 0, fixed_abs, tag = 'sflag constant byte address 0x0 - dummy sync flag']
  #allocation19 [shape = 's32[]', space=sflag, size = 0x4, offset = 0, fixed_abs, tag = 'sflag constant byte address 0x0 - dummy sync flag']
  %s0 = inlined_call_operand.hbm [shape: f32[8,32,64], index: 0, kind: input, shape index: {}]
  %s1 = inlined_call_operand.hbm [shape: f32[8,32,32], index: 1, kind: input, shape index: {}]
  %s2 = inlined_call_operand.hbm [shape: f32[32,32], index: 2, kind: input, shape index: {}]
  %s3 = inlined_call_operand.vmem [shape: f32[32,16], index: 3, kind: input, shape index: {}]
  %s4 = inlined_call_operand.hbm [shape: f32[3,32,512], index: 4, kind: input, shape index: {}]
  %s5 = inlined_call_operand.hbm [shape: f32[3,32,256], index: 5, kind: input, shape index: {}]
  %s6 = inlined_call_operand.vmem [shape: f32[16,512], index: 6, kind: input, shape index: {}]
  %s7 = inlined_call_operand.hbm [shape: f32[16,256], index: 7, kind: input, shape index: {}]
  %s8 = inlined_call_operand.hbm [shape: f32[8,32,32], index: 8, kind: output, shape index: {}]
  %s9 = sld [smem:[#allocation0]]
  $region93: #{tpu_custom_call.1} parent=0
    _
  %s11 = ssub.s32 1, %s9
  %s12 = scalar_select 0, %s11, %s9
  $region1: #{tpu_custom_call.1} parent=0
    #allocation3 [shape = 'u8[65536]{0}', space=vmem, size = 0x10000, scoped, tag = 'input window, operand 0']
    #allocation4 [shape = 's32[2]{0}', space=sflag, size = 0x8, scoped, tag = 'scoped memory for tpu_custom_call.1']
    #allocation5 [shape = 's32[2]{0}', space=sflag, size = 0x8, scoped, tag = 'scoped memory for tpu_custom_call.1']
    #allocation6 [shape = 'u8[65536]{0}', space=vmem, size = 0x10000, scoped, tag = 'input window, operand 1']
    #allocation7 [shape = 's32[2]{0}', space=sflag, size = 0x8, scoped, tag = 'scoped memory for tpu_custom_call.1']
    #allocation8 [shape = 'u8[16384]{0}', space=vmem, size = 0x4000, scoped, tag = 'input window, operand 2']
    #allocation9 [shape = 'u8[196608]{0}', space=vmem, size = 0x30000, scoped, tag = 'input window, operand 4, single buffered']
    #allocation10 [shape = 's32[1]{0}', space=sflag, size = 0x4, scoped, tag = 'scoped memory for tpu_custom_call.1']
    #allocation11 [shape = 'u8[98304]{0}', space=vmem, size = 0x18000, scoped, tag = 'input window, operand 5, single buffered']
    #allocation12 [shape = 'u8[16384]{0}', space=vmem, size = 0x4000, scoped, tag = 'input window, operand 7, single buffered']
    #allocation13 [shape = 's32[1]{0}', space=sflag, size = 0x4, scoped, tag = 'scoped memory for tpu_custom_call.1']
    #allocation14 [shape = 'u8[65536]{0}', space=vmem, size = 0x10000, scoped, tag = 'output window, operand 0']
    %13 = vsyncpa [#allocation4], 0
    %s14 = scalar_lea.sflag [#allocation4], 1
    %15 = vsyncpa %s14, 0
    %16 = vsyncpa [#allocation7], 0
    %s17 = scalar_lea.sflag [#allocation7], 1
    %18 = vsyncpa %s17, 0
    %19 = vsyncpa [#allocation10], 0
    %20 = vsyncpa [#allocation13], 0
    %21 = vsyncpa [#allocation5], 0
    %s22 = scalar_lea.sflag [#allocation5], 1
    %23 = vsyncpa %s22, 0
    loop: start=0, step=1, limit=6
    $region2: #{tpu_custom_call.1} parent=1 // loop_pre_header
      _
    $region3: #{tpu_custom_call.1} parent=1 // loop_header
      %s25 = sphi 0, %s29
      %p26 = scmp.ge.s32.totalorder %s25, 6
      %s32 = sphi 0, %s44
      %s33 = sphi 0, %s40
      %s34 = sphi 0, %s32
      %s35 = sphi 0, %s33
      %s36 = sphi 0, %s34
      %s37 = sphi 0, %s35
      %s49 = sphi 0, %s51
      %s52 = sphi 0, %s49
      %s53 = sphi 0, %s52
      %s69 = sphi 0, %s53
      %s77 = sphi 0, %s79
      %s80 = sphi 0, %s77
      %s81 = sphi 0, %s80
      %s97 = sphi 0, %s81
      %s103 = sphi 0, %s105
      %s106 = sphi 0, %s103
      %s107 = sphi 0, %s106
      %s123 = sphi 0, %s107
      %s127 = sphi 0, %s127
      %s129 = sphi 0, %s127
      %s130 = sphi 0, %s129
      %s144 = sphi 0, %s130
      %s148 = sphi 0, %s148
      %s150 = sphi 0, %s148
      %s151 = sphi 0, %s150
      %s165 = sphi 0, %s151
      %s169 = sphi 0, %s169
      %s171 = sphi 0, %s169
      %s172 = sphi 0, %s171
      %s186 = sphi 0, %s172
      %s190 = sphi 0, %s190
      %s192 = sphi 0, %s190
      %s193 = sphi 0, %s192
      %s207 = sphi 0, %s193
      %s211 = sphi 0, %s211
      %s213 = sphi 0, %s211
      %s214 = sphi 0, %s213
      %s228 = sphi 0, %s214
      %s236 = sphi 0, %s238
      %s239 = sphi 0, %s236
      %s240 = sphi 0, %s239
      %s256 = sphi 0, %s240
    $region4: #{tpu_custom_call.1} parent=1 // loop_header_branch
      %28 = sbr.rel (%p26) target = $region8
    $region5: #{tpu_custom_call.1} parent=1 // loop_body
      %s30 = ssub.s32 %s25, 1
      %s31 = ssub.s32 %s25, 2
      %s38 = sadd.s32 1, %s33
      %p39 = scmp.ge.s32.totalorder %s38, 2
      %s40 = scalar_select %p39, 0, %s38
      %s41 = sadd.s32 1, %s32
      %s42 = scalar_select %p39, %s41, %s32
      %p43 = scmp.ge.s32.totalorder %s42, 2
      %s44 = scalar_select %p43, 0, %s42
      %s45 = ssub.s32 %s33, %s40
      %s46 = ssub.s32 %s32, %s44
      %s47 = sor.u32 %s45, %s46
      %p48 = scmp.eq.s32.totalorder %s47, 0
      %s50 = sadd.s32 %s49, 1
      %s51 = scalar_select %p48, %s49, %s50
      %p54 = pneg %p48
      %p55 = scmp.eq.s32.totalorder %s25, 3
      %p56 = por %p54, %p55
      %p57 = scmp.ne.s32.totalorder %s49, %s52
      %p58 = scmp.eq.s32.totalorder %s25, 0
      %p59 = por %p57, %p58
      %p60 = scmp.ne.s32.totalorder %s49, %s52
      %p61 = scmp.eq.s32.totalorder %s30, 3
      %p62 = por %p60, %p61
      %p63 = scmp.ne.s32.totalorder %s52, %s53
      %p64 = scmp.eq.s32.totalorder %s30, 0
      %p65 = por %p63, %p64
      %p66 = scmp.ne.s32.totalorder %s52, %s53
      %p67 = scmp.eq.s32.totalorder %s31, 3
      %p68 = por %p66, %p67
      %p70 = scmp.ne.s32.totalorder %s53, %s69
      %p71 = scmp.eq.s32.totalorder %s31, 0
      %p72 = por %p70, %p71
      %s73 = ssub.s32 %s33, %s40
      %s74 = ssub.s32 %s32, %s44
      %s75 = sor.u32 %s73, %s74
      %p76 = scmp.eq.s32.totalorder %s75, 0
      %s78 = sadd.s32 %s77, 1
      %s79 = scalar_select %p76, %s77, %s78
      %p82 = pneg %p76
      %p83 = scmp.eq.s32.totalorder %s25, 3
      %p84 = por %p82, %p83
      %p85 = scmp.ne.s32.totalorder %s77, %s80
      %p86 = scmp.eq.s32.totalorder %s25, 0
      %p87 = por %p85, %p86
      %p88 = scmp.ne.s32.totalorder %s77, %s80
      %p89 = scmp.eq.s32.totalorder %s30, 3
      %p90 = por %p88, %p89
      %p91 = scmp.ne.s32.totalorder %s80, %s81
      %p92 = scmp.eq.s32.totalorder %s30, 0
      %p93 = por %p91, %p92
      %p94 = scmp.ne.s32.totalorder %s80, %s81
      %p95 = scmp.eq.s32.totalorder %s31, 3
      %p96 = por %p94, %p95
      %p98 = scmp.ne.s32.totalorder %s81, %s97
      %p99 = scmp.eq.s32.totalorder %s31, 0
      %p100 = por %p98, %p99
      %s101 = ssub.s32 %s32, %s44
      %p102 = scmp.eq.s32.totalorder %s101, 0
      %s104 = sadd.s32 %s103, 1
      %s105 = scalar_select %p102, %s103, %s104
      %p108 = pneg %p102
      %p109 = scmp.eq.s32.totalorder %s25, 3
      %p110 = por %p108, %p109
      %p111 = scmp.ne.s32.totalorder %s103, %s106
      %p112 = scmp.eq.s32.totalorder %s25, 0
      %p113 = por %p111, %p112
      %p114 = scmp.ne.s32.totalorder %s103, %s106
      %p115 = scmp.eq.s32.totalorder %s30, 3
      %p116 = por %p114, %p115
      %p117 = scmp.ne.s32.totalorder %s106, %s107
      %p118 = scmp.eq.s32.totalorder %s30, 0
      %p119 = por %p117, %p118
      %p120 = scmp.ne.s32.totalorder %s106, %s107
      %p121 = scmp.eq.s32.totalorder %s31, 3
      %p122 = por %p120, %p121
      %p124 = scmp.ne.s32.totalorder %s107, %s123
      %p125 = scmp.eq.s32.totalorder %s31, 0
      %p126 = por %p124, %p125
      %s128 = sadd.s32 %s127, 1
      %p131 = scmp.eq.s32.totalorder %s25, 3
      %p132 = scmp.ne.s32.totalorder %s127, %s129
      %p133 = scmp.eq.s32.totalorder %s25, 0
      %p134 = por %p132, %p133
      %p135 = scmp.ne.s32.totalorder %s127, %s129
      %p136 = scmp.eq.s32.totalorder %s30, 3
      %p137 = por %p135, %p136
      %p138 = scmp.ne.s32.totalorder %s129, %s130
      %p139 = scmp.eq.s32.totalorder %s30, 0
      %p140 = por %p138, %p139
      %p141 = scmp.ne.s32.totalorder %s129, %s130
      %p142 = scmp.eq.s32.totalorder %s31, 3
      %p143 = por %p141, %p142
      %p145 = scmp.ne.s32.totalorder %s130, %s144
      %p146 = scmp.eq.s32.totalorder %s31, 0
      %p147 = por %p145, %p146
      %s149 = sadd.s32 %s148, 1
      %p152 = scmp.eq.s32.totalorder %s25, 3
      %p153 = scmp.ne.s32.totalorder %s148, %s150
      %p154 = scmp.eq.s32.totalorder %s25, 0
      %p155 = por %p153, %p154
      %p156 = scmp.ne.s32.totalorder %s148, %s150
      %p157 = scmp.eq.s32.totalorder %s30, 3
      %p158 = por %p156, %p157
      %p159 = scmp.ne.s32.totalorder %s150, %s151
      %p160 = scmp.eq.s32.totalorder %s30, 0
      %p161 = por %p159, %p160
      %p162 = scmp.ne.s32.totalorder %s150, %s151
      %p163 = scmp.eq.s32.totalorder %s31, 3
      %p164 = por %p162, %p163
      %p166 = scmp.ne.s32.totalorder %s151, %s165
      %p167 = scmp.eq.s32.totalorder %s31, 0
      %p168 = por %p166, %p167
      %s170 = sadd.s32 %s169, 1
      %p173 = scmp.eq.s32.totalorder %s25, 3
      %p174 = scmp.ne.s32.totalorder %s169, %s171
      %p175 = scmp.eq.s32.totalorder %s25, 0
      %p176 = por %p174, %p175
      %p177 = scmp.ne.s32.totalorder %s169, %s171
      %p178 = scmp.eq.s32.totalorder %s30, 3
      %p179 = por %p177, %p178
      %p180 = scmp.ne.s32.totalorder %s171, %s172
      %p181 = scmp.eq.s32.totalorder %s30, 0
      %p182 = por %p180, %p181
      %p183 = scmp.ne.s32.totalorder %s171, %s172
      %p184 = scmp.eq.s32.totalorder %s31, 3
      %p185 = por %p183, %p184
      %p187 = scmp.ne.s32.totalorder %s172, %s186
      %p188 = scmp.eq.s32.totalorder %s31, 0
      %p189 = por %p187, %p188
      %s191 = sadd.s32 %s190, 1
      %p194 = scmp.eq.s32.totalorder %s25, 3
      %p195 = scmp.ne.s32.totalorder %s190, %s192
      %p196 = scmp.eq.s32.totalorder %s25, 0
      %p197 = por %p195, %p196
      %p198 = scmp.ne.s32.totalorder %s190, %s192
      %p199 = scmp.eq.s32.totalorder %s30, 3
      %p200 = por %p198, %p199
      %p201 = scmp.ne.s32.totalorder %s192, %s193
      %p202 = scmp.eq.s32.totalorder %s30, 0
      %p203 = por %p201, %p202
      %p204 = scmp.ne.s32.totalorder %s192, %s193
      %p205 = scmp.eq.s32.totalorder %s31, 3
      %p206 = por %p204, %p205
      %p208 = scmp.ne.s32.totalorder %s193, %s207
      %p209 = scmp.eq.s32.totalorder %s31, 0
      %p210 = por %p208, %p209
      %s212 = sadd.s32 %s211, 1
      %p215 = scmp.eq.s32.totalorder %s25, 3
      %p216 = scmp.ne.s32.totalorder %s211, %s213
      %p217 = scmp.eq.s32.totalorder %s25, 0
      %p218 = por %p216, %p217
      %p219 = scmp.ne.s32.totalorder %s211, %s213
      %p220 = scmp.eq.s32.totalorder %s30, 3
      %p221 = por %p219, %p220
      %p222 = scmp.ne.s32.totalorder %s213, %s214
      %p223 = scmp.eq.s32.totalorder %s30, 0
      %p224 = por %p222, %p223
      %p225 = scmp.ne.s32.totalorder %s213, %s214
      %p226 = scmp.eq.s32.totalorder %s31, 3
      %p227 = por %p225, %p226
      %p229 = scmp.ne.s32.totalorder %s214, %s228
      %p230 = scmp.eq.s32.totalorder %s31, 0
      %p231 = por %p229, %p230
      %s232 = ssub.s32 %s33, %s40
      %s233 = ssub.s32 %s32, %s44
      %s234 = sor.u32 %s232, %s233
      %p235 = scmp.eq.s32.totalorder %s234, 0
      %s237 = sadd.s32 %s236, 1
      %s238 = scalar_select %p235, %s236, %s237
      %p241 = pneg %p235
      %p242 = scmp.eq.s32.totalorder %s25, 3
      %p243 = por %p241, %p242
      %p244 = scmp.ne.s32.totalorder %s236, %s239
      %p245 = scmp.eq.s32.totalorder %s25, 0
      %p246 = por %p244, %p245
      %p247 = scmp.ne.s32.totalorder %s236, %s239
      %p248 = scmp.eq.s32.totalorder %s30, 3
      %p249 = por %p247, %p248
      %p250 = scmp.ne.s32.totalorder %s239, %s240
      %p251 = scmp.eq.s32.totalorder %s30, 0
      %p252 = por %p250, %p251
      %p253 = scmp.ne.s32.totalorder %s239, %s240
      %p254 = scmp.eq.s32.totalorder %s31, 3
      %p255 = por %p253, %p254
      %p257 = scmp.ne.s32.totalorder %s240, %s256
      %p258 = scmp.eq.s32.totalorder %s31, 0
      %p259 = por %p257, %p258
      %p260 = scmp.le.s32.totalorder 1, %s25
      %p261 = scmp.lt.s32.totalorder %s25, 5
      %p262 = pnand %p260, %p261
      %p263 = pneg %p262
      // Predicated region
      $region9: #{tpu_custom_call.1} parent=5 // pred_check
        _
      $region10: #{tpu_custom_call.1} parent=5 // pred_check_branch
        %265 = sbr.rel (%p262) target = $region12
      $region11: #{tpu_custom_call.1} parent=5 // pred_region
        %s266 = ssub.s32 %s25, 1
        // Predicated region
        $region13: #{tpu_custom_call.1} parent=11 // pred_check
          %p267 = pneg %p140
        $region14: #{tpu_custom_call.1} parent=11 // pred_check_branch
          %269 = sbr.rel (%p267) target = $region16
        $region15: #{tpu_custom_call.1} parent=11 // pred_region
          _
        $region16: #{tpu_custom_call.1} parent=11 // pred_fallthru
          _
        // Predicated region
        $region17: #{tpu_custom_call.1} parent=11 // pred_check
          %p270 = pneg %p161
        $region18: #{tpu_custom_call.1} parent=11 // pred_check_branch
          %272 = sbr.rel (%p270) target = $region20
        $region19: #{tpu_custom_call.1} parent=11 // pred_region
          %s274 = ssub.s32 6144, 6144
          %275 = vsyncadd [#allocation10], %s274
          %s276 = sshll.u32 [#allocation9], 4
          %s277 = int_to_ptr.vmem [resolvable:$true] %s276
          %282 = dma.hbm_to_vmem [thread:$0]  %s4, 6144, %s277, [#allocation10], 512, 512, 32
        $region20: #{tpu_custom_call.1} parent=11 // pred_fallthru
          _
        // Predicated region
        $region21: #{tpu_custom_call.1} parent=11 // pred_check
          %p283 = pneg %p182
        $region22: #{tpu_custom_call.1} parent=11 // pred_check_branch
          %285 = sbr.rel (%p283) target = $region24
        $region23: #{tpu_custom_call.1} parent=11 // pred_region
          %s287 = ssub.s32 3072, 3072
          %288 = vsyncadd [#allocation10], %s287
          %s289 = sshll.u32 [#allocation11], 4
          %s290 = int_to_ptr.vmem [resolvable:$true] %s289
          %295 = dma.hbm_to_vmem [thread:$0]  %s5, 3072, %s290, [#allocation10], 256, 256, 16
        $region24: #{tpu_custom_call.1} parent=11 // pred_fallthru
          _
        // Predicated region
        $region25: #{tpu_custom_call.1} parent=11 // pred_check
          %p296 = pneg %p203
        $region26: #{tpu_custom_call.1} parent=11 // pred_check_branch
          %298 = sbr.rel (%p296) target = $region28
        $region27: #{tpu_custom_call.1} parent=11 // pred_region
          _
        $region28: #{tpu_custom_call.1} parent=11 // pred_fallthru
          _
        // Predicated region
        $region29: #{tpu_custom_call.1} parent=11 // pred_check
          %p299 = pneg %p224
        $region30: #{tpu_custom_call.1} parent=11 // pred_check_branch
          %301 = sbr.rel (%p299) target = $region32
        $region31: #{tpu_custom_call.1} parent=11 // pred_region
          %s303 = ssub.s32 512, 512
          %304 = vsyncadd [#allocation13], %s303
          %s305 = sshll.u32 [#allocation12], 4
          %s306 = int_to_ptr.vmem [resolvable:$true] %s305
          %311 = dma.hbm_to_vmem [thread:$0]  %s7, 512, %s306, [#allocation13], 256, 256, 16
        $region32: #{tpu_custom_call.1} parent=11 // pred_fallthru
          _
      $region12: #{tpu_custom_call.1} parent=5 // pred_fallthru
        _
      %p312 = scmp.lt.s32.totalorder %s25, 4
      // Predicated region
      $region33: #{tpu_custom_call.1} parent=5 // pred_check
        %p313 = pneg %p312
      $region34: #{tpu_custom_call.1} parent=5 // pred_check_branch
        %315 = sbr.rel (%p313) target = $region36
      $region35: #{tpu_custom_call.1} parent=5 // pred_region
        // Predicated region
        $region37: #{tpu_custom_call.1} parent=35 // pred_check
          %p316 = pneg %p59
        $region38: #{tpu_custom_call.1} parent=35 // pred_check_branch
          %318 = sbr.rel (%p316) target = $region40
        $region39: #{tpu_custom_call.1} parent=35 // pred_region
          #allocation16 [shape = 'u32[6]{0}', space=smem, size = 0x18, scoped, tag = 'DMA stride descriptor']
          %s319 = sand.u32 %s49, 1
          %s320 = scalar_lea.sflag [#allocation4], %s319
          %s321 = sand.u32 %s49, 1
          %s322 = smul.addr %s321, 64
          %s323 = scalar_lea.vmem [#allocation3], %s322
          %s324 = smul.u32 4, %s33
          %s325 = smul.u32 2, %s32
          %s327 = ssub.s32 1024, 1024
          %328 = vsyncadd %s320, %s327
          %s329 = smul.addr %s324, 4
          %s330 = sadd.s32 %s325, %s329
          %s331 = smul.addr %s330, 128
          %s332 = scalar_lea.hbm %s0, %s331
          %s334 = sshll.u32 1, 14
          %s335 = sxor.u32 4294967295, %s334
          %s337 = sld [smem:[#allocation0]]
          %s338 = sadd.s32 2, %s337
          %s340 = sshll.u32 7, 26
          %s341 = sxor.u32 4294967295, %s340
          %s342 = sand.u32 0, %s341
          %s343 = sshll.u32 %s338, 26
          %s344 = sor.u32 %s342, %s343
          %s345 = sshll.u32 %s323, 4
          %s346 = int_to_ptr.vmem [resolvable:$true] %s345
          %352 = sst [smem:[#allocation16]] 512
          %s353 = scalar_lea.smem [#allocation16], 1
          %354 = sst [smem:[%s353]] 256
          %s355 = scalar_lea.smem [#allocation16], 2
          %356 = sst [smem:[%s355]] 2
          %s357 = scalar_lea.smem [#allocation16], 3
          %358 = sst [smem:[%s357]] 128
          %s359 = scalar_lea.smem [#allocation16], 4
          %360 = sst [smem:[%s359]] 128
          %s361 = scalar_lea.smem [#allocation16], 5
          %362 = sst [smem:[%s361]] 8
          %364 = dma.general %s332, 1024, %s346, %s320, [#allocation15], [#allocation16], %s344, 0
        $region40: #{tpu_custom_call.1} parent=35 // pred_fallthru
          _
        // Predicated region
        $region41: #{tpu_custom_call.1} parent=35 // pred_check
          %p365 = pneg %p87
        $region42: #{tpu_custom_call.1} parent=35 // pred_check_branch
          %367 = sbr.rel (%p365) target = $region44
        $region43: #{tpu_custom_call.1} parent=35 // pred_region
          #allocation18 [shape = 'u32[6]{0}', space=smem, size = 0x18, scoped, tag = 'DMA stride descriptor']
          %s368 = sand.u32 %s25, 1
          %s369 = scalar_lea.sflag [#allocation7], %s368
          %s370 = sand.u32 %s77, 1
          %s371 = smul.addr %s370, 64
          %s372 = scalar_lea.vmem [#allocation6], %s371
          %s373 = smul.u32 4, %s33
          %s374 = smul.u32 2, %s32
          %s376 = ssub.s32 1024, 1024
          %377 = vsyncadd %s369, %s376
          %s378 = smul.addr %s373, 4
          %s379 = sadd.s32 %s374, %s378
          %s380 = smul.addr %s379, 128
          %s381 = scalar_lea.hbm %s1, %s380
          %s383 = sshll.u32 1, 14
          %s384 = sxor.u32 4294967295, %s383
          %s386 = sld [smem:[#allocation0]]
          %s387 = sadd.s32 2, %s386
          %s389 = sshll.u32 7, 26
          %s390 = sxor.u32 4294967295, %s389
          %s391 = sand.u32 0, %s390
          %s392 = sshll.u32 %s387, 26
          %s393 = sor.u32 %s391, %s392
          %s394 = sshll.u32 %s372, 4
          %s395 = int_to_ptr.vmem [resolvable:$true] %s394
          %401 = sst [smem:[#allocation18]] 512
          %s402 = scalar_lea.smem [#allocation18], 1
          %403 = sst [smem:[%s402]] 256
          %s404 = scalar_lea.smem [#allocation18], 2
          %405 = sst [smem:[%s404]] 2
          %s406 = scalar_lea.smem [#allocation18], 3
          %407 = sst [smem:[%s406]] 128
          %s408 = scalar_lea.smem [#allocation18], 4
          %409 = sst [smem:[%s408]] 128
          %s410 = scalar_lea.smem [#allocation18], 5
          %411 = sst [smem:[%s410]] 8
          %413 = dma.general %s381, 1024, %s395, %s369, [#allocation17], [#allocation18], %s393, 0
        $region44: #{tpu_custom_call.1} parent=35 // pred_fallthru
          _
        // Predicated region
        $region45: #{tpu_custom_call.1} parent=35 // pred_check
          %p414 = pneg %p113
        $region46: #{tpu_custom_call.1} parent=35 // pred_check_branch
          %416 = sbr.rel (%p414) target = $region48
        $region47: #{tpu_custom_call.1} parent=35 // pred_region
          %s417 = sand.u32 %s25, 1
          %s418 = scalar_lea.sflag [#allocation7], %s417
          %s419 = sand.u32 %s103, 1
          %s420 = smul.addr %s419, 16
          %s421 = scalar_lea.vmem [#allocation8], %s420
          %s422 = smul.u32 2, %s32
          %s424 = ssub.s32 256, 256
          %425 = vsyncadd %s418, %s424
          %s426 = smul.addr %s422, 128
          %s427 = scalar_lea.hbm %s2, %s426
          %s428 = sshll.u32 %s421, 4
          %s429 = int_to_ptr.vmem [resolvable:$true] %s428
          %434 = dma.hbm_to_vmem [thread:$0]  %s427, 256, %s429, %s418, 128, 128, 8
        $region48: #{tpu_custom_call.1} parent=35 // pred_fallthru
          _
      $region36: #{tpu_custom_call.1} parent=5 // pred_fallthru
        _
      %p435 = scmp.le.s32.totalorder 1, %s25
      %p436 = scmp.lt.s32.totalorder %s25, 5
      %p437 = pnand %p435, %p436
      %p438 = pneg %p437
      // Predicated region
      $region49: #{tpu_custom_call.1} parent=5 // pred_check
        _
      $region50: #{tpu_custom_call.1} parent=5 // pred_check_branch
        %440 = sbr.rel (%p437) target = $region52
      $region51: #{tpu_custom_call.1} parent=5 // pred_region
        %s441 = ssub.s32 %s25, 1
        %s442 = sand.u32 %s52, 1
        %s443 = scalar_lea.sflag [#allocation4], %s442
        %s444 = sand.u32 %s52, 1
        %s445 = smul.addr %s444, 64
        %s446 = scalar_lea.vmem [#allocation3], %s445
        // Predicated region
        $region53: #{tpu_custom_call.1} parent=51 // pred_check
          %p447 = pneg %p65
        $region54: #{tpu_custom_call.1} parent=51 // pred_check_branch
          %449 = sbr.rel (%p447) target = $region56
        $region55: #{tpu_custom_call.1} parent=51 // pred_region
          %450 = dma.done %s443, 1024
        $region56: #{tpu_custom_call.1} parent=51 // pred_fallthru
          _
        %s451 = sand.u32 %s30, 1
        %s452 = scalar_lea.sflag [#allocation7], %s451
        %s453 = sand.u32 %s80, 1
        %s454 = smul.addr %s453, 64
        %s455 = scalar_lea.vmem [#allocation6], %s454
        // Predicated region
        $region57: #{tpu_custom_call.1} parent=51 // pred_check
          %p456 = pneg %p93
        $region58: #{tpu_custom_call.1} parent=51 // pred_check_branch
          %458 = sbr.rel (%p456) target = $region60
        $region59: #{tpu_custom_call.1} parent=51 // pred_region
          %459 = dma.done %s452, 1024
        $region60: #{tpu_custom_call.1} parent=51 // pred_fallthru
          _
        %s460 = sand.u32 %s30, 1
        %s461 = scalar_lea.sflag [#allocation7], %s460
        %s462 = sand.u32 %s106, 1
        %s463 = smul.addr %s462, 16
        %s464 = scalar_lea.vmem [#allocation8], %s463
        // Predicated region
        $region61: #{tpu_custom_call.1} parent=51 // pred_check
          %p465 = pneg %p119
        $region62: #{tpu_custom_call.1} parent=51 // pred_check_branch
          %467 = sbr.rel (%p465) target = $region64
        $region63: #{tpu_custom_call.1} parent=51 // pred_region
          %468 = dma.done %s461, 256
        $region64: #{tpu_custom_call.1} parent=51 // pred_fallthru
          _
        // Predicated region
        $region65: #{tpu_custom_call.1} parent=51 // pred_check
          %p469 = pneg %p161
        $region66: #{tpu_custom_call.1} parent=51 // pred_check_branch
          %471 = sbr.rel (%p469) target = $region68
        $region67: #{tpu_custom_call.1} parent=51 // pred_region
          %472 = dma.done [#allocation10], 6144
        $region68: #{tpu_custom_call.1} parent=51 // pred_fallthru
          _
        // Predicated region
        $region69: #{tpu_custom_call.1} parent=51 // pred_check
          %p473 = pneg %p182
        $region70: #{tpu_custom_call.1} parent=51 // pred_check_branch
          %475 = sbr.rel (%p473) target = $region72
        $region71: #{tpu_custom_call.1} parent=51 // pred_region
          %476 = dma.done [#allocation10], 3072
        $region72: #{tpu_custom_call.1} parent=51 // pred_fallthru
          _
        // Predicated region
        $region73: #{tpu_custom_call.1} parent=51 // pred_check
          %p477 = pneg %p224
        $region74: #{tpu_custom_call.1} parent=51 // pred_check_branch
          %479 = sbr.rel (%p477) target = $region76
        $region75: #{tpu_custom_call.1} parent=51 // pred_region
          %480 = dma.done [#allocation13], 512
        $region76: #{tpu_custom_call.1} parent=51 // pred_fallthru
          _
        %s481 = sand.u32 %s52, 1
        %s482 = scalar_lea.sflag [#allocation4], %s481
        %s483 = sand.u32 %s52, 1
        %s484 = smul.addr %s483, 64
        %s485 = scalar_lea.vmem [#allocation3], %s484
        %p486 = pneg %p65
        %p487 = pneg %p62
        %s488 = sand.u32 %s30, 1
        %s489 = scalar_lea.sflag [#allocation7], %s488
        %s490 = sand.u32 %s80, 1
        %s491 = smul.addr %s490, 64
        %s492 = scalar_lea.vmem [#allocation6], %s491
        %p493 = pneg %p93
        %p494 = pneg %p90
        %s495 = sand.u32 %s30, 1
        %s496 = scalar_lea.sflag [#allocation7], %s495
        %s497 = sand.u32 %s106, 1
        %s498 = smul.addr %s497, 16
        %s499 = scalar_lea.vmem [#allocation8], %s498
        %p500 = pneg %p119
        %p501 = pneg %p116
        %p502 = pneg %p140
        %p503 = pneg %p137
        %p504 = pneg %p161
        %p505 = pneg %p158
        %p506 = pneg %p182
        %p507 = pneg %p179
        %p508 = pneg %p203
        %p509 = pneg %p200
        %p510 = pneg %p224
        %p511 = pneg %p221
        %p512 = pneg %p252
        %p513 = pneg %p249
        %s514 = sand.u32 %s239, 1
        %s515 = scalar_lea.sflag [#allocation5], %s514
        %s516 = sand.u32 %s239, 1
        %s517 = smul.addr %s516, 64
        %s518 = scalar_lea.vmem [#allocation14], %s517
        %s519 = smul.u32 4, %s35
        %s520 = smul.u32 2, %s34
        %s521 = smul.u32 4, %s35
        %s522 = smul.u32 2, %s34
        %s523 = smul.u32 2, %s34
        %s524 = smul.u32 4, %s35
        %s525 = smul.u32 2, %s34
        %p526 = scmp.eq.s32.totalorder %s35, 0
        // Predicated region
        $region77: #{tpu_custom_call.1} parent=51 // pred_check
          %p527 = pneg %p526
        $region78: #{tpu_custom_call.1} parent=51 // pred_check_branch
          %529 = sbr.rel (%p527) target = $region80
        $region79: #{tpu_custom_call.1} parent=51 // pred_region
          %v530 = vld [vmem:[%s464] sm:$0xff]
          %v531 = vld [vmem:[%s464 + $0x8] sm:$0xff]
          %vm532 = vcmask 261120
          %533 = vst.msk [vmem:[#allocation2] sm:$0xff] %vm532, %v530
          %534 = vst.msk [vmem:[#allocation2 + $0x8] sm:$0xff] %vm532, %v531
        $region80: #{tpu_custom_call.1} parent=51 // pred_fallthru
          _
        %v535 = vld [vmem:[%s3] sm:$0xff]
        %v536 = vld [vmem:[%s3 + $0x8] sm:$0xff]
        %v537 = vld [vmem:[%s3 + $0x10] sm:$0xff]
        %v538 = vld [vmem:[%s3 + $0x18] sm:$0xff]
        %v539 = vld [vmem:[%s6] sm:$0xff]
        %v540 = vld [vmem:[%s6 + $0x8] sm:$0xff]
        %v541 = vld [vmem:[%s6 + $0x10] sm:$0xff]
        %v542 = vld [vmem:[%s6 + $0x18] sm:$0xff]
        %v543 = vld [vmem:[%s6 + $0x20] sm:$0xff]
        %v544 = vld [vmem:[%s6 + $0x28] sm:$0xff]
        %v545 = vld [vmem:[%s6 + $0x30] sm:$0xff]
        %v546 = vld [vmem:[%s6 + $0x38] sm:$0xff]
        %v547 = vld [vmem:[#allocation12] sm:$0xff]
        %v548 = vld [vmem:[#allocation12 + $0x8] sm:$0xff]
        %v549 = vld [vmem:[#allocation12 + $0x10] sm:$0xff]
        %v550 = vld [vmem:[#allocation12 + $0x18] sm:$0xff]
        %v551 = vld [vmem:[%s446] sm:$0xff]
        %v552 = vld [vmem:[%s446 + $0x8] sm:$0xff]
        %v553 = vld [vmem:[%s455] sm:$0xff]
        %v554 = vld [vmem:[%s455 + $0x8] sm:$0xff]
        %v555 = vld [vmem:[#allocation2] sm:$0xff]
        %v556 = vld [vmem:[#allocation2 + $0x8] sm:$0xff]
        %vm557 = vcmask 130048
        %v559 = vsel %vm557, %v535, 0
        %v562 = vsel %vm557, %v536, 0
        %v565 = vsel %vm557, %v537, 0
        %v568 = vsel %vm557, %v538, 0
        %570 = vmatprep.subr.mxu0 0.0
        %571 = vmatpush1.msra.mxu0 %v555
        %572 = vmatprep.subr.mxu0 0.0
        %573 = vmatpush1.msra.mxu0 %v556
        %574 = vmatprep.subr.mxu0 0.0
        %575 = vmatpush1.msra.mxu0 0.0
        %576 = vmatprep.subr.mxu0 0.0
        %577 = vmatpush1.msra.mxu0 0.0
        %578 = vmatprep.subr.mxu0 0.0
        %579 = vmatpush1.msra.mxu0 0.0
        %580 = vmatprep.subr.mxu0 0.0
        %581 = vmatpush1.msra.mxu0 0.0
        %582 = vmatprep.subr.mxu0 0.0
        %583 = vmatpush1.msra.mxu0 0.0
        %584 = vmatprep.subr.mxu0 0.0
        %585 = vmatpush1.msra.mxu0 0.0
        %586 = vmatprep.subr.mxu0 0.0
        %587 = vmatpush1.msra.mxu0 0.0
        %588 = vmatprep.subr.mxu0 0.0
        %589 = vmatpush1.msra.mxu0 0.0
        %590 = vmatprep.subr.mxu0 0.0
        %591 = vmatpush1.msra.mxu0 0.0
        %592 = vmatprep.subr.mxu0 0.0
        %593 = vmatpush1.msra.mxu0 0.0
        %594 = vmatprep.subr.mxu0 0.0
        %595 = vmatpush1.msra.mxu0 0.0
        %596 = vmatprep.subr.mxu0 0.0
        %597 = vmatpush1.msra.mxu0 0.0
        %598 = vmatprep.subr.mxu0 0.0
        %599 = vmatpush1.msra.mxu0 0.0
        %600 = vmatprep.subr.mxu0 0.0
        %601 = vmatpush1.msra.mxu0 0.0
        %602 = vmatprep.subr.mxu0 0.0
        %603 = vmatpush1.msra.mxu0 0.0
        %604 = vmatprep.subr.mxu0 0.0
        %605 = vmatpush1.msra.mxu0 0.0
        %606 = vmatprep.subr.mxu0 0.0
        %607 = vmatpush1.msra.mxu0 0.0
        %608 = vmatprep.subr.mxu0 0.0
        %609 = vmatpush1.msra.mxu0 0.0
        %610 = vmatprep.subr.mxu0 0.0
        %611 = vmatpush1.msra.mxu0 0.0
        %612 = vmatprep.subr.mxu0 0.0
        %613 = vmatpush1.msra.mxu0 0.0
        %614 = vmatprep.subr.mxu0 0.0
        %615 = vmatpush1.msra.mxu0 0.0
        %616 = vmatprep.subr.mxu0 0.0
        %617 = vmatpush1.msra.mxu0 0.0
        %618 = vmatprep.subr.mxu0 0.0
        %619 = vmatpush1.msra.mxu0 0.0
        %620 = vmatprep.subr.mxu0 0.0
        %621 = vmatpush1.msra.mxu0 0.0
        %622 = vmatprep.subr.mxu0 0.0
        %623 = vmatpush1.msra.mxu0 0.0
        %624 = vmatprep.subr.mxu0 0.0
        %625 = vmatpush1.msra.mxu0 0.0
        %626 = vmatprep.subr.mxu0 0.0
        %627 = vmatpush1.msra.mxu0 0.0
        %628 = vmatprep.subr.mxu0 0.0
        %629 = vmatpush1.msra.mxu0 0.0
        %630 = vmatprep.subr.mxu0 0.0
        %631 = vmatpush1.msra.mxu0 0.0
        %632 = vmatprep.subr.mxu0 0.0
        %633 = vmatpush1.msra.mxu0 0.0
        %634 = vmatprep.mubr.f32.mxu0 0.0
        %635 = vmatmul.mubr.f32.gmra.mrb[0].mxu0 %v559
        %v636 = vpop.f32.mrb[0].mxu0
        %v637 = vadd.f32 0.0, %v636
        %v638 = vpop.f32.mrb[0].mxu0
        %639 = vmatprep.mubr.f32.mxu0 0.0
        %640 = vmatmul.mubr.f32.gmra.mrb[0].mxu0 %v562
        %v641 = vpop.f32.mrb[0].mxu0
        %v642 = vadd.f32 0.0, %v641
        %v643 = vpop.f32.mrb[0].mxu0
        %644 = vmatprep.mubr.f32.mxu0 0.0
        %645 = vmatmul.mubr.f32.gmra.mrb[0].mxu0 %v565
        %v646 = vpop.f32.mrb[0].mxu0
        %v647 = vadd.f32 0.0, %v646
        %v648 = vpop.f32.mrb[0].mxu0
        %649 = vmatprep.mubr.f32.mxu0 0.0
        %650 = vmatmul.mubr.f32.gmra.mrb[0].mxu0 %v568
        %v651 = vpop.f32.mrb[0].mxu0
        %v652 = vadd.f32 0.0, %v651
        %v653 = vpop.f32.mrb[0].mxu0
        %654 = vdwg.mxu0
        %v655 = vld [vmem:[#allocation9] sm:$0xff]
        %v656 = vld [vmem:[#allocation9 + $0x8] sm:$0xff]
        %v657 = vld [vmem:[#allocation9 + $0x10] sm:$0xff]
        %v658 = vld [vmem:[#allocation9 + $0x18] sm:$0xff]
        %v659 = vld [vmem:[#allocation9 + $0x20] sm:$0xff]
        %v660 = vld [vmem:[#allocation9 + $0x28] sm:$0xff]
        %v661 = vld [vmem:[#allocation9 + $0x30] sm:$0xff]
        %v662 = vld [vmem:[#allocation9 + $0x38] sm:$0xff]
        %v663 = vld [vmem:[#allocation9 + $0x40] sm:$0xff]
        %v664 = vld [vmem:[#allocation9 + $0x48] sm:$0xff]
        %v665 = vld [vmem:[#allocation9 + $0x50] sm:$0xff]
        %v666 = vld [vmem:[#allocation9 + $0x58] sm:$0xff]
        %v667 = vld [vmem:[#allocation9 + $0x60] sm:$0xff]
        %v668 = vld [vmem:[#allocation9 + $0x68] sm:$0xff]
        %v669 = vld [vmem:[#allocation9 + $0x70] sm:$0xff]
        %v670 = vld [vmem:[#allocation9 + $0x78] sm:$0xff]
        %s671 = scalar_lea.vmem [#allocation9], 128
        %v672 = vld [vmem:[%s671] sm:$0xff]
        %v673 = vld [vmem:[%s671 + $0x8] sm:$0xff]
        %v674 = vld [vmem:[%s671 + $0x10] sm:$0xff]
        %v675 = vld [vmem:[%s671 + $0x18] sm:$0xff]
        %v676 = vld [vmem:[%s671 + $0x20] sm:$0xff]
        %v677 = vld [vmem:[%s671 + $0x28] sm:$0xff]
        %v678 = vld [vmem:[%s671 + $0x30] sm:$0xff]
        %v679 = vld [vmem:[%s671 + $0x38] sm:$0xff]
        %v680 = vld [vmem:[%s671 + $0x40] sm:$0xff]
        %v681 = vld [vmem:[%s671 + $0x48] sm:$0xff]
        %v682 = vld [vmem:[%s671 + $0x50] sm:$0xff]
        %v683 = vld [vmem:[%s671 + $0x58] sm:$0xff]
        %v684 = vld [vmem:[%s671 + $0x60] sm:$0xff]
        %v685 = vld [vmem:[%s671 + $0x68] sm:$0xff]
        %v686 = vld [vmem:[%s671 + $0x70] sm:$0xff]
        %v687 = vld [vmem:[%s671 + $0x78] sm:$0xff]
        %vm688 = vcmask 261120
        %v690 = vsel %vm688, %v637, 0
        %v693 = vsel %vm688, %v642, 0
        %695 = vmatprep.subr.mxu0 %v673
        %696 = vmatpush1.msra.mxu0 %v672
        %697 = vmatprep.subr.mxu0 %v677
        %698 = vmatpush1.msra.mxu0 %v676
        %699 = vmatprep.subr.mxu0 %v681
        %700 = vmatpush1.msra.mxu0 %v680
        %701 = vmatprep.subr.mxu0 %v685
        %702 = vmatpush1.msra.mxu0 %v684
        %703 = vmatprep.subr.mxu0 0.0
        %704 = vmatpush1.msra.mxu0 0.0
        %705 = vmatprep.subr.mxu0 0.0
        %706 = vmatpush1.msra.mxu0 0.0
        %707 = vmatprep.subr.mxu0 0.0
        %708 = vmatpush1.msra.mxu0 0.0
        %709 = vmatprep.subr.mxu0 0.0
        %710 = vmatpush1.msra.mxu0 0.0
        %711 = vmatprep.subr.mxu0 0.0
        %712 = vmatpush1.msra.mxu0 0.0
        %713 = vmatprep.subr.mxu0 0.0
        %714 = vmatpush1.msra.mxu0 0.0
        %715 = vmatprep.subr.mxu0 0.0
        %716 = vmatpush1.msra.mxu0 0.0
        %717 = vmatprep.subr.mxu0 0.0
        %718 = vmatpush1.msra.mxu0 0.0
        %719 = vmatprep.subr.mxu0 0.0
        %720 = vmatpush1.msra.mxu0 0.0
        %721 = vmatprep.subr.mxu0 0.0
        %722 = vmatpush1.msra.mxu0 0.0
        %723 = vmatprep.subr.mxu0 0.0
        %724 = vmatpush1.msra.mxu0 0.0
        %725 = vmatprep.subr.mxu0 0.0
        %726 = vmatpush1.msra.mxu0 0.0
        %727 = vmatprep.subr.mxu0 0.0
        %728 = vmatpush1.msra.mxu0 0.0
        %729 = vmatprep.subr.mxu0 0.0
        %730 = vmatpush1.msra.mxu0 0.0
        %731 = vmatprep.subr.mxu0 0.0
        %732 = vmatpush1.msra.mxu0 0.0
        %733 = vmatprep.subr.mxu0 0.0
        %734 = vmatpush1.msra.mxu0 0.0
        %735 = vmatprep.subr.mxu0 0.0
        %736 = vmatpush1.msra.mxu0 0.0
        %737 = vmatprep.subr.mxu0 0.0
        %738 = vmatpush1.msra.mxu0 0.0
        %739 = vmatprep.subr.mxu0 0.0
        %740 = vmatpush1.msra.mxu0 0.0
        %741 = vmatprep.subr.mxu0 0.0
        %742 = vmatpush1.msra.mxu0 0.0
        %743 = vmatprep.subr.mxu0 0.0
        %744 = vmatpush1.msra.mxu0 0.0
        %745 = vmatprep.subr.mxu0 0.0
        %746 = vmatpush1.msra.mxu0 0.0
        %747 = vmatprep.subr.mxu0 0.0
        %748 = vmatpush1.msra.mxu0 0.0
        %749 = vmatprep.subr.mxu0 0.0
        %750 = vmatpush1.msra.mxu0 0.0
        %751 = vmatprep.subr.mxu0 0.0
        %752 = vmatpush1.msra.mxu0 0.0
        %753 = vmatprep.subr.mxu0 0.0
        %754 = vmatpush1.msra.mxu0 0.0
        %755 = vmatprep.subr.mxu0 0.0
        %756 = vmatpush1.msra.mxu0 0.0
        %757 = vmatprep.subr.mxu0 0.0
        %758 = vmatpush1.msra.mxu0 0.0
        %759 = vmatprep.mubr.f32.mxu0 0.0
        %760 = vmatmul.mubr.f32.gmra.mrb[0].mxu0 %v690
        %v761 = vpop.f32.mrb[0].mxu0
        %v762 = vadd.f32 0.0, %v761
        %v763 = vpop.f32.mrb[0].mxu0
        %v764 = vadd.f32 0.0, %v763
        %765 = vmatprep.mubr.f32.mxu0 0.0
        %766 = vmatmul.mubr.f32.gmra.mrb[0].mxu0 %v693
        %v767 = vpop.f32.mrb[0].mxu0
        %v768 = vadd.f32 0.0, %v767
        %v769 = vpop.f32.mrb[0].mxu0
        %v770 = vadd.f32 0.0, %v769
        %771 = vdwg.mxu0
        %772 = vmatprep.subr.mxu0 %v675
        %773 = vmatpush1.msra.mxu0 %v674
        %774 = vmatprep.subr.mxu0 %v679
        %775 = vmatpush1.msra.mxu0 %v678
        %776 = vmatprep.subr.mxu0 %v683
        %777 = vmatpush1.msra.mxu0 %v682
        %778 = vmatprep.subr.mxu0 %v687
        %779 = vmatpush1.msra.mxu0 %v686
        %780 = vmatprep.subr.mxu0 0.0
        %781 = vmatpush1.msra.mxu0 0.0
        %782 = vmatprep.subr.mxu0 0.0
        %783 = vmatpush1.msra.mxu0 0.0
        %784 = vmatprep.subr.mxu0 0.0
        %785 = vmatpush1.msra.mxu0 0.0
        %786 = vmatprep.subr.mxu0 0.0
        %787 = vmatpush1.msra.mxu0 0.0
        %788 = vmatprep.subr.mxu0 0.0
        %789 = vmatpush1.msra.mxu0 0.0
        %790 = vmatprep.subr.mxu0 0.0
        %791 = vmatpush1.msra.mxu0 0.0
        %792 = vmatprep.subr.mxu0 0.0
        %793 = vmatpush1.msra.mxu0 0.0
        %794 = vmatprep.subr.mxu0 0.0
        %795 = vmatpush1.msra.mxu0 0.0
        %796 = vmatprep.subr.mxu0 0.0
        %797 = vmatpush1.msra.mxu0 0.0
        %798 = vmatprep.subr.mxu0 0.0
        %799 = vmatpush1.msra.mxu0 0.0
        %800 = vmatprep.subr.mxu0 0.0
        %801 = vmatpush1.msra.mxu0 0.0
        %802 = vmatprep.subr.mxu0 0.0
        %803 = vmatpush1.msra.mxu0 0.0
        %804 = vmatprep.subr.mxu0 0.0
        %805 = vmatpush1.msra.mxu0 0.0
        %806 = vmatprep.subr.mxu0 0.0
        %807 = vmatpush1.msra.mxu0 0.0
        %808 = vmatprep.subr.mxu0 0.0
        %809 = vmatpush1.msra.mxu0 0.0
        %810 = vmatprep.subr.mxu0 0.0
        %811 = vmatpush1.msra.mxu0 0.0
        %812 = vmatprep.subr.mxu0 0.0
        %813 = vmatpush1.msra.mxu0 0.0
        %814 = vmatprep.subr.mxu0 0.0
        %815 = vmatpush1.msra.mxu0 0.0
        %816 = vmatprep.subr.mxu0 0.0
        %817 = vmatpush1.msra.mxu0 0.0
        %818 = vmatprep.subr.mxu0 0.0
        %819 = vmatpush1.msra.mxu0 0.0
        %820 = vmatprep.subr.mxu0 0.0
        %821 = vmatpush1.msra.mxu0 0.0
        %822 = vmatprep.subr.mxu0 0.0
        %823 = vmatpush1.msra.mxu0 0.0
        %824 = vmatprep.subr.mxu0 0.0
        %825 = vmatpush1.msra.mxu0 0.0
        %826 = vmatprep.subr.mxu0 0.0
        %827 = vmatpush1.msra.mxu0 0.0
        %828 = vmatprep.subr.mxu0 0.0
        %829 = vmatpush1.msra.mxu0 0.0
        %830 = vmatprep.subr.mxu0 0.0
        %831 = vmatpush1.msra.mxu0 0.0
        %832 = vmatprep.subr.mxu0 0.0
        %833 = vmatpush1.msra.mxu0 0.0
        %834 = vmatprep.subr.mxu0 0.0
        %835 = vmatpush1.msra.mxu0 0.0
        %836 = vmatprep.mubr.f32.mxu0 0.0
        %837 = vmatmul.mubr.f32.gmra.mrb[0].mxu0 %v690
        %v838 = vpop.f32.mrb[0].mxu0
        %v839 = vadd.f32 0.0, %v838
        %v840 = vpop.f32.mrb[0].mxu0
        %v841 = vadd.f32 0.0, %v840
        %842 = vmatprep.mubr.f32.mxu0 0.0
        %843 = vmatmul.mubr.f32.gmra.mrb[0].mxu0 %v693
        %v844 = vpop.f32.mrb[0].mxu0
        %v845 = vadd.f32 0.0, %v844
        %v846 = vpop.f32.mrb[0].mxu0
        %v847 = vadd.f32 0.0, %v846
        %848 = vdwg.mxu0
        %v850 = vsel %vm688, %v555, 0
        %v853 = vsel %vm688, %v556, 0
        %855 = vmatprep.subr.mxu0 %v656
        %856 = vmatpush1.msra.mxu0 %v655
        %857 = vmatprep.subr.mxu0 %v660
        %858 = vmatpush1.msra.mxu0 %v659
        %859 = vmatprep.subr.mxu0 %v664
        %860 = vmatpush1.msra.mxu0 %v663
        %861 = vmatprep.subr.mxu0 %v668
        %862 = vmatpush1.msra.mxu0 %v667
        %863 = vmatprep.subr.mxu0 0.0
        %864 = vmatpush1.msra.mxu0 0.0
        %865 = vmatprep.subr.mxu0 0.0
        %866 = vmatpush1.msra.mxu0 0.0
        %867 = vmatprep.subr.mxu0 0.0
        %868 = vmatpush1.msra.mxu0 0.0
        %869 = vmatprep.subr.mxu0 0.0
        %870 = vmatpush1.msra.mxu0 0.0
        %871 = vmatprep.subr.mxu0 0.0
        %872 = vmatpush1.msra.mxu0 0.0
        %873 = vmatprep.subr.mxu0 0.0
        %874 = vmatpush1.msra.mxu0 0.0
        %875 = vmatprep.subr.mxu0 0.0
        %876 = vmatpush1.msra.mxu0 0.0
        %877 = vmatprep.subr.mxu0 0.0
        %878 = vmatpush1.msra.mxu0 0.0
        %879 = vmatprep.subr.mxu0 0.0
        %880 = vmatpush1.msra.mxu0 0.0
        %881 = vmatprep.subr.mxu0 0.0
        %882 = vmatpush1.msra.mxu0 0.0
        %883 = vmatprep.subr.mxu0 0.0
        %884 = vmatpush1.msra.mxu0 0.0
        %885 = vmatprep.subr.mxu0 0.0
        %886 = vmatpush1.msra.mxu0 0.0
        %887 = vmatprep.subr.mxu0 0.0
        %888 = vmatpush1.msra.mxu0 0.0
        %889 = vmatprep.subr.mxu0 0.0
        %890 = vmatpush1.msra.mxu0 0.0
        %891 = vmatprep.subr.mxu0 0.0
        %892 = vmatpush1.msra.mxu0 0.0
        %893 = vmatprep.subr.mxu0 0.0
        %894 = vmatpush1.msra.mxu0 0.0
        %895 = vmatprep.subr.mxu0 0.0
        %896 = vmatpush1.msra.mxu0 0.0
        %897 = vmatprep.subr.mxu0 0.0
        %898 = vmatpush1.msra.mxu0 0.0
        %899 = vmatprep.subr.mxu0 0.0
        %900 = vmatpush1.msra.mxu0 0.0
        %901 = vmatprep.subr.mxu0 0.0
        %902 = vmatpush1.msra.mxu0 0.0
        %903 = vmatprep.subr.mxu0 0.0
        %904 = vmatpush1.msra.mxu0 0.0
        %905 = vmatprep.subr.mxu0 0.0
        %906 = vmatpush1.msra.mxu0 0.0
        %907 = vmatprep.subr.mxu0 0.0
        %908 = vmatpush1.msra.mxu0 0.0
        %909 = vmatprep.subr.mxu0 0.0
        %910 = vmatpush1.msra.mxu0 0.0
        %911 = vmatprep.subr.mxu0 0.0
        %912 = vmatpush1.msra.mxu0 0.0
        %913 = vmatprep.subr.mxu0 0.0
        %914 = vmatpush1.msra.mxu0 0.0
        %915 = vmatprep.subr.mxu0 0.0
        %916 = vmatpush1.msra.mxu0 0.0
        %917 = vmatprep.subr.mxu0 0.0
        %918 = vmatpush1.msra.mxu0 0.0
        %919 = vmatprep.mubr.f32.mxu0 0.0
        %920 = vmatmul.mubr.f32.gmra.mrb[0].mxu0 %v850
        %v921 = vpop.f32.mrb[0].mxu0
        %v922 = vadd.f32 %v762, %v921
        %v923 = vpop.f32.mrb[0].mxu0
        %v924 = vadd.f32 %v764, %v923
        %925 = vmatprep.mubr.f32.mxu0 0.0
        %926 = vmatmul.mubr.f32.gmra.mrb[0].mxu0 %v853
        %v927 = vpop.f32.mrb[0].mxu0
        %v928 = vadd.f32 %v768, %v927
        %v929 = vpop.f32.mrb[0].mxu0
        %v930 = vadd.f32 %v770, %v929
        %931 = vdwg.mxu0
        %932 = vmatprep.subr.mxu0 %v658
        %933 = vmatpush1.msra.mxu0 %v657
        %934 = vmatprep.subr.mxu0 %v662
        %935 = vmatpush1.msra.mxu0 %v661
        %936 = vmatprep.subr.mxu0 %v666
        %937 = vmatpush1.msra.mxu0 %v665
        %938 = vmatprep.subr.mxu0 %v670
        %939 = vmatpush1.msra.mxu0 %v669
        %940 = vmatprep.subr.mxu0 0.0
        %941 = vmatpush1.msra.mxu0 0.0
        %942 = vmatprep.subr.mxu0 0.0
        %943 = vmatpush1.msra.mxu0 0.0
        %944 = vmatprep.subr.mxu0 0.0
        %945 = vmatpush1.msra.mxu0 0.0
        %946 = vmatprep.subr.mxu0 0.0
        %947 = vmatpush1.msra.mxu0 0.0
        %948 = vmatprep.subr.mxu0 0.0
        %949 = vmatpush1.msra.mxu0 0.0
        %950 = vmatprep.subr.mxu0 0.0
        %951 = vmatpush1.msra.mxu0 0.0
        %952 = vmatprep.subr.mxu0 0.0
        %953 = vmatpush1.msra.mxu0 0.0
        %954 = vmatprep.subr.mxu0 0.0
        %955 = vmatpush1.msra.mxu0 0.0
        %956 = vmatprep.subr.mxu0 0.0
        %957 = vmatpush1.msra.mxu0 0.0
        %958 = vmatprep.subr.mxu0 0.0
        %959 = vmatpush1.msra.mxu0 0.0
        %960 = vmatprep.subr.mxu0 0.0
        %961 = vmatpush1.msra.mxu0 0.0
        %962 = vmatprep.subr.mxu0 0.0
        %963 = vmatpush1.msra.mxu0 0.0
        %964 = vmatprep.subr.mxu0 0.0
        %965 = vmatpush1.msra.mxu0 0.0
        %966 = vmatprep.subr.mxu0 0.0
        %967 = vmatpush1.msra.mxu0 0.0
        %968 = vmatprep.subr.mxu0 0.0
        %969 = vmatpush1.msra.mxu0 0.0
        %970 = vmatprep.subr.mxu0 0.0
        %971 = vmatpush1.msra.mxu0 0.0
        %972 = vmatprep.subr.mxu0 0.0
        %973 = vmatpush1.msra.mxu0 0.0
        %974 = vmatprep.subr.mxu0 0.0
        %975 = vmatpush1.msra.mxu0 0.0
        %976 = vmatprep.subr.mxu0 0.0
        %977 = vmatpush1.msra.mxu0 0.0
        %978 = vmatprep.subr.mxu0 0.0
        %979 = vmatpush1.msra.mxu0 0.0
        %980 = vmatprep.subr.mxu0 0.0
        %981 = vmatpush1.msra.mxu0 0.0
        %982 = vmatprep.subr.mxu0 0.0
        %983 = vmatpush1.msra.mxu0 0.0
        %984 = vmatprep.subr.mxu0 0.0
        %985 = vmatpush1.msra.mxu0 0.0
        %986 = vmatprep.subr.mxu0 0.0
        %987 = vmatpush1.msra.mxu0 0.0
        %988 = vmatprep.subr.mxu0 0.0
        %989 = vmatpush1.msra.mxu0 0.0
        %990 = vmatprep.subr.mxu0 0.0
        %991 = vmatpush1.msra.mxu0 0.0
        %992 = vmatprep.subr.mxu0 0.0
        %993 = vmatpush1.msra.mxu0 0.0
        %994 = vmatprep.subr.mxu0 0.0
        %995 = vmatpush1.msra.mxu0 0.0
        %996 = vmatprep.mubr.f32.mxu0 0.0
        %997 = vmatmul.mubr.f32.gmra.mrb[0].mxu0 %v850
        %v998 = vpop.f32.mrb[0].mxu0
        %v999 = vadd.f32 %v839, %v998
        %v1000 = vpop.f32.mrb[0].mxu0
        %v1001 = vadd.f32 %v841, %v1000
        %1002 = vmatprep.mubr.f32.mxu0 0.0
        %1003 = vmatmul.mubr.f32.gmra.mrb[0].mxu0 %v853
        %v1004 = vpop.f32.mrb[0].mxu0
        %v1005 = vadd.f32 %v845, %v1004
        %v1006 = vpop.f32.mrb[0].mxu0
        %v1007 = vadd.f32 %v847, %v1006
        %1008 = vdwg.mxu0
        %s1009 = scalar_lea.vmem [#allocation9], 256
        %v1010 = vld [vmem:[%s1009] sm:$0xff]
        %v1011 = vld [vmem:[%s1009 + $0x8] sm:$0xff]
        %v1012 = vld [vmem:[%s1009 + $0x10] sm:$0xff]
        %v1013 = vld [vmem:[%s1009 + $0x18] sm:$0xff]
        %v1014 = vld [vmem:[%s1009 + $0x20] sm:$0xff]
        %v1015 = vld [vmem:[%s1009 + $0x28] sm:$0xff]
        %v1016 = vld [vmem:[%s1009 + $0x30] sm:$0xff]
        %v1017 = vld [vmem:[%s1009 + $0x38] sm:$0xff]
        %v1018 = vld [vmem:[%s1009 + $0x40] sm:$0xff]
        %v1019 = vld [vmem:[%s1009 + $0x48] sm:$0xff]
        %v1020 = vld [vmem:[%s1009 + $0x50] sm:$0xff]
        %v1021 = vld [vmem:[%s1009 + $0x58] sm:$0xff]
        %v1022 = vld [vmem:[%s1009 + $0x60] sm:$0xff]
        %v1023 = vld [vmem:[%s1009 + $0x68] sm:$0xff]
        %v1024 = vld [vmem:[%s1009 + $0x70] sm:$0xff]
        %v1025 = vld [vmem:[%s1009 + $0x78] sm:$0xff]
        %v1027 = vsel %vm688, %v647, 0
        %v1030 = vsel %vm688, %v652, 0
        %1032 = vmatprep.subr.mxu0 %v1011
        %1033 = vmatpush1.msra.mxu0 %v1010
        %1034 = vmatprep.subr.mxu0 %v1015
        %1035 = vmatpush1.msra.mxu0 %v1014
        %1036 = vmatprep.subr.mxu0 %v1019
        %1037 = vmatpush1.msra.mxu0 %v1018
        %1038 = vmatprep.subr.mxu0 %v1023
        %1039 = vmatpush1.msra.mxu0 %v1022
        %1040 = vmatprep.subr.mxu0 0.0
        %1041 = vmatpush1.msra.mxu0 0.0
        %1042 = vmatprep.subr.mxu0 0.0
        %1043 = vmatpush1.msra.mxu0 0.0
        %1044 = vmatprep.subr.mxu0 0.0
        %1045 = vmatpush1.msra.mxu0 0.0
        %1046 = vmatprep.subr.mxu0 0.0
        %1047 = vmatpush1.msra.mxu0 0.0
        %1048 = vmatprep.subr.mxu0 0.0
        %1049 = vmatpush1.msra.mxu0 0.0
        %1050 = vmatprep.subr.mxu0 0.0
        %1051 = vmatpush1.msra.mxu0 0.0
        %1052 = vmatprep.subr.mxu0 0.0
        %1053 = vmatpush1.msra.mxu0 0.0
        %1054 = vmatprep.subr.mxu0 0.0
        %1055 = vmatpush1.msra.mxu0 0.0
        %1056 = vmatprep.subr.mxu0 0.0
        %1057 = vmatpush1.msra.mxu0 0.0
        %1058 = vmatprep.subr.mxu0 0.0
        %1059 = vmatpush1.msra.mxu0 0.0
        %1060 = vmatprep.subr.mxu0 0.0
        %1061 = vmatpush1.msra.mxu0 0.0
        %1062 = vmatprep.subr.mxu0 0.0
        %1063 = vmatpush1.msra.mxu0 0.0
        %1064 = vmatprep.subr.mxu0 0.0
        %1065 = vmatpush1.msra.mxu0 0.0
        %1066 = vmatprep.subr.mxu0 0.0
        %1067 = vmatpush1.msra.mxu0 0.0
        %1068 = vmatprep.subr.mxu0 0.0
        %1069 = vmatpush1.msra.mxu0 0.0
        %1070 = vmatprep.subr.mxu0 0.0
        %1071 = vmatpush1.msra.mxu0 0.0
        %1072 = vmatprep.subr.mxu0 0.0
        %1073 = vmatpush1.msra.mxu0 0.0
        %1074 = vmatprep.subr.mxu0 0.0
        %1075 = vmatpush1.msra.mxu0 0.0
        %1076 = vmatprep.subr.mxu0 0.0
        %1077 = vmatpush1.msra.mxu0 0.0
        %1078 = vmatprep.subr.mxu0 0.0
        %1079 = vmatpush1.msra.mxu0 0.0
        %1080 = vmatprep.subr.mxu0 0.0
        %1081 = vmatpush1.msra.mxu0 0.0
        %1082 = vmatprep.subr.mxu0 0.0
        %1083 = vmatpush1.msra.mxu0 0.0
        %1084 = vmatprep.subr.mxu0 0.0
        %1085 = vmatpush1.msra.mxu0 0.0
        %1086 = vmatprep.subr.mxu0 0.0
        %1087 = vmatpush1.msra.mxu0 0.0
        %1088 = vmatprep.subr.mxu0 0.0
        %1089 = vmatpush1.msra.mxu0 0.0
        %1090 = vmatprep.subr.mxu0 0.0
        %1091 = vmatpush1.msra.mxu0 0.0
        %1092 = vmatprep.subr.mxu0 0.0
        %1093 = vmatpush1.msra.mxu0 0.0
        %1094 = vmatprep.subr.mxu0 0.0
        %1095 = vmatpush1.msra.mxu0 0.0
        %1096 = vmatprep.mubr.f32.mxu0 0.0
        %1097 = vmatmul.mubr.f32.gmra.mrb[0].mxu0 %v1027
        %v1098 = vpop.f32.mrb[0].mxu0
        %v1099 = vadd.f32 0.0, %v1098
        %v1100 = vpop.f32.mrb[0].mxu0
        %v1101 = vadd.f32 0.0, %v1100
        %1102 = vmatprep.mubr.f32.mxu0 0.0
        %1103 = vmatmul.mubr.f32.gmra.mrb[0].mxu0 %v1030
        %v1104 = vpop.f32.mrb[0].mxu0
        %v1105 = vadd.f32 0.0, %v1104
        %v1106 = vpop.f32.mrb[0].mxu0
        %v1107 = vadd.f32 0.0, %v1106
        %1108 = vdwg.mxu0
        %1109 = vmatprep.subr.mxu0 %v1013
        %1110 = vmatpush1.msra.mxu0 %v1012
        %1111 = vmatprep.subr.mxu0 %v1017
        %1112 = vmatpush1.msra.mxu0 %v1016
        %1113 = vmatprep.subr.mxu0 %v1021
        %1114 = vmatpush1.msra.mxu0 %v1020
        %1115 = vmatprep.subr.mxu0 %v1025
        %1116 = vmatpush1.msra.mxu0 %v1024
        %1117 = vmatprep.subr.mxu0 0.0
        %1118 = vmatpush1.msra.mxu0 0.0
        %1119 = vmatprep.subr.mxu0 0.0
        %1120 = vmatpush1.msra.mxu0 0.0
        %1121 = vmatprep.subr.mxu0 0.0
        %1122 = vmatpush1.msra.mxu0 0.0
        %1123 = vmatprep.subr.mxu0 0.0
        %1124 = vmatpush1.msra.mxu0 0.0
        %1125 = vmatprep.subr.mxu0 0.0
        %1126 = vmatpush1.msra.mxu0 0.0
        %1127 = vmatprep.subr.mxu0 0.0
        %1128 = vmatpush1.msra.mxu0 0.0
        %1129 = vmatprep.subr.mxu0 0.0
        %1130 = vmatpush1.msra.mxu0 0.0
        %1131 = vmatprep.subr.mxu0 0.0
        %1132 = vmatpush1.msra.mxu0 0.0
        %1133 = vmatprep.subr.mxu0 0.0
        %1134 = vmatpush1.msra.mxu0 0.0
        %1135 = vmatprep.subr.mxu0 0.0
        %1136 = vmatpush1.msra.mxu0 0.0
        %1137 = vmatprep.subr.mxu0 0.0
        %1138 = vmatpush1.msra.mxu0 0.0
        %1139 = vmatprep.subr.mxu0 0.0
        %1140 = vmatpush1.msra.mxu0 0.0
        %1141 = vmatprep.subr.mxu0 0.0
        %1142 = vmatpush1.msra.mxu0 0.0
        %1143 = vmatprep.subr.mxu0 0.0
        %1144 = vmatpush1.msra.mxu0 0.0
        %1145 = vmatprep.subr.mxu0 0.0
        %1146 = vmatpush1.msra.mxu0 0.0
        %1147 = vmatprep.subr.mxu0 0.0
        %1148 = vmatpush1.msra.mxu0 0.0
        %1149 = vmatprep.subr.mxu0 0.0
        %1150 = vmatpush1.msra.mxu0 0.0
        %1151 = vmatprep.subr.mxu0 0.0
        %1152 = vmatpush1.msra.mxu0 0.0
        %1153 = vmatprep.subr.mxu0 0.0
        %1154 = vmatpush1.msra.mxu0 0.0
        %1155 = vmatprep.subr.mxu0 0.0
        %1156 = vmatpush1.msra.mxu0 0.0
        %1157 = vmatprep.subr.mxu0 0.0
        %1158 = vmatpush1.msra.mxu0 0.0
        %1159 = vmatprep.subr.mxu0 0.0
        %1160 = vmatpush1.msra.mxu0 0.0
        %1161 = vmatprep.subr.mxu0 0.0
        %1162 = vmatpush1.msra.mxu0 0.0
        %1163 = vmatprep.subr.mxu0 0.0
        %1164 = vmatpush1.msra.mxu0 0.0
        %1165 = vmatprep.subr.mxu0 0.0
        %1166 = vmatpush1.msra.mxu0 0.0
        %1167 = vmatprep.subr.mxu0 0.0
        %1168 = vmatpush1.msra.mxu0 0.0
        %1169 = vmatprep.subr.mxu0 0.0
        %1170 = vmatpush1.msra.mxu0 0.0
        %1171 = vmatprep.subr.mxu0 0.0
        %1172 = vmatpush1.msra.mxu0 0.0
        %1173 = vmatprep.mubr.f32.mxu0 0.0
        %1174 = vmatmul.mubr.f32.gmra.mrb[0].mxu0 %v1027
        %v1175 = vpop.f32.mrb[0].mxu0
        %v1176 = vadd.f32 0.0, %v1175
        %v1177 = vpop.f32.mrb[0].mxu0
        %v1178 = vadd.f32 0.0, %v1177
        %1179 = vmatprep.mubr.f32.mxu0 0.0
        %1180 = vmatmul.mubr.f32.gmra.mrb[0].mxu0 %v1030
        %v1181 = vpop.f32.mrb[0].mxu0
        %v1182 = vadd.f32 0.0, %v1181
        %v1183 = vpop.f32.mrb[0].mxu0
        %v1184 = vadd.f32 0.0, %v1183
        %1185 = vdwg.mxu0
        %v1186 = vadd.f32 %v922, %v1099
        %v1187 = vadd.f32 %v924, %v1101
        %v1188 = vadd.f32 %v999, %v1176
        %v1189 = vadd.f32 %v1001, %v1178
        %v1190 = vadd.f32 %v928, %v1105
        %v1191 = vadd.f32 %v930, %v1107
        %v1192 = vadd.f32 %v1005, %v1182
        %v1193 = vadd.f32 %v1007, %v1184
        %v1194 = vmul.f32 %v1186, %v539
        %v1195 = vmul.f32 %v1187, %v540
        %v1196 = vmul.f32 %v1188, %v541
        %v1197 = vmul.f32 %v1189, %v542
        %v1198 = vmul.f32 %v1190, %v543
        %v1199 = vmul.f32 %v1191, %v544
        %v1200 = vmul.f32 %v1192, %v545
        %v1201 = vmul.f32 %v1193, %v546
        %1204 = vrot.lane.b32.xlu0 %v1194, 64
        %v1205 = vpop.permute.xlu0 %1204
        %1206 = vrot.lane.b32.xlu0 %v1198, 64
        %v1207 = vpop.permute.xlu0 %1206
        %v1210 = vadd.f32 %v1194, %v1205
        %v1211 = vadd.f32 %v1198, %v1207
        %v1212 = vadd.f32 %v1210, %v1195
        %v1213 = vadd.f32 %v1211, %v1199
        %1216 = vrot.lane.b32.xlu0 %v1195, 64
        %v1217 = vpop.permute.xlu0 %1216
        %1218 = vrot.lane.b32.xlu0 %v1199, 64
        %v1219 = vpop.permute.xlu0 %1218
        %v1222 = vadd.f32 %v1212, %v1217
        %v1223 = vadd.f32 %v1213, %v1219
        %v1224 = vadd.f32 %v1222, %v1196
        %v1225 = vadd.f32 %v1223, %v1200
        %1228 = vrot.lane.b32.xlu0 %v1196, 64
        %v1229 = vpop.permute.xlu0 %1228
        %1230 = vrot.lane.b32.xlu0 %v1200, 64
        %v1231 = vpop.permute.xlu0 %1230
        %v1234 = vadd.f32 %v1224, %v1229
        %v1235 = vadd.f32 %v1225, %v1231
        %v1236 = vadd.f32 %v1234, %v1197
        %v1237 = vadd.f32 %v1235, %v1201
        %1240 = vrot.lane.b32.xlu0 %v1197, 64
        %v1241 = vpop.permute.xlu0 %1240
        %1242 = vrot.lane.b32.xlu0 %v1201, 64
        %v1243 = vpop.permute.xlu0 %1242
        %v1246 = vadd.f32 %v1236, %v1241
        %v1247 = vadd.f32 %v1237, %v1243
        %v1248 = vadd.f32 %v1246, %v551
        %v1249 = vadd.f32 %v1247, %v552
        %v1250 = vxor.u32 %v1248, 2147483648
        %v1251 = vxor.u32 %v1249, 2147483648
        %v1252 = vmul.f32 %v1250, 1.442695
        %v1253 = vpow.pop %v1252
        %v1254 = vmul.f32 %v1251, 1.442695
        %v1255 = vpow.pop %v1254
        %v1256 = vadd.f32 %v1253, 1.0
        %v1257 = vadd.f32 %v1255, 1.0
        %v1258 = vrcp.pop %v1256
        %v1259 = vmul.f32 1.0, %v1258
        %v1260 = vrcp.pop %v1257
        %v1261 = vmul.f32 1.0, %v1260
        %v1262 = vmul.f32 %v1259, %v555
        %v1263 = vmul.f32 %v1261, %v556
        %1264 = vmatprep.subr.mxu0 0.0
        %1265 = vmatpush1.msra.mxu0 %v1262
        %1266 = vmatprep.subr.mxu0 0.0
        %1267 = vmatpush1.msra.mxu0 %v1263
        %1268 = vmatprep.subr.mxu0 0.0
        %1269 = vmatpush1.msra.mxu0 0.0
        %1270 = vmatprep.subr.mxu0 0.0
        %1271 = vmatpush1.msra.mxu0 0.0
        %1272 = vmatprep.subr.mxu0 0.0
        %1273 = vmatpush1.msra.mxu0 0.0
        %1274 = vmatprep.subr.mxu0 0.0
        %1275 = vmatpush1.msra.mxu0 0.0
        %1276 = vmatprep.subr.mxu0 0.0
        %1277 = vmatpush1.msra.mxu0 0.0
        %1278 = vmatprep.subr.mxu0 0.0
        %1279 = vmatpush1.msra.mxu0 0.0
        %1280 = vmatprep.subr.mxu0 0.0
        %1281 = vmatpush1.msra.mxu0 0.0
        %1282 = vmatprep.subr.mxu0 0.0
        %1283 = vmatpush1.msra.mxu0 0.0
        %1284 = vmatprep.subr.mxu0 0.0
        %1285 = vmatpush1.msra.mxu0 0.0
        %1286 = vmatprep.subr.mxu0 0.0
        %1287 = vmatpush1.msra.mxu0 0.0
        %1288 = vmatprep.subr.mxu0 0.0
        %1289 = vmatpush1.msra.mxu0 0.0
        %1290 = vmatprep.subr.mxu0 0.0
        %1291 = vmatpush1.msra.mxu0 0.0
        %1292 = vmatprep.subr.mxu0 0.0
        %1293 = vmatpush1.msra.mxu0 0.0
        %1294 = vmatprep.subr.mxu0 0.0
        %1295 = vmatpush1.msra.mxu0 0.0
        %1296 = vmatprep.subr.mxu0 0.0
        %1297 = vmatpush1.msra.mxu0 0.0
        %1298 = vmatprep.subr.mxu0 0.0
        %1299 = vmatpush1.msra.mxu0 0.0
        %1300 = vmatprep.subr.mxu0 0.0
        %1301 = vmatpush1.msra.mxu0 0.0
        %1302 = vmatprep.subr.mxu0 0.0
        %1303 = vmatpush1.msra.mxu0 0.0
        %1304 = vmatprep.subr.mxu0 0.0
        %1305 = vmatpush1.msra.mxu0 0.0
        %1306 = vmatprep.subr.mxu0 0.0
        %1307 = vmatpush1.msra.mxu0 0.0
        %1308 = vmatprep.subr.mxu0 0.0
        %1309 = vmatpush1.msra.mxu0 0.0
        %1310 = vmatprep.subr.mxu0 0.0
        %1311 = vmatpush1.msra.mxu0 0.0
        %1312 = vmatprep.subr.mxu0 0.0
        %1313 = vmatpush1.msra.mxu0 0.0
        %1314 = vmatprep.subr.mxu0 0.0
        %1315 = vmatpush1.msra.mxu0 0.0
        %1316 = vmatprep.subr.mxu0 0.0
        %1317 = vmatpush1.msra.mxu0 0.0
        %1318 = vmatprep.subr.mxu0 0.0
        %1319 = vmatpush1.msra.mxu0 0.0
        %1320 = vmatprep.subr.mxu0 0.0
        %1321 = vmatpush1.msra.mxu0 0.0
        %1322 = vmatprep.subr.mxu0 0.0
        %1323 = vmatpush1.msra.mxu0 0.0
        %1324 = vmatprep.subr.mxu0 0.0
        %1325 = vmatpush1.msra.mxu0 0.0
        %1326 = vmatprep.subr.mxu0 0.0
        %1327 = vmatpush1.msra.mxu0 0.0
        %1328 = vmatprep.mubr.f32.mxu0 0.0
        %1329 = vmatmul.mubr.f32.gmra.mrb[0].mxu0 %v559
        %v1330 = vpop.f32.mrb[0].mxu0
        %v1331 = vadd.f32 0.0, %v1330
        %v1332 = vpop.f32.mrb[0].mxu0
        %1333 = vmatprep.mubr.f32.mxu0 0.0
        %1334 = vmatmul.mubr.f32.gmra.mrb[0].mxu0 %v562
        %v1335 = vpop.f32.mrb[0].mxu0
        %v1336 = vadd.f32 0.0, %v1335
        %v1337 = vpop.f32.mrb[0].mxu0
        %1338 = vmatprep.mubr.f32.mxu0 0.0
        %1339 = vmatmul.mubr.f32.gmra.mrb[0].mxu0 %v565
        %v1340 = vpop.f32.mrb[0].mxu0
        %v1341 = vadd.f32 0.0, %v1340
        %v1342 = vpop.f32.mrb[0].mxu0
        %1343 = vmatprep.mubr.f32.mxu0 0.0
        %1344 = vmatmul.mubr.f32.gmra.mrb[0].mxu0 %v568
        %v1345 = vpop.f32.mrb[0].mxu0
        %v1346 = vadd.f32 0.0, %v1345
        %v1347 = vpop.f32.mrb[0].mxu0
        %1348 = vdwg.mxu0
        %v1349 = vld [vmem:[#allocation11] sm:$0xff]
        %v1350 = vld [vmem:[#allocation11 + $0x8] sm:$0xff]
        %v1351 = vld [vmem:[#allocation11 + $0x10] sm:$0xff]
        %v1352 = vld [vmem:[#allocation11 + $0x18] sm:$0xff]
        %v1353 = vld [vmem:[#allocation11 + $0x20] sm:$0xff]
        %v1354 = vld [vmem:[#allocation11 + $0x28] sm:$0xff]
        %v1355 = vld [vmem:[#allocation11 + $0x30] sm:$0xff]
        %v1356 = vld [vmem:[#allocation11 + $0x38] sm:$0xff]
        %s1357 = scalar_lea.vmem [#allocation11], 64
        %v1358 = vld [vmem:[%s1357] sm:$0xff]
        %v1359 = vld [vmem:[%s1357 + $0x8] sm:$0xff]
        %v1360 = vld [vmem:[%s1357 + $0x10] sm:$0xff]
        %v1361 = vld [vmem:[%s1357 + $0x18] sm:$0xff]
        %v1362 = vld [vmem:[%s1357 + $0x20] sm:$0xff]
        %v1363 = vld [vmem:[%s1357 + $0x28] sm:$0xff]
        %v1364 = vld [vmem:[%s1357 + $0x30] sm:$0xff]
        %v1365 = vld [vmem:[%s1357 + $0x38] sm:$0xff]
        %v1367 = vsel %vm688, %v1331, 0
        %v1370 = vsel %vm688, %v1336, 0
        %1372 = vmatprep.subr.mxu0 %v1359
        %1373 = vmatpush1.msra.mxu0 %v1358
        %1374 = vmatprep.subr.mxu0 %v1361
        %1375 = vmatpush1.msra.mxu0 %v1360
        %1376 = vmatprep.subr.mxu0 %v1363
        %1377 = vmatpush1.msra.mxu0 %v1362
        %1378 = vmatprep.subr.mxu0 %v1365
        %1379 = vmatpush1.msra.mxu0 %v1364
        %1380 = vmatprep.subr.mxu0 0.0
        %1381 = vmatpush1.msra.mxu0 0.0
        %1382 = vmatprep.subr.mxu0 0.0
        %1383 = vmatpush1.msra.mxu0 0.0
        %1384 = vmatprep.subr.mxu0 0.0
        %1385 = vmatpush1.msra.mxu0 0.0
        %1386 = vmatprep.subr.mxu0 0.0
        %1387 = vmatpush1.msra.mxu0 0.0
        %1388 = vmatprep.subr.mxu0 0.0
        %1389 = vmatpush1.msra.mxu0 0.0
        %1390 = vmatprep.subr.mxu0 0.0
        %1391 = vmatpush1.msra.mxu0 0.0
        %1392 = vmatprep.subr.mxu0 0.0
        %1393 = vmatpush1.msra.mxu0 0.0
        %1394 = vmatprep.subr.mxu0 0.0
        %1395 = vmatpush1.msra.mxu0 0.0
        %1396 = vmatprep.subr.mxu0 0.0
        %1397 = vmatpush1.msra.mxu0 0.0
        %1398 = vmatprep.subr.mxu0 0.0
        %1399 = vmatpush1.msra.mxu0 0.0
        %1400 = vmatprep.subr.mxu0 0.0
        %1401 = vmatpush1.msra.mxu0 0.0
        %1402 = vmatprep.subr.mxu0 0.0
        %1403 = vmatpush1.msra.mxu0 0.0
        %1404 = vmatprep.subr.mxu0 0.0
        %1405 = vmatpush1.msra.mxu0 0.0
        %1406 = vmatprep.subr.mxu0 0.0
        %1407 = vmatpush1.msra.mxu0 0.0
        %1408 = vmatprep.subr.mxu0 0.0
        %1409 = vmatpush1.msra.mxu0 0.0
        %1410 = vmatprep.subr.mxu0 0.0
        %1411 = vmatpush1.msra.mxu0 0.0
        %1412 = vmatprep.subr.mxu0 0.0
        %1413 = vmatpush1.msra.mxu0 0.0
        %1414 = vmatprep.subr.mxu0 0.0
        %1415 = vmatpush1.msra.mxu0 0.0
        %1416 = vmatprep.subr.mxu0 0.0
        %1417 = vmatpush1.msra.mxu0 0.0
        %1418 = vmatprep.subr.mxu0 0.0
        %1419 = vmatpush1.msra.mxu0 0.0
        %1420 = vmatprep.subr.mxu0 0.0
        %1421 = vmatpush1.msra.mxu0 0.0
        %1422 = vmatprep.subr.mxu0 0.0
        %1423 = vmatpush1.msra.mxu0 0.0
        %1424 = vmatprep.subr.mxu0 0.0
        %1425 = vmatpush1.msra.mxu0 0.0
        %1426 = vmatprep.subr.mxu0 0.0
        %1427 = vmatpush1.msra.mxu0 0.0
        %1428 = vmatprep.subr.mxu0 0.0
        %1429 = vmatpush1.msra.mxu0 0.0
        %1430 = vmatprep.subr.mxu0 0.0
        %1431 = vmatpush1.msra.mxu0 0.0
        %1432 = vmatprep.subr.mxu0 0.0
        %1433 = vmatpush1.msra.mxu0 0.0
        %1434 = vmatprep.subr.mxu0 0.0
        %1435 = vmatpush1.msra.mxu0 0.0
        %1436 = vmatprep.mubr.f32.mxu0 0.0
        %1437 = vmatmul.mubr.f32.gmra.mrb[0].mxu0 %v1367
        %v1438 = vpop.f32.mrb[0].mxu0
        %v1439 = vadd.f32 0.0, %v1438
        %v1440 = vpop.f32.mrb[0].mxu0
        %v1441 = vadd.f32 0.0, %v1440
        %1442 = vmatprep.mubr.f32.mxu0 0.0
        %1443 = vmatmul.mubr.f32.gmra.mrb[0].mxu0 %v1370
        %v1444 = vpop.f32.mrb[0].mxu0
        %v1445 = vadd.f32 0.0, %v1444
        %v1446 = vpop.f32.mrb[0].mxu0
        %v1447 = vadd.f32 0.0, %v1446
        %1448 = vdwg.mxu0
        %v1450 = vsel %vm688, %v1262, 0
        %v1453 = vsel %vm688, %v1263, 0
        %1455 = vmatprep.subr.mxu0 %v1350
        %1456 = vmatpush1.msra.mxu0 %v1349
        %1457 = vmatprep.subr.mxu0 %v1352
        %1458 = vmatpush1.msra.mxu0 %v1351
        %1459 = vmatprep.subr.mxu0 %v1354
        %1460 = vmatpush1.msra.mxu0 %v1353
        %1461 = vmatprep.subr.mxu0 %v1356
        %1462 = vmatpush1.msra.mxu0 %v1355
        %1463 = vmatprep.subr.mxu0 0.0
        %1464 = vmatpush1.msra.mxu0 0.0
        %1465 = vmatprep.subr.mxu0 0.0
        %1466 = vmatpush1.msra.mxu0 0.0
        %1467 = vmatprep.subr.mxu0 0.0
        %1468 = vmatpush1.msra.mxu0 0.0
        %1469 = vmatprep.subr.mxu0 0.0
        %1470 = vmatpush1.msra.mxu0 0.0
        %1471 = vmatprep.subr.mxu0 0.0
        %1472 = vmatpush1.msra.mxu0 0.0
        %1473 = vmatprep.subr.mxu0 0.0
        %1474 = vmatpush1.msra.mxu0 0.0
        %1475 = vmatprep.subr.mxu0 0.0
        %1476 = vmatpush1.msra.mxu0 0.0
        %1477 = vmatprep.subr.mxu0 0.0
        %1478 = vmatpush1.msra.mxu0 0.0
        %1479 = vmatprep.subr.mxu0 0.0
        %1480 = vmatpush1.msra.mxu0 0.0
        %1481 = vmatprep.subr.mxu0 0.0
        %1482 = vmatpush1.msra.mxu0 0.0
        %1483 = vmatprep.subr.mxu0 0.0
        %1484 = vmatpush1.msra.mxu0 0.0
        %1485 = vmatprep.subr.mxu0 0.0
        %1486 = vmatpush1.msra.mxu0 0.0
        %1487 = vmatprep.subr.mxu0 0.0
        %1488 = vmatpush1.msra.mxu0 0.0
        %1489 = vmatprep.subr.mxu0 0.0
        %1490 = vmatpush1.msra.mxu0 0.0
        %1491 = vmatprep.subr.mxu0 0.0
        %1492 = vmatpush1.msra.mxu0 0.0
        %1493 = vmatprep.subr.mxu0 0.0
        %1494 = vmatpush1.msra.mxu0 0.0
        %1495 = vmatprep.subr.mxu0 0.0
        %1496 = vmatpush1.msra.mxu0 0.0
        %1497 = vmatprep.subr.mxu0 0.0
        %1498 = vmatpush1.msra.mxu0 0.0
        %1499 = vmatprep.subr.mxu0 0.0
        %1500 = vmatpush1.msra.mxu0 0.0
        %1501 = vmatprep.subr.mxu0 0.0
        %1502 = vmatpush1.msra.mxu0 0.0
        %1503 = vmatprep.subr.mxu0 0.0
        %1504 = vmatpush1.msra.mxu0 0.0
        %1505 = vmatprep.subr.mxu0 0.0
        %1506 = vmatpush1.msra.mxu0 0.0
        %1507 = vmatprep.subr.mxu0 0.0
        %1508 = vmatpush1.msra.mxu0 0.0
        %1509 = vmatprep.subr.mxu0 0.0
        %1510 = vmatpush1.msra.mxu0 0.0
        %1511 = vmatprep.subr.mxu0 0.0
        %1512 = vmatpush1.msra.mxu0 0.0
        %1513 = vmatprep.subr.mxu0 0.0
        %1514 = vmatpush1.msra.mxu0 0.0
        %1515 = vmatprep.subr.mxu0 0.0
        %1516 = vmatpush1.msra.mxu0 0.0
        %1517 = vmatprep.subr.mxu0 0.0
        %1518 = vmatpush1.msra.mxu0 0.0
        %1519 = vmatprep.mubr.f32.mxu0 0.0
        %1520 = vmatmul.mubr.f32.gmra.mrb[0].mxu0 %v1450
        %v1521 = vpop.f32.mrb[0].mxu0
        %v1522 = vadd.f32 %v1439, %v1521
        %v1523 = vpop.f32.mrb[0].mxu0
        %v1524 = vadd.f32 %v1441, %v1523
        %1525 = vmatprep.mubr.f32.mxu0 0.0
        %1526 = vmatmul.mubr.f32.gmra.mrb[0].mxu0 %v1453
        %v1527 = vpop.f32.mrb[0].mxu0
        %v1528 = vadd.f32 %v1445, %v1527
        %v1529 = vpop.f32.mrb[0].mxu0
        %v1530 = vadd.f32 %v1447, %v1529
        %1531 = vdwg.mxu0
        %s1532 = scalar_lea.vmem [#allocation11], 128
        %v1533 = vld [vmem:[%s1532] sm:$0xff]
        %v1534 = vld [vmem:[%s1532 + $0x8] sm:$0xff]
        %v1535 = vld [vmem:[%s1532 + $0x10] sm:$0xff]
        %v1536 = vld [vmem:[%s1532 + $0x18] sm:$0xff]
        %v1537 = vld [vmem:[%s1532 + $0x20] sm:$0xff]
        %v1538 = vld [vmem:[%s1532 + $0x28] sm:$0xff]
        %v1539 = vld [vmem:[%s1532 + $0x30] sm:$0xff]
        %v1540 = vld [vmem:[%s1532 + $0x38] sm:$0xff]
        %v1542 = vsel %vm688, %v1341, 0
        %v1545 = vsel %vm688, %v1346, 0
        %1547 = vmatprep.subr.mxu0 %v1534
        %1548 = vmatpush1.msra.mxu0 %v1533
        %1549 = vmatprep.subr.mxu0 %v1536
        %1550 = vmatpush1.msra.mxu0 %v1535
        %1551 = vmatprep.subr.mxu0 %v1538
        %1552 = vmatpush1.msra.mxu0 %v1537
        %1553 = vmatprep.subr.mxu0 %v1540
        %1554 = vmatpush1.msra.mxu0 %v1539
        %1555 = vmatprep.subr.mxu0 0.0
        %1556 = vmatpush1.msra.mxu0 0.0
        %1557 = vmatprep.subr.mxu0 0.0
        %1558 = vmatpush1.msra.mxu0 0.0
        %1559 = vmatprep.subr.mxu0 0.0
        %1560 = vmatpush1.msra.mxu0 0.0
        %1561 = vmatprep.subr.mxu0 0.0
        %1562 = vmatpush1.msra.mxu0 0.0
        %1563 = vmatprep.subr.mxu0 0.0
        %1564 = vmatpush1.msra.mxu0 0.0
        %1565 = vmatprep.subr.mxu0 0.0
        %1566 = vmatpush1.msra.mxu0 0.0
        %1567 = vmatprep.subr.mxu0 0.0
        %1568 = vmatpush1.msra.mxu0 0.0
        %1569 = vmatprep.subr.mxu0 0.0
        %1570 = vmatpush1.msra.mxu0 0.0
        %1571 = vmatprep.subr.mxu0 0.0
        %1572 = vmatpush1.msra.mxu0 0.0
        %1573 = vmatprep.subr.mxu0 0.0
        %1574 = vmatpush1.msra.mxu0 0.0
        %1575 = vmatprep.subr.mxu0 0.0
        %1576 = vmatpush1.msra.mxu0 0.0
        %1577 = vmatprep.subr.mxu0 0.0
        %1578 = vmatpush1.msra.mxu0 0.0
        %1579 = vmatprep.subr.mxu0 0.0
        %1580 = vmatpush1.msra.mxu0 0.0
        %1581 = vmatprep.subr.mxu0 0.0
        %1582 = vmatpush1.msra.mxu0 0.0
        %1583 = vmatprep.subr.mxu0 0.0
        %1584 = vmatpush1.msra.mxu0 0.0
        %1585 = vmatprep.subr.mxu0 0.0
        %1586 = vmatpush1.msra.mxu0 0.0
        %1587 = vmatprep.subr.mxu0 0.0
        %1588 = vmatpush1.msra.mxu0 0.0
        %1589 = vmatprep.subr.mxu0 0.0
        %1590 = vmatpush1.msra.mxu0 0.0
        %1591 = vmatprep.subr.mxu0 0.0
        %1592 = vmatpush1.msra.mxu0 0.0
        %1593 = vmatprep.subr.mxu0 0.0
        %1594 = vmatpush1.msra.mxu0 0.0
        %1595 = vmatprep.subr.mxu0 0.0
        %1596 = vmatpush1.msra.mxu0 0.0
        %1597 = vmatprep.subr.mxu0 0.0
        %1598 = vmatpush1.msra.mxu0 0.0
        %1599 = vmatprep.subr.mxu0 0.0
        %1600 = vmatpush1.msra.mxu0 0.0
        %1601 = vmatprep.subr.mxu0 0.0
        %1602 = vmatpush1.msra.mxu0 0.0
        %1603 = vmatprep.subr.mxu0 0.0
        %1604 = vmatpush1.msra.mxu0 0.0
        %1605 = vmatprep.subr.mxu0 0.0
        %1606 = vmatpush1.msra.mxu0 0.0
        %1607 = vmatprep.subr.mxu0 0.0
        %1608 = vmatpush1.msra.mxu0 0.0
        %1609 = vmatprep.subr.mxu0 0.0
        %1610 = vmatpush1.msra.mxu0 0.0
        %1611 = vmatprep.mubr.f32.mxu0 0.0
        %1612 = vmatmul.mubr.f32.gmra.mrb[0].mxu0 %v1542
        %v1613 = vpop.f32.mrb[0].mxu0
        %v1614 = vadd.f32 0.0, %v1613
        %v1615 = vpop.f32.mrb[0].mxu0
        %v1616 = vadd.f32 0.0, %v1615
        %1617 = vmatprep.mubr.f32.mxu0 0.0
        %1618 = vmatmul.mubr.f32.gmra.mrb[0].mxu0 %v1545
        %v1619 = vpop.f32.mrb[0].mxu0
        %v1620 = vadd.f32 0.0, %v1619
        %v1621 = vpop.f32.mrb[0].mxu0
        %v1622 = vadd.f32 0.0, %v1621
        %1623 = vdwg.mxu0
        %v1624 = vadd.f32 %v1522, %v1614
        %v1625 = vadd.f32 %v1524, %v1616
        %v1626 = vadd.f32 %v1528, %v1620
        %v1627 = vadd.f32 %v1530, %v1622
        %v1628 = vmul.f32 %v1624, %v547
        %v1629 = vmul.f32 %v1625, %v548
        %v1630 = vmul.f32 %v1626, %v549
        %v1631 = vmul.f32 %v1627, %v550
        %1634 = vrot.lane.b32.xlu0 %v1628, 96
        %v1635 = vpop.permute.xlu0 %1634
        %1636 = vrot.lane.b32.xlu0 %v1630, 96
        %v1637 = vpop.permute.xlu0 %1636
        %v1640 = vadd.f32 %v1628, %v1635
        %v1641 = vadd.f32 %v1630, %v1637
        %1642 = vrot.lane.b32.xlu0 %v1628, 64
        %v1643 = vpop.permute.xlu0 %1642
        %1644 = vrot.lane.b32.xlu0 %v1630, 64
        %v1645 = vpop.permute.xlu0 %1644
        %v1648 = vadd.f32 %v1640, %v1643
        %v1649 = vadd.f32 %v1641, %v1645
        %1650 = vrot.lane.b32.xlu0 %v1628, 32
        %v1651 = vpop.permute.xlu0 %1650
        %1652 = vrot.lane.b32.xlu0 %v1630, 32
        %v1653 = vpop.permute.xlu0 %1652
        %v1656 = vadd.f32 %v1648, %v1651
        %v1657 = vadd.f32 %v1649, %v1653
        %v1658 = vadd.f32 %v1656, %v1629
        %v1659 = vadd.f32 %v1657, %v1631
        %1662 = vrot.lane.b32.xlu0 %v1629, 96
        %v1663 = vpop.permute.xlu0 %1662
        %1664 = vrot.lane.b32.xlu0 %v1631, 96
        %v1665 = vpop.permute.xlu0 %1664
        %v1668 = vadd.f32 %v1658, %v1663
        %v1669 = vadd.f32 %v1659, %v1665
        %1670 = vrot.lane.b32.xlu0 %v1629, 64
        %v1671 = vpop.permute.xlu0 %1670
        %1672 = vrot.lane.b32.xlu0 %v1631, 64
        %v1673 = vpop.permute.xlu0 %1672
        %v1676 = vadd.f32 %v1668, %v1671
        %v1677 = vadd.f32 %v1669, %v1673
        %1678 = vrot.lane.b32.xlu0 %v1629, 32
        %v1679 = vpop.permute.xlu0 %1678
        %1680 = vrot.lane.b32.xlu0 %v1631, 32
        %v1681 = vpop.permute.xlu0 %1680
        %v1684 = vadd.f32 %v1676, %v1679
        %v1685 = vadd.f32 %v1677, %v1681
        %v1686 = vadd.f32 %v1684, %v553
        %v1687 = vadd.f32 %v1685, %v554
        %v1688 = vtanh.pop %v1686
        %v1689 = vtanh.pop %v1687
        %1690 = vrot.lane.b32.xlu0 %v555, 32
        %v1691 = vpop.permute.xlu0 %1690
        %1692 = vrot.lane.b32.xlu0 %v556, 32
        %v1693 = vpop.permute.xlu0 %1692
        %v1696 = vmul.f32 %v1259, %v1691
        %v1697 = vmul.f32 %v1261, %v1693
        %v1698 = vsub.f32 1.0, %v1259
        %v1699 = vsub.f32 1.0, %v1261
        %1702 = vrot.lane.b32.xlu0 %v1688, 32
        %v1703 = vpop.permute.xlu0 %1702
        %1704 = vrot.lane.b32.xlu0 %v1689, 32
        %v1705 = vpop.permute.xlu0 %1704
        %v1708 = vmul.f32 %v1698, %v1703
        %v1709 = vmul.f32 %v1699, %v1705
        %v1710 = vadd.f32 %v1696, %v1708
        %v1711 = vadd.f32 %v1697, %v1709
        %1714 = vrot.lane.b32.xlu0 %v1710, 96
        %v1715 = vpop.permute.xlu0 %1714
        %1716 = vrot.lane.b32.xlu0 %v1711, 96
        %v1717 = vpop.permute.xlu0 %1716
        %1720 = vst.msk [vmem:[#allocation2] sm:$0xff] %vm688, %v1715
        %1721 = vst.msk [vmem:[#allocation2 + $0x8] sm:$0xff] %vm688, %v1717
        %1722 = vst.msk [vmem:[%s518] sm:$0xff] %vm688, %v1715
        %1723 = vst.msk [vmem:[%s518 + $0x8] sm:$0xff] %vm688, %v1717
        %s1724 = scalar_lea.vmem %s446, 16 [#allocation3]
        %v1725 = vld [vmem:[%s1724] sm:$0xff]
        %v1726 = vld [vmem:[%s1724 + $0x8] sm:$0xff]
        %s1727 = scalar_lea.vmem %s455, 16 [#allocation6]
        %v1728 = vld [vmem:[%s1727] sm:$0xff]
        %v1729 = vld [vmem:[%s1727 + $0x8] sm:$0xff]
        %v1730 = vld [vmem:[#allocation2] sm:$0xff]
        %v1731 = vld [vmem:[#allocation2 + $0x8] sm:$0xff]
        %1732 = vmatprep.subr.mxu0 0.0
        %1733 = vmatpush1.msra.mxu0 %v1730
        %1734 = vmatprep.subr.mxu0 0.0
        %1735 = vmatpush1.msra.mxu0 %v1731
        %1736 = vmatprep.subr.mxu0 0.0
        %1737 = vmatpush1.msra.mxu0 0.0
        %1738 = vmatprep.subr.mxu0 0.0
        %1739 = vmatpush1.msra.mxu0 0.0
        %1740 = vmatprep.subr.mxu0 0.0
        %1741 = vmatpush1.msra.mxu0 0.0
        %1742 = vmatprep.subr.mxu0 0.0
        %1743 = vmatpush1.msra.mxu0 0.0
        %1744 = vmatprep.subr.mxu0 0.0
        %1745 = vmatpush1.msra.mxu0 0.0
        %1746 = vmatprep.subr.mxu0 0.0
        %1747 = vmatpush1.msra.mxu0 0.0
        %1748 = vmatprep.subr.mxu0 0.0
        %1749 = vmatpush1.msra.mxu0 0.0
        %1750 = vmatprep.subr.mxu0 0.0
        %1751 = vmatpush1.msra.mxu0 0.0
        %1752 = vmatprep.subr.mxu0 0.0
        %1753 = vmatpush1.msra.mxu0 0.0
        %1754 = vmatprep.subr.mxu0 0.0
        %1755 = vmatpush1.msra.mxu0 0.0
        %1756 = vmatprep.subr.mxu0 0.0
        %1757 = vmatpush1.msra.mxu0 0.0
        %1758 = vmatprep.subr.mxu0 0.0
        %1759 = vmatpush1.msra.mxu0 0.0
        %1760 = vmatprep.subr.mxu0 0.0
        %1761 = vmatpush1.msra.mxu0 0.0
        %1762 = vmatprep.subr.mxu0 0.0
        %1763 = vmatpush1.msra.mxu0 0.0
        %1764 = vmatprep.subr.mxu0 0.0
        %1765 = vmatpush1.msra.mxu0 0.0
        %1766 = vmatprep.subr.mxu0 0.0
        %1767 = vmatpush1.msra.mxu0 0.0
        %1768 = vmatprep.subr.mxu0 0.0
        %1769 = vmatpush1.msra.mxu0 0.0
        %1770 = vmatprep.subr.mxu0 0.0
        %1771 = vmatpush1.msra.mxu0 0.0
        %1772 = vmatprep.subr.mxu0 0.0
        %1773 = vmatpush1.msra.mxu0 0.0
        %1774 = vmatprep.subr.mxu0 0.0
        %1775 = vmatpush1.msra.mxu0 0.0
        %1776 = vmatprep.subr.mxu0 0.0
        %1777 = vmatpush1.msra.mxu0 0.0
        %1778 = vmatprep.subr.mxu0 0.0
        %1779 = vmatpush1.msra.mxu0 0.0
        %1780 = vmatprep.subr.mxu0 0.0
        %1781 = vmatpush1.msra.mxu0 0.0
        %1782 = vmatprep.subr.mxu0 0.0
        %1783 = vmatpush1.msra.mxu0 0.0
        %1784 = vmatprep.subr.mxu0 0.0
        %1785 = vmatpush1.msra.mxu0 0.0
        %1786 = vmatprep.subr.mxu0 0.0
        %1787 = vmatpush1.msra.mxu0 0.0
        %1788 = vmatprep.subr.mxu0 0.0
        %1789 = vmatpush1.msra.mxu0 0.0
        %1790 = vmatprep.subr.mxu0 0.0
        %1791 = vmatpush1.msra.mxu0 0.0
        %1792 = vmatprep.subr.mxu0 0.0
        %1793 = vmatpush1.msra.mxu0 0.0
        %1794 = vmatprep.subr.mxu0 0.0
        %1795 = vmatpush1.msra.mxu0 0.0
        %1796 = vmatprep.mubr.f32.mxu0 0.0
        %1797 = vmatmul.mubr.f32.gmra.mrb[0].mxu0 %v559
        %v1798 = vpop.f32.mrb[0].mxu0
        %v1799 = vadd.f32 0.0, %v1798
        %v1800 = vpop.f32.mrb[0].mxu0
        %1801 = vmatprep.mubr.f32.mxu0 0.0
        %1802 = vmatmul.mubr.f32.gmra.mrb[0].mxu0 %v562
        %v1803 = vpop.f32.mrb[0].mxu0
        %v1804 = vadd.f32 0.0, %v1803
        %v1805 = vpop.f32.mrb[0].mxu0
        %1806 = vmatprep.mubr.f32.mxu0 0.0
        %1807 = vmatmul.mubr.f32.gmra.mrb[0].mxu0 %v565
        %v1808 = vpop.f32.mrb[0].mxu0
        %v1809 = vadd.f32 0.0, %v1808
        %v1810 = vpop.f32.mrb[0].mxu0
        %1811 = vmatprep.mubr.f32.mxu0 0.0
        %1812 = vmatmul.mubr.f32.gmra.mrb[0].mxu0 %v568
        %v1813 = vpop.f32.mrb[0].mxu0
        %v1814 = vadd.f32 0.0, %v1813
        %v1815 = vpop.f32.mrb[0].mxu0
        %1816 = vdwg.mxu0
        %v1817 = vld [vmem:[#allocation9] sm:$0xff]
        %v1818 = vld [vmem:[#allocation9 + $0x8] sm:$0xff]
        %v1819 = vld [vmem:[#allocation9 + $0x10] sm:$0xff]
        %v1820 = vld [vmem:[#allocation9 + $0x18] sm:$0xff]
        %v1821 = vld [vmem:[#allocation9 + $0x20] sm:$0xff]
        %v1822 = vld [vmem:[#allocation9 + $0x28] sm:$0xff]
        %v1823 = vld [vmem:[#allocation9 + $0x30] sm:$0xff]
        %v1824 = vld [vmem:[#allocation9 + $0x38] sm:$0xff]
        %v1825 = vld [vmem:[#allocation9 + $0x40] sm:$0xff]
        %v1826 = vld [vmem:[#allocation9 + $0x48] sm:$0xff]
        %v1827 = vld [vmem:[#allocation9 + $0x50] sm:$0xff]
        %v1828 = vld [vmem:[#allocation9 + $0x58] sm:$0xff]
        %v1829 = vld [vmem:[#allocation9 + $0x60] sm:$0xff]
        %v1830 = vld [vmem:[#allocation9 + $0x68] sm:$0xff]
        %v1831 = vld [vmem:[#allocation9 + $0x70] sm:$0xff]
        %v1832 = vld [vmem:[#allocation9 + $0x78] sm:$0xff]
        %v1833 = vld [vmem:[%s671] sm:$0xff]
        %v1834 = vld [vmem:[%s671 + $0x8] sm:$0xff]
        %v1835 = vld [vmem:[%s671 + $0x10] sm:$0xff]
        %v1836 = vld [vmem:[%s671 + $0x18] sm:$0xff]
        %v1837 = vld [vmem:[%s671 + $0x20] sm:$0xff]
        %v1838 = vld [vmem:[%s671 + $0x28] sm:$0xff]
        %v1839 = vld [vmem:[%s671 + $0x30] sm:$0xff]
        %v1840 = vld [vmem:[%s671 + $0x38] sm:$0xff]
        %v1841 = vld [vmem:[%s671 + $0x40] sm:$0xff]
        %v1842 = vld [vmem:[%s671 + $0x48] sm:$0xff]
        %v1843 = vld [vmem:[%s671 + $0x50] sm:$0xff]
        %v1844 = vld [vmem:[%s671 + $0x58] sm:$0xff]
        %v1845 = vld [vmem:[%s671 + $0x60] sm:$0xff]
        %v1846 = vld [vmem:[%s671 + $0x68] sm:$0xff]
        %v1847 = vld [vmem:[%s671 + $0x70] sm:$0xff]
        %v1848 = vld [vmem:[%s671 + $0x78] sm:$0xff]
        %v1850 = vsel %vm688, %v1799, 0
        %v1853 = vsel %vm688, %v1804, 0
        %1855 = vmatprep.subr.mxu0 %v1834
        %1856 = vmatpush1.msra.mxu0 %v1833
        %1857 = vmatprep.subr.mxu0 %v1838
        %1858 = vmatpush1.msra.mxu0 %v1837
        %1859 = vmatprep.subr.mxu0 %v1842
        %1860 = vmatpush1.msra.mxu0 %v1841
        %1861 = vmatprep.subr.mxu0 %v1846
        %1862 = vmatpush1.msra.mxu0 %v1845
        %1863 = vmatprep.subr.mxu0 0.0
        %1864 = vmatpush1.msra.mxu0 0.0
        %1865 = vmatprep.subr.mxu0 0.0
        %1866 = vmatpush1.msra.mxu0 0.0
        %1867 = vmatprep.subr.mxu0 0.0
        %1868 = vmatpush1.msra.mxu0 0.0
        %1869 = vmatprep.subr.mxu0 0.0
        %1870 = vmatpush1.msra.mxu0 0.0
        %1871 = vmatprep.subr.mxu0 0.0
        %1872 = vmatpush1.msra.mxu0 0.0
        %1873 = vmatprep.subr.mxu0 0.0
        %1874 = vmatpush1.msra.mxu0 0.0
        %1875 = vmatprep.subr.mxu0 0.0
        %1876 = vmatpush1.msra.mxu0 0.0
        %1877 = vmatprep.subr.mxu0 0.0
        %1878 = vmatpush1.msra.mxu0 0.0
        %1879 = vmatprep.subr.mxu0 0.0
        %1880 = vmatpush1.msra.mxu0 0.0
        %1881 = vmatprep.subr.mxu0 0.0
        %1882 = vmatpush1.msra.mxu0 0.0
        %1883 = vmatprep.subr.mxu0 0.0
        %1884 = vmatpush1.msra.mxu0 0.0
        %1885 = vmatprep.subr.mxu0 0.0
        %1886 = vmatpush1.msra.mxu0 0.0
        %1887 = vmatprep.subr.mxu0 0.0
        %1888 = vmatpush1.msra.mxu0 0.0
        %1889 = vmatprep.subr.mxu0 0.0
        %1890 = vmatpush1.msra.mxu0 0.0
        %1891 = vmatprep.subr.mxu0 0.0
        %1892 = vmatpush1.msra.mxu0 0.0
        %1893 = vmatprep.subr.mxu0 0.0
        %1894 = vmatpush1.msra.mxu0 0.0
        %1895 = vmatprep.subr.mxu0 0.0
        %1896 = vmatpush1.msra.mxu0 0.0
        %1897 = vmatprep.subr.mxu0 0.0
        %1898 = vmatpush1.msra.mxu0 0.0
        %1899 = vmatprep.subr.mxu0 0.0
        %1900 = vmatpush1.msra.mxu0 0.0
        %1901 = vmatprep.subr.mxu0 0.0
        %1902 = vmatpush1.msra.mxu0 0.0
        %1903 = vmatprep.subr.mxu0 0.0
        %1904 = vmatpush1.msra.mxu0 0.0
        %1905 = vmatprep.subr.mxu0 0.0
        %1906 = vmatpush1.msra.mxu0 0.0
        %1907 = vmatprep.subr.mxu0 0.0
        %1908 = vmatpush1.msra.mxu0 0.0
        %1909 = vmatprep.subr.mxu0 0.0
        %1910 = vmatpush1.msra.mxu0 0.0
        %1911 = vmatprep.subr.mxu0 0.0
        %1912 = vmatpush1.msra.mxu0 0.0
        %1913 = vmatprep.subr.mxu0 0.0
        %1914 = vmatpush1.msra.mxu0 0.0
        %1915 = vmatprep.subr.mxu0 0.0
        %1916 = vmatpush1.msra.mxu0 0.0
        %1917 = vmatprep.subr.mxu0 0.0
        %1918 = vmatpush1.msra.mxu0 0.0
        %1919 = vmatprep.mubr.f32.mxu0 0.0
        %1920 = vmatmul.mubr.f32.gmra.mrb[0].mxu0 %v1850
        %v1921 = vpop.f32.mrb[0].mxu0
        %v1922 = vadd.f32 0.0, %v1921
        %v1923 = vpop.f32.mrb[0].mxu0
        %v1924 = vadd.f32 0.0, %v1923
        %1925 = vmatprep.mubr.f32.mxu0 0.0
        %1926 = vmatmul.mubr.f32.gmra.mrb[0].mxu0 %v1853
        %v1927 = vpop.f32.mrb[0].mxu0
        %v1928 = vadd.f32 0.0, %v1927
        %v1929 = vpop.f32.mrb[0].mxu0
        %v1930 = vadd.f32 0.0, %v1929
        %1931 = vdwg.mxu0
        %1932 = vmatprep.subr.mxu0 %v1836
        %1933 = vmatpush1.msra.mxu0 %v1835
        %1934 = vmatprep.subr.mxu0 %v1840
        %1935 = vmatpush1.msra.mxu0 %v1839
        %1936 = vmatprep.subr.mxu0 %v1844
        %1937 = vmatpush1.msra.mxu0 %v1843
        %1938 = vmatprep.subr.mxu0 %v1848
        %1939 = vmatpush1.msra.mxu0 %v1847
        %1940 = vmatprep.subr.mxu0 0.0
        %1941 = vmatpush1.msra.mxu0 0.0
        %1942 = vmatprep.subr.mxu0 0.0
        %1943 = vmatpush1.msra.mxu0 0.0
        %1944 = vmatprep.subr.mxu0 0.0
        %1945 = vmatpush1.msra.mxu0 0.0
        %1946 = vmatprep.subr.mxu0 0.0
        %1947 = vmatpush1.msra.mxu0 0.0
        %1948 = vmatprep.subr.mxu0 0.0
        %1949 = vmatpush1.msra.mxu0 0.0
        %1950 = vmatprep.subr.mxu0 0.0
        %1951 = vmatpush1.msra.mxu0 0.0
        %1952 = vmatprep.subr.mxu0 0.0
        %1953 = vmatpush1.msra.mxu0 0.0
        %1954 = vmatprep.subr.mxu0 0.0
        %1955 = vmatpush1.msra.mxu0 0.0
        %1956 = vmatprep.subr.mxu0 0.0
        %1957 = vmatpush1.msra.mxu0 0.0
        %1958 = vmatprep.subr.mxu0 0.0
        %1959 = vmatpush1.msra.mxu0 0.0
        %1960 = vmatprep.subr.mxu0 0.0
        %1961 = vmatpush1.msra.mxu0 0.0
        %1962 = vmatprep.subr.mxu0 0.0
        %1963 = vmatpush1.msra.mxu0 0.0
        %1964 = vmatprep.subr.mxu0 0.0
        %1965 = vmatpush1.msra.mxu0 0.0
        %1966 = vmatprep.subr.mxu0 0.0
        %1967 = vmatpush1.msra.mxu0 0.0
        %1968 = vmatprep.subr.mxu0 0.0
        %1969 = vmatpush1.msra.mxu0 0.0
        %1970 = vmatprep.subr.mxu0 0.0
        %1971 = vmatpush1.msra.mxu0 0.0
        %1972 = vmatprep.subr.mxu0 0.0
        %1973 = vmatpush1.msra.mxu0 0.0
        %1974 = vmatprep.subr.mxu0 0.0
        %1975 = vmatpush1.msra.mxu0 0.0
        %1976 = vmatprep.subr.mxu0 0.0
        %1977 = vmatpush1.msra.mxu0 0.0
        %1978 = vmatprep.subr.mxu0 0.0
        %1979 = vmatpush1.msra.mxu0 0.0
        %1980 = vmatprep.subr.mxu0 0.0
        %1981 = vmatpush1.msra.mxu0 0.0
        %1982 = vmatprep.subr.mxu0 0.0
        %1983 = vmatpush1.msra.mxu0 0.0
        %1984 = vmatprep.subr.mxu0 0.0
        %1985 = vmatpush1.msra.mxu0 0.0
        %1986 = vmatprep.subr.mxu0 0.0
        %1987 = vmatpush1.msra.mxu0 0.0
        %1988 = vmatprep.subr.mxu0 0.0
        %1989 = vmatpush1.msra.mxu0 0.0
        %1990 = vmatprep.subr.mxu0 0.0
        %1991 = vmatpush1.msra.mxu0 0.0
        %1992 = vmatprep.subr.mxu0 0.0
        %1993 = vmatpush1.msra.mxu0 0.0
        %1994 = vmatprep.subr.mxu0 0.0
        %1995 = vmatpush1.msra.mxu0 0.0
        %1996 = vmatprep.mubr.f32.mxu0 0.0
        %1997 = vmatmul.mubr.f32.gmra.mrb[0].mxu0 %v1850
        %v1998 = vpop.f32.mrb[0].mxu0
        %v1999 = vadd.f32 0.0, %v1998
        %v2000 = vpop.f32.mrb[0].mxu0
        %v2001 = vadd.f32 0.0, %v2000
        %2002 = vmatprep.mubr.f32.mxu0 0.0
        %2003 = vmatmul.mubr.f32.gmra.mrb[0].mxu0 %v1853
        %v2004 = vpop.f32.mrb[0].mxu0
        %v2005 = vadd.f32 0.0, %v2004
        %v2006 = vpop.f32.mrb[0].mxu0
        %v2007 = vadd.f32 0.0, %v2006
        %2008 = vdwg.mxu0
        %v2010 = vsel %vm688, %v1730, 0
        %v2013 = vsel %vm688, %v1731, 0
        %2015 = vmatprep.subr.mxu0 %v1818
        %2016 = vmatpush1.msra.mxu0 %v1817
        %2017 = vmatprep.subr.mxu0 %v1822
        %2018 = vmatpush1.msra.mxu0 %v1821
        %2019 = vmatprep.subr.mxu0 %v1826
        %2020 = vmatpush1.msra.mxu0 %v1825
        %2021 = vmatprep.subr.mxu0 %v1830
        %2022 = vmatpush1.msra.mxu0 %v1829
        %2023 = vmatprep.subr.mxu0 0.0
        %2024 = vmatpush1.msra.mxu0 0.0
        %2025 = vmatprep.subr.mxu0 0.0
        %2026 = vmatpush1.msra.mxu0 0.0
        %2027 = vmatprep.subr.mxu0 0.0
        %2028 = vmatpush1.msra.mxu0 0.0
        %2029 = vmatprep.subr.mxu0 0.0
        %2030 = vmatpush1.msra.mxu0 0.0
        %2031 = vmatprep.subr.mxu0 0.0
        %2032 = vmatpush1.msra.mxu0 0.0
        %2033 = vmatprep.subr.mxu0 0.0
        %2034 = vmatpush1.msra.mxu0 0.0
        %2035 = vmatprep.subr.mxu0 0.0
        %2036 = vmatpush1.msra.mxu0 0.0
        %2037 = vmatprep.subr.mxu0 0.0
        %2038 = vmatpush1.msra.mxu0 0.0
        %2039 = vmatprep.subr.mxu0 0.0
        %2040 = vmatpush1.msra.mxu0 0.0
        %2041 = vmatprep.subr.mxu0 0.0
        %2042 = vmatpush1.msra.mxu0 0.0
        %2043 = vmatprep.subr.mxu0 0.0
        %2044 = vmatpush1.msra.mxu0 0.0
        %2045 = vmatprep.subr.mxu0 0.0
        %2046 = vmatpush1.msra.mxu0 0.0
        %2047 = vmatprep.subr.mxu0 0.0
        %2048 = vmatpush1.msra.mxu0 0.0
        %2049 = vmatprep.subr.mxu0 0.0
        %2050 = vmatpush1.msra.mxu0 0.0
        %2051 = vmatprep.subr.mxu0 0.0
        %2052 = vmatpush1.msra.mxu0 0.0
        %2053 = vmatprep.subr.mxu0 0.0
        %2054 = vmatpush1.msra.mxu0 0.0
        %2055 = vmatprep.subr.mxu0 0.0
        %2056 = vmatpush1.msra.mxu0 0.0
        %2057 = vmatprep.subr.mxu0 0.0
        %2058 = vmatpush1.msra.mxu0 0.0
        %2059 = vmatprep.subr.mxu0 0.0
        %2060 = vmatpush1.msra.mxu0 0.0
        %2061 = vmatprep.subr.mxu0 0.0
        %2062 = vmatpush1.msra.mxu0 0.0
        %2063 = vmatprep.subr.mxu0 0.0
        %2064 = vmatpush1.msra.mxu0 0.0
        %2065 = vmatprep.subr.mxu0 0.0
        %2066 = vmatpush1.msra.mxu0 0.0
        %2067 = vmatprep.subr.mxu0 0.0
        %2068 = vmatpush1.msra.mxu0 0.0
        %2069 = vmatprep.subr.mxu0 0.0
        %2070 = vmatpush1.msra.mxu0 0.0
        %2071 = vmatprep.subr.mxu0 0.0
        %2072 = vmatpush1.msra.mxu0 0.0
        %2073 = vmatprep.subr.mxu0 0.0
        %2074 = vmatpush1.msra.mxu0 0.0
        %2075 = vmatprep.subr.mxu0 0.0
        %2076 = vmatpush1.msra.mxu0 0.0
        %2077 = vmatprep.subr.mxu0 0.0
        %2078 = vmatpush1.msra.mxu0 0.0
        %2079 = vmatprep.mubr.f32.mxu0 0.0
        %2080 = vmatmul.mubr.f32.gmra.mrb[0].mxu0 %v2010
        %v2081 = vpop.f32.mrb[0].mxu0
        %v2082 = vadd.f32 %v1922, %v2081
        %v2083 = vpop.f32.mrb[0].mxu0
        %v2084 = vadd.f32 %v1924, %v2083
        %2085 = vmatprep.mubr.f32.mxu0 0.0
        %2086 = vmatmul.mubr.f32.gmra.mrb[0].mxu0 %v2013
        %v2087 = vpop.f32.mrb[0].mxu0
        %v2088 = vadd.f32 %v1928, %v2087
        %v2089 = vpop.f32.mrb[0].mxu0
        %v2090 = vadd.f32 %v1930, %v2089
        %2091 = vdwg.mxu0
        %2092 = vmatprep.subr.mxu0 %v1820
        %2093 = vmatpush1.msra.mxu0 %v1819
        %2094 = vmatprep.subr.mxu0 %v1824
        %2095 = vmatpush1.msra.mxu0 %v1823
        %2096 = vmatprep.subr.mxu0 %v1828
        %2097 = vmatpush1.msra.mxu0 %v1827
        %2098 = vmatprep.subr.mxu0 %v1832
        %2099 = vmatpush1.msra.mxu0 %v1831
        %2100 = vmatprep.subr.mxu0 0.0
        %2101 = vmatpush1.msra.mxu0 0.0
        %2102 = vmatprep.subr.mxu0 0.0
        %2103 = vmatpush1.msra.mxu0 0.0
        %2104 = vmatprep.subr.mxu0 0.0
        %2105 = vmatpush1.msra.mxu0 0.0
        %2106 = vmatprep.subr.mxu0 0.0
        %2107 = vmatpush1.msra.mxu0 0.0
        %2108 = vmatprep.subr.mxu0 0.0
        %2109 = vmatpush1.msra.mxu0 0.0
        %2110 = vmatprep.subr.mxu0 0.0
        %2111 = vmatpush1.msra.mxu0 0.0
        %2112 = vmatprep.subr.mxu0 0.0
        %2113 = vmatpush1.msra.mxu0 0.0
        %2114 = vmatprep.subr.mxu0 0.0
        %2115 = vmatpush1.msra.mxu0 0.0
        %2116 = vmatprep.subr.mxu0 0.0
        %2117 = vmatpush1.msra.mxu0 0.0
        %2118 = vmatprep.subr.mxu0 0.0
        %2119 = vmatpush1.msra.mxu0 0.0
        %2120 = vmatprep.subr.mxu0 0.0
        %2121 = vmatpush1.msra.mxu0 0.0
        %2122 = vmatprep.subr.mxu0 0.0
        %2123 = vmatpush1.msra.mxu0 0.0
        %2124 = vmatprep.subr.mxu0 0.0
        %2125 = vmatpush1.msra.mxu0 0.0
        %2126 = vmatprep.subr.mxu0 0.0
        %2127 = vmatpush1.msra.mxu0 0.0
        %2128 = vmatprep.subr.mxu0 0.0
        %2129 = vmatpush1.msra.mxu0 0.0
        %2130 = vmatprep.subr.mxu0 0.0
        %2131 = vmatpush1.msra.mxu0 0.0
        %2132 = vmatprep.subr.mxu0 0.0
        %2133 = vmatpush1.msra.mxu0 0.0
        %2134 = vmatprep.subr.mxu0 0.0
        %2135 = vmatpush1.msra.mxu0 0.0
        %2136 = vmatprep.subr.mxu0 0.0
        %2137 = vmatpush1.msra.mxu0 0.0
        %2138 = vmatprep.subr.mxu0 0.0
        %2139 = vmatpush1.msra.mxu0 0.0
        %2140 = vmatprep.subr.mxu0 0.0
        %2141 = vmatpush1.msra.mxu0 0.0
        %2142 = vmatprep.subr.mxu0 0.0
        %2143 = vmatpush1.msra.mxu0 0.0
        %2144 = vmatprep.subr.mxu0 0.0
        %2145 = vmatpush1.msra.mxu0 0.0
        %2146 = vmatprep.subr.mxu0 0.0
        %2147 = vmatpush1.msra.mxu0 0.0
        %2148 = vmatprep.subr.mxu0 0.0
        %2149 = vmatpush1.msra.mxu0 0.0
        %2150 = vmatprep.subr.mxu0 0.0
        %2151 = vmatpush1.msra.mxu0 0.0
        %2152 = vmatprep.subr.mxu0 0.0
        %2153 = vmatpush1.msra.mxu0 0.0
        %2154 = vmatprep.subr.mxu0 0.0
        %2155 = vmatpush1.msra.mxu0 0.0
        %2156 = vmatprep.mubr.f32.mxu0 0.0
        %2157 = vmatmul.mubr.f32.gmra.mrb[0].mxu0 %v2010
        %v2158 = vpop.f32.mrb[0].mxu0
        %v2159 = vadd.f32 %v1999, %v2158
        %v2160 = vpop.f32.mrb[0].mxu0
        %v2161 = vadd.f32 %v2001, %v2160
        %2162 = vmatprep.mubr.f32.mxu0 0.0
        %2163 = vmatmul.mubr.f32.gmra.mrb[0].mxu0 %v2013
        %v2164 = vpop.f32.mrb[0].mxu0
        %v2165 = vadd.f32 %v2005, %v2164
        %v2166 = vpop.f32.mrb[0].mxu0
        %v2167 = vadd.f32 %v2007, %v2166
        %2168 = vdwg.mxu0
        %v2169 = vld [vmem:[%s1009] sm:$0xff]
        %v2170 = vld [vmem:[%s1009 + $0x8] sm:$0xff]
        %v2171 = vld [vmem:[%s1009 + $0x10] sm:$0xff]
        %v2172 = vld [vmem:[%s1009 + $0x18] sm:$0xff]
        %v2173 = vld [vmem:[%s1009 + $0x20] sm:$0xff]
        %v2174 = vld [vmem:[%s1009 + $0x28] sm:$0xff]
        %v2175 = vld [vmem:[%s1009 + $0x30] sm:$0xff]
        %v2176 = vld [vmem:[%s1009 + $0x38] sm:$0xff]
        %v2177 = vld [vmem:[%s1009 + $0x40] sm:$0xff]
        %v2178 = vld [vmem:[%s1009 + $0x48] sm:$0xff]
        %v2179 = vld [vmem:[%s1009 + $0x50] sm:$0xff]
        %v2180 = vld [vmem:[%s1009 + $0x58] sm:$0xff]
        %v2181 = vld [vmem:[%s1009 + $0x60] sm:$0xff]
        %v2182 = vld [vmem:[%s1009 + $0x68] sm:$0xff]
        %v2183 = vld [vmem:[%s1009 + $0x70] sm:$0xff]
        %v2184 = vld [vmem:[%s1009 + $0x78] sm:$0xff]
        %v2186 = vsel %vm688, %v1809, 0
        %v2189 = vsel %vm688, %v1814, 0
        %2191 = vmatprep.subr.mxu0 %v2170
        %2192 = vmatpush1.msra.mxu0 %v2169
        %2193 = vmatprep.subr.mxu0 %v2174
        %2194 = vmatpush1.msra.mxu0 %v2173
        %2195 = vmatprep.subr.mxu0 %v2178
        %2196 = vmatpush1.msra.mxu0 %v2177
        %2197 = vmatprep.subr.mxu0 %v2182
        %2198 = vmatpush1.msra.mxu0 %v2181
        %2199 = vmatprep.subr.mxu0 0.0
        %2200 = vmatpush1.msra.mxu0 0.0
        %2201 = vmatprep.subr.mxu0 0.0
        %2202 = vmatpush1.msra.mxu0 0.0
        %2203 = vmatprep.subr.mxu0 0.0
        %2204 = vmatpush1.msra.mxu0 0.0
        %2205 = vmatprep.subr.mxu0 0.0
        %2206 = vmatpush1.msra.mxu0 0.0
        %2207 = vmatprep.subr.mxu0 0.0
        %2208 = vmatpush1.msra.mxu0 0.0
        %2209 = vmatprep.subr.mxu0 0.0
        %2210 = vmatpush1.msra.mxu0 0.0
        %2211 = vmatprep.subr.mxu0 0.0
        %2212 = vmatpush1.msra.mxu0 0.0
        %2213 = vmatprep.subr.mxu0 0.0
        %2214 = vmatpush1.msra.mxu0 0.0
        %2215 = vmatprep.subr.mxu0 0.0
        %2216 = vmatpush1.msra.mxu0 0.0
        %2217 = vmatprep.subr.mxu0 0.0
        %2218 = vmatpush1.msra.mxu0 0.0
        %2219 = vmatprep.subr.mxu0 0.0
        %2220 = vmatpush1.msra.mxu0 0.0
        %2221 = vmatprep.subr.mxu0 0.0
        %2222 = vmatpush1.msra.mxu0 0.0
        %2223 = vmatprep.subr.mxu0 0.0
        %2224 = vmatpush1.msra.mxu0 0.0
        %2225 = vmatprep.subr.mxu0 0.0
        %2226 = vmatpush1.msra.mxu0 0.0
        %2227 = vmatprep.subr.mxu0 0.0
        %2228 = vmatpush1.msra.mxu0 0.0
        %2229 = vmatprep.subr.mxu0 0.0
        %2230 = vmatpush1.msra.mxu0 0.0
        %2231 = vmatprep.subr.mxu0 0.0
        %2232 = vmatpush1.msra.mxu0 0.0
        %2233 = vmatprep.subr.mxu0 0.0
        %2234 = vmatpush1.msra.mxu0 0.0
        %2235 = vmatprep.subr.mxu0 0.0
        %2236 = vmatpush1.msra.mxu0 0.0
        %2237 = vmatprep.subr.mxu0 0.0
        %2238 = vmatpush1.msra.mxu0 0.0
        %2239 = vmatprep.subr.mxu0 0.0
        %2240 = vmatpush1.msra.mxu0 0.0
        %2241 = vmatprep.subr.mxu0 0.0
        %2242 = vmatpush1.msra.mxu0 0.0
        %2243 = vmatprep.subr.mxu0 0.0
        %2244 = vmatpush1.msra.mxu0 0.0
        %2245 = vmatprep.subr.mxu0 0.0
        %2246 = vmatpush1.msra.mxu0 0.0
        %2247 = vmatprep.subr.mxu0 0.0
        %2248 = vmatpush1.msra.mxu0 0.0
        %2249 = vmatprep.subr.mxu0 0.0
        %2250 = vmatpush1.msra.mxu0 0.0
        %2251 = vmatprep.subr.mxu0 0.0
        %2252 = vmatpush1.msra.mxu0 0.0
        %2253 = vmatprep.subr.mxu0 0.0
        %2254 = vmatpush1.msra.mxu0 0.0
        %2255 = vmatprep.mubr.f32.mxu0 0.0
        %2256 = vmatmul.mubr.f32.gmra.mrb[0].mxu0 %v2186
        %v2257 = vpop.f32.mrb[0].mxu0
        %v2258 = vadd.f32 0.0, %v2257
        %v2259 = vpop.f32.mrb[0].mxu0
        %v2260 = vadd.f32 0.0, %v2259
        %2261 = vmatprep.mubr.f32.mxu0 0.0
        %2262 = vmatmul.mubr.f32.gmra.mrb[0].mxu0 %v2189
        %v2263 = vpop.f32.mrb[0].mxu0
        %v2264 = vadd.f32 0.0, %v2263
        %v2265 = vpop.f32.mrb[0].mxu0
        %v2266 = vadd.f32 0.0, %v2265
        %2267 = vdwg.mxu0
        %2268 = vmatprep.subr.mxu0 %v2172
        %2269 = vmatpush1.msra.mxu0 %v2171
        %2270 = vmatprep.subr.mxu0 %v2176
        %2271 = vmatpush1.msra.mxu0 %v2175
        %2272 = vmatprep.subr.mxu0 %v2180
        %2273 = vmatpush1.msra.mxu0 %v2179
        %2274 = vmatprep.subr.mxu0 %v2184
        %2275 = vmatpush1.msra.mxu0 %v2183
        %2276 = vmatprep.subr.mxu0 0.0
        %2277 = vmatpush1.msra.mxu0 0.0
        %2278 = vmatprep.subr.mxu0 0.0
        %2279 = vmatpush1.msra.mxu0 0.0
        %2280 = vmatprep.subr.mxu0 0.0
        %2281 = vmatpush1.msra.mxu0 0.0
        %2282 = vmatprep.subr.mxu0 0.0
        %2283 = vmatpush1.msra.mxu0 0.0
        %2284 = vmatprep.subr.mxu0 0.0
        %2285 = vmatpush1.msra.mxu0 0.0
        %2286 = vmatprep.subr.mxu0 0.0
        %2287 = vmatpush1.msra.mxu0 0.0
        %2288 = vmatprep.subr.mxu0 0.0
        %2289 = vmatpush1.msra.mxu0 0.0
        %2290 = vmatprep.subr.mxu0 0.0
        %2291 = vmatpush1.msra.mxu0 0.0
        %2292 = vmatprep.subr.mxu0 0.0
        %2293 = vmatpush1.msra.mxu0 0.0
        %2294 = vmatprep.subr.mxu0 0.0
        %2295 = vmatpush1.msra.mxu0 0.0
        %2296 = vmatprep.subr.mxu0 0.0
        %2297 = vmatpush1.msra.mxu0 0.0
        %2298 = vmatprep.subr.mxu0 0.0
        %2299 = vmatpush1.msra.mxu0 0.0
        %2300 = vmatprep.subr.mxu0 0.0
        %2301 = vmatpush1.msra.mxu0 0.0
        %2302 = vmatprep.subr.mxu0 0.0
        %2303 = vmatpush1.msra.mxu0 0.0
        %2304 = vmatprep.subr.mxu0 0.0
        %2305 = vmatpush1.msra.mxu0 0.0
        %2306 = vmatprep.subr.mxu0 0.0
        %2307 = vmatpush1.msra.mxu0 0.0
        %2308 = vmatprep.subr.mxu0 0.0
        %2309 = vmatpush1.msra.mxu0 0.0
        %2310 = vmatprep.subr.mxu0 0.0
        %2311 = vmatpush1.msra.mxu0 0.0
        %2312 = vmatprep.subr.mxu0 0.0
        %2313 = vmatpush1.msra.mxu0 0.0
        %2314 = vmatprep.subr.mxu0 0.0
        %2315 = vmatpush1.msra.mxu0 0.0
        %2316 = vmatprep.subr.mxu0 0.0
        %2317 = vmatpush1.msra.mxu0 0.0
        %2318 = vmatprep.subr.mxu0 0.0
        %2319 = vmatpush1.msra.mxu0 0.0
        %2320 = vmatprep.subr.mxu0 0.0
        %2321 = vmatpush1.msra.mxu0 0.0
        %2322 = vmatprep.subr.mxu0 0.0
        %2323 = vmatpush1.msra.mxu0 0.0
        %2324 = vmatprep.subr.mxu0 0.0
        %2325 = vmatpush1.msra.mxu0 0.0
        %2326 = vmatprep.subr.mxu0 0.0
        %2327 = vmatpush1.msra.mxu0 0.0
        %2328 = vmatprep.subr.mxu0 0.0
        %2329 = vmatpush1.msra.mxu0 0.0
        %2330 = vmatprep.subr.mxu0 0.0
        %2331 = vmatpush1.msra.mxu0 0.0
        %2332 = vmatprep.mubr.f32.mxu0 0.0
        %2333 = vmatmul.mubr.f32.gmra.mrb[0].mxu0 %v2186
        %v2334 = vpop.f32.mrb[0].mxu0
        %v2335 = vadd.f32 0.0, %v2334
        %v2336 = vpop.f32.mrb[0].mxu0
        %v2337 = vadd.f32 0.0, %v2336
        %2338 = vmatprep.mubr.f32.mxu0 0.0
        %2339 = vmatmul.mubr.f32.gmra.mrb[0].mxu0 %v2189
        %v2340 = vpop.f32.mrb[0].mxu0
        %v2341 = vadd.f32 0.0, %v2340
        %v2342 = vpop.f32.mrb[0].mxu0
        %v2343 = vadd.f32 0.0, %v2342
        %2344 = vdwg.mxu0
        %v2345 = vadd.f32 %v2082, %v2258
        %v2346 = vadd.f32 %v2084, %v2260
        %v2347 = vadd.f32 %v2159, %v2335
        %v2348 = vadd.f32 %v2161, %v2337
        %v2349 = vadd.f32 %v2088, %v2264
        %v2350 = vadd.f32 %v2090, %v2266
        %v2351 = vadd.f32 %v2165, %v2341
        %v2352 = vadd.f32 %v2167, %v2343
        %v2353 = vmul.f32 %v2345, %v539
        %v2354 = vmul.f32 %v2346, %v540
        %v2355 = vmul.f32 %v2347, %v541
        %v2356 = vmul.f32 %v2348, %v542
        %v2357 = vmul.f32 %v2349, %v543
        %v2358 = vmul.f32 %v2350, %v544
        %v2359 = vmul.f32 %v2351, %v545
        %v2360 = vmul.f32 %v2352, %v546
        %2363 = vrot.lane.b32.xlu0 %v2353, 64
        %v2364 = vpop.permute.xlu0 %2363
        %2365 = vrot.lane.b32.xlu0 %v2357, 64
        %v2366 = vpop.permute.xlu0 %2365
        %v2369 = vadd.f32 %v2353, %v2364
        %v2370 = vadd.f32 %v2357, %v2366
        %v2371 = vadd.f32 %v2369, %v2354
        %v2372 = vadd.f32 %v2370, %v2358
        %2375 = vrot.lane.b32.xlu0 %v2354, 64
        %v2376 = vpop.permute.xlu0 %2375
        %2377 = vrot.lane.b32.xlu0 %v2358, 64
        %v2378 = vpop.permute.xlu0 %2377
        %v2381 = vadd.f32 %v2371, %v2376
        %v2382 = vadd.f32 %v2372, %v2378
        %v2383 = vadd.f32 %v2381, %v2355
        %v2384 = vadd.f32 %v2382, %v2359
        %2387 = vrot.lane.b32.xlu0 %v2355, 64
        %v2388 = vpop.permute.xlu0 %2387
        %2389 = vrot.lane.b32.xlu0 %v2359, 64
        %v2390 = vpop.permute.xlu0 %2389
        %v2393 = vadd.f32 %v2383, %v2388
        %v2394 = vadd.f32 %v2384, %v2390
        %v2395 = vadd.f32 %v2393, %v2356
        %v2396 = vadd.f32 %v2394, %v2360
        %2399 = vrot.lane.b32.xlu0 %v2356, 64
        %v2400 = vpop.permute.xlu0 %2399
        %2401 = vrot.lane.b32.xlu0 %v2360, 64
        %v2402 = vpop.permute.xlu0 %2401
        %v2405 = vadd.f32 %v2395, %v2400
        %v2406 = vadd.f32 %v2396, %v2402
        %v2407 = vadd.f32 %v2405, %v1725
        %v2408 = vadd.f32 %v2406, %v1726
        %v2409 = vxor.u32 %v2407, 2147483648
        %v2410 = vxor.u32 %v2408, 2147483648
        %v2411 = vmul.f32 %v2409, 1.442695
        %v2412 = vpow.pop %v2411
        %v2413 = vmul.f32 %v2410, 1.442695
        %v2414 = vpow.pop %v2413
        %v2415 = vadd.f32 %v2412, 1.0
        %v2416 = vadd.f32 %v2414, 1.0
        %v2417 = vrcp.pop %v2415
        %v2418 = vmul.f32 1.0, %v2417
        %v2419 = vrcp.pop %v2416
        %v2420 = vmul.f32 1.0, %v2419
        %v2421 = vmul.f32 %v2418, %v1730
        %v2422 = vmul.f32 %v2420, %v1731
        %2423 = vmatprep.subr.mxu0 0.0
        %2424 = vmatpush1.msra.mxu0 %v2421
        %2425 = vmatprep.subr.mxu0 0.0
        %2426 = vmatpush1.msra.mxu0 %v2422
        %2427 = vmatprep.subr.mxu0 0.0
        %2428 = vmatpush1.msra.mxu0 0.0
        %2429 = vmatprep.subr.mxu0 0.0
        %2430 = vmatpush1.msra.mxu0 0.0
        %2431 = vmatprep.subr.mxu0 0.0
        %2432 = vmatpush1.msra.mxu0 0.0
        %2433 = vmatprep.subr.mxu0 0.0
        %2434 = vmatpush1.msra.mxu0 0.0
        %2435 = vmatprep.subr.mxu0 0.0
        %2436 = vmatpush1.msra.mxu0 0.0
        %2437 = vmatprep.subr.mxu0 0.0
        %2438 = vmatpush1.msra.mxu0 0.0
        %2439 = vmatprep.subr.mxu0 0.0
        %2440 = vmatpush1.msra.mxu0 0.0
        %2441 = vmatprep.subr.mxu0 0.0
        %2442 = vmatpush1.msra.mxu0 0.0
        %2443 = vmatprep.subr.mxu0 0.0
        %2444 = vmatpush1.msra.mxu0 0.0
        %2445 = vmatprep.subr.mxu0 0.0
        %2446 = vmatpush1.msra.mxu0 0.0
        %2447 = vmatprep.subr.mxu0 0.0
        %2448 = vmatpush1.msra.mxu0 0.0
        %2449 = vmatprep.subr.mxu0 0.0
        %2450 = vmatpush1.msra.mxu0 0.0
        %2451 = vmatprep.subr.mxu0 0.0
        %2452 = vmatpush1.msra.mxu0 0.0
        %2453 = vmatprep.subr.mxu0 0.0
        %2454 = vmatpush1.msra.mxu0 0.0
        %2455 = vmatprep.subr.mxu0 0.0
        %2456 = vmatpush1.msra.mxu0 0.0
        %2457 = vmatprep.subr.mxu0 0.0
        %2458 = vmatpush1.msra.mxu0 0.0
        %2459 = vmatprep.subr.mxu0 0.0
        %2460 = vmatpush1.msra.mxu0 0.0
        %2461 = vmatprep.subr.mxu0 0.0
        %2462 = vmatpush1.msra.mxu0 0.0
        %2463 = vmatprep.subr.mxu0 0.0
        %2464 = vmatpush1.msra.mxu0 0.0
        %2465 = vmatprep.subr.mxu0 0.0
        %2466 = vmatpush1.msra.mxu0 0.0
        %2467 = vmatprep.subr.mxu0 0.0
        %2468 = vmatpush1.msra.mxu0 0.0
        %2469 = vmatprep.subr.mxu0 0.0
        %2470 = vmatpush1.msra.mxu0 0.0
        %2471 = vmatprep.subr.mxu0 0.0
        %2472 = vmatpush1.msra.mxu0 0.0
        %2473 = vmatprep.subr.mxu0 0.0
        %2474 = vmatpush1.msra.mxu0 0.0
        %2475 = vmatprep.subr.mxu0 0.0
        %2476 = vmatpush1.msra.mxu0 0.0
        %2477 = vmatprep.subr.mxu0 0.0
        %2478 = vmatpush1.msra.mxu0 0.0
        %2479 = vmatprep.subr.mxu0 0.0
        %2480 = vmatpush1.msra.mxu0 0.0
        %2481 = vmatprep.subr.mxu0 0.0
        %2482 = vmatpush1.msra.mxu0 0.0
        %2483 = vmatprep.subr.mxu0 0.0
        %2484 = vmatpush1.msra.mxu0 0.0
        %2485 = vmatprep.subr.mxu0 0.0
        %2486 = vmatpush1.msra.mxu0 0.0
        %2487 = vmatprep.mubr.f32.mxu0 0.0
        %2488 = vmatmul.mubr.f32.gmra.mrb[0].mxu0 %v559
        %v2489 = vpop.f32.mrb[0].mxu0
        %v2490 = vadd.f32 0.0, %v2489
        %v2491 = vpop.f32.mrb[0].mxu0
        %2492 = vmatprep.mubr.f32.mxu0 0.0
        %2493 = vmatmul.mubr.f32.gmra.mrb[0].mxu0 %v562
        %v2494 = vpop.f32.mrb[0].mxu0
        %v2495 = vadd.f32 0.0, %v2494
        %v2496 = vpop.f32.mrb[0].mxu0
        %2497 = vmatprep.mubr.f32.mxu0 0.0
        %2498 = vmatmul.mubr.f32.gmra.mrb[0].mxu0 %v565
        %v2499 = vpop.f32.mrb[0].mxu0
        %v2500 = vadd.f32 0.0, %v2499
        %v2501 = vpop.f32.mrb[0].mxu0
        %2502 = vmatprep.mubr.f32.mxu0 0.0
        %2503 = vmatmul.mubr.f32.gmra.mrb[0].mxu0 %v568
        %v2504 = vpop.f32.mrb[0].mxu0
        %v2505 = vadd.f32 0.0, %v2504
        %v2506 = vpop.f32.mrb[0].mxu0
        %2507 = vdwg.mxu0
        %v2508 = vld [vmem:[#allocation11] sm:$0xff]
        %v2509 = vld [vmem:[#allocation11 + $0x8] sm:$0xff]
        %v2510 = vld [vmem:[#allocation11 + $0x10] sm:$0xff]
        %v2511 = vld [vmem:[#allocation11 + $0x18] sm:$0xff]
        %v2512 = vld [vmem:[#allocation11 + $0x20] sm:$0xff]
        %v2513 = vld [vmem:[#allocation11 + $0x28] sm:$0xff]
        %v2514 = vld [vmem:[#allocation11 + $0x30] sm:$0xff]
        %v2515 = vld [vmem:[#allocation11 + $0x38] sm:$0xff]
        %v2516 = vld [vmem:[%s1357] sm:$0xff]
        %v2517 = vld [vmem:[%s1357 + $0x8] sm:$0xff]
        %v2518 = vld [vmem:[%s1357 + $0x10] sm:$0xff]
        %v2519 = vld [vmem:[%s1357 + $0x18] sm:$0xff]
        %v2520 = vld [vmem:[%s1357 + $0x20] sm:$0xff]
        %v2521 = vld [vmem:[%s1357 + $0x28] sm:$0xff]
        %v2522 = vld [vmem:[%s1357 + $0x30] sm:$0xff]
        %v2523 = vld [vmem:[%s1357 + $0x38] sm:$0xff]
        %v2525 = vsel %vm688, %v2490, 0
        %v2528 = vsel %vm688, %v2495, 0
        %2530 = vmatprep.subr.mxu0 %v2517
        %2531 = vmatpush1.msra.mxu0 %v2516
        %2532 = vmatprep.subr.mxu0 %v2519
        %2533 = vmatpush1.msra.mxu0 %v2518
        %2534 = vmatprep.subr.mxu0 %v2521
        %2535 = vmatpush1.msra.mxu0 %v2520
        %2536 = vmatprep.subr.mxu0 %v2523
        %2537 = vmatpush1.msra.mxu0 %v2522
        %2538 = vmatprep.subr.mxu0 0.0
        %2539 = vmatpush1.msra.mxu0 0.0
        %2540 = vmatprep.subr.mxu0 0.0
        %2541 = vmatpush1.msra.mxu0 0.0
        %2542 = vmatprep.subr.mxu0 0.0
        %2543 = vmatpush1.msra.mxu0 0.0
        %2544 = vmatprep.subr.mxu0 0.0
        %2545 = vmatpush1.msra.mxu0 0.0
        %2546 = vmatprep.subr.mxu0 0.0
        %2547 = vmatpush1.msra.mxu0 0.0
        %2548 = vmatprep.subr.mxu0 0.0
        %2549 = vmatpush1.msra.mxu0 0.0
        %2550 = vmatprep.subr.mxu0 0.0
        %2551 = vmatpush1.msra.mxu0 0.0
        %2552 = vmatprep.subr.mxu0 0.0
        %2553 = vmatpush1.msra.mxu0 0.0
        %2554 = vmatprep.subr.mxu0 0.0
        %2555 = vmatpush1.msra.mxu0 0.0
        %2556 = vmatprep.subr.mxu0 0.0
        %2557 = vmatpush1.msra.mxu0 0.0
        %2558 = vmatprep.subr.mxu0 0.0
        %2559 = vmatpush1.msra.mxu0 0.0
        %2560 = vmatprep.subr.mxu0 0.0
        %2561 = vmatpush1.msra.mxu0 0.0
        %2562 = vmatprep.subr.mxu0 0.0
        %2563 = vmatpush1.msra.mxu0 0.0
        %2564 = vmatprep.subr.mxu0 0.0
        %2565 = vmatpush1.msra.mxu0 0.0
        %2566 = vmatprep.subr.mxu0 0.0
        %2567 = vmatpush1.msra.mxu0 0.0
        %2568 = vmatprep.subr.mxu0 0.0
        %2569 = vmatpush1.msra.mxu0 0.0
        %2570 = vmatprep.subr.mxu0 0.0
        %2571 = vmatpush1.msra.mxu0 0.0
        %2572 = vmatprep.subr.mxu0 0.0
        %2573 = vmatpush1.msra.mxu0 0.0
        %2574 = vmatprep.subr.mxu0 0.0
        %2575 = vmatpush1.msra.mxu0 0.0
        %2576 = vmatprep.subr.mxu0 0.0
        %2577 = vmatpush1.msra.mxu0 0.0
        %2578 = vmatprep.subr.mxu0 0.0
        %2579 = vmatpush1.msra.mxu0 0.0
        %2580 = vmatprep.subr.mxu0 0.0
        %2581 = vmatpush1.msra.mxu0 0.0
        %2582 = vmatprep.subr.mxu0 0.0
        %2583 = vmatpush1.msra.mxu0 0.0
        %2584 = vmatprep.subr.mxu0 0.0
        %2585 = vmatpush1.msra.mxu0 0.0
        %2586 = vmatprep.subr.mxu0 0.0
        %2587 = vmatpush1.msra.mxu0 0.0
        %2588 = vmatprep.subr.mxu0 0.0
        %2589 = vmatpush1.msra.mxu0 0.0
        %2590 = vmatprep.subr.mxu0 0.0
        %2591 = vmatpush1.msra.mxu0 0.0
        %2592 = vmatprep.subr.mxu0 0.0
        %2593 = vmatpush1.msra.mxu0 0.0
        %2594 = vmatprep.mubr.f32.mxu0 0.0
        %2595 = vmatmul.mubr.f32.gmra.mrb[0].mxu0 %v2525
        %v2596 = vpop.f32.mrb[0].mxu0
        %v2597 = vadd.f32 0.0, %v2596
        %v2598 = vpop.f32.mrb[0].mxu0
        %v2599 = vadd.f32 0.0, %v2598
        %2600 = vmatprep.mubr.f32.mxu0 0.0
        %2601 = vmatmul.mubr.f32.gmra.mrb[0].mxu0 %v2528
        %v2602 = vpop.f32.mrb[0].mxu0
        %v2603 = vadd.f32 0.0, %v2602
        %v2604 = vpop.f32.mrb[0].mxu0
        %v2605 = vadd.f32 0.0, %v2604
        %2606 = vdwg.mxu0
        %v2608 = vsel %vm688, %v2421, 0
        %v2611 = vsel %vm688, %v2422, 0
        %2613 = vmatprep.subr.mxu0 %v2509
        %2614 = vmatpush1.msra.mxu0 %v2508
        %2615 = vmatprep.subr.mxu0 %v2511
        %2616 = vmatpush1.msra.mxu0 %v2510
        %2617 = vmatprep.subr.mxu0 %v2513
        %2618 = vmatpush1.msra.mxu0 %v2512
        %2619 = vmatprep.subr.mxu0 %v2515
        %2620 = vmatpush1.msra.mxu0 %v2514
        %2621 = vmatprep.subr.mxu0 0.0
        %2622 = vmatpush1.msra.mxu0 0.0
        %2623 = vmatprep.subr.mxu0 0.0
        %2624 = vmatpush1.msra.mxu0 0.0
        %2625 = vmatprep.subr.mxu0 0.0
        %2626 = vmatpush1.msra.mxu0 0.0
        %2627 = vmatprep.subr.mxu0 0.0
        %2628 = vmatpush1.msra.mxu0 0.0
        %2629 = vmatprep.subr.mxu0 0.0
        %2630 = vmatpush1.msra.mxu0 0.0
        %2631 = vmatprep.subr.mxu0 0.0
        %2632 = vmatpush1.msra.mxu0 0.0
        %2633 = vmatprep.subr.mxu0 0.0
        %2634 = vmatpush1.msra.mxu0 0.0
        %2635 = vmatprep.subr.mxu0 0.0
        %2636 = vmatpush1.msra.mxu0 0.0
        %2637 = vmatprep.subr.mxu0 0.0
        %2638 = vmatpush1.msra.mxu0 0.0
        %2639 = vmatprep.subr.mxu0 0.0
        %2640 = vmatpush1.msra.mxu0 0.0
        %2641 = vmatprep.subr.mxu0 0.0
        %2642 = vmatpush1.msra.mxu0 0.0
        %2643 = vmatprep.subr.mxu0 0.0
        %2644 = vmatpush1.msra.mxu0 0.0
        %2645 = vmatprep.subr.mxu0 0.0
        %2646 = vmatpush1.msra.mxu0 0.0
        %2647 = vmatprep.subr.mxu0 0.0
        %2648 = vmatpush1.msra.mxu0 0.0
        %2649 = vmatprep.subr.mxu0 0.0
        %2650 = vmatpush1.msra.mxu0 0.0
        %2651 = vmatprep.subr.mxu0 0.0
        %2652 = vmatpush1.msra.mxu0 0.0
        %2653 = vmatprep.subr.mxu0 0.0
        %2654 = vmatpush1.msra.mxu0 0.0
        %2655 = vmatprep.subr.mxu0 0.0
        %2656 = vmatpush1.msra.mxu0 0.0
        %2657 = vmatprep.subr.mxu0 0.0
        %2658 = vmatpush1.msra.mxu0 0.0
        %2659 = vmatprep.subr.mxu0 0.0
        %2660 = vmatpush1.msra.mxu0 0.0
        %2661 = vmatprep.subr.mxu0 0.0
        %2662 = vmatpush1.msra.mxu0 0.0
        %2663 = vmatprep.subr.mxu0 0.0
        %2664 = vmatpush1.msra.mxu0 0.0
        %2665 = vmatprep.subr.mxu0 0.0
        %2666 = vmatpush1.msra.mxu0 0.0
        %2667 = vmatprep.subr.mxu0 0.0
        %2668 = vmatpush1.msra.mxu0 0.0
        %2669 = vmatprep.subr.mxu0 0.0
        %2670 = vmatpush1.msra.mxu0 0.0
        %2671 = vmatprep.subr.mxu0 0.0
        %2672 = vmatpush1.msra.mxu0 0.0
        %2673 = vmatprep.subr.mxu0 0.0
        %2674 = vmatpush1.msra.mxu0 0.0
        %2675 = vmatprep.subr.mxu0 0.0
        %2676 = vmatpush1.msra.mxu0 0.0
        %2677 = vmatprep.mubr.f32.mxu0 0.0
        %2678 = vmatmul.mubr.f32.gmra.mrb[0].mxu0 %v2608
        %v2679 = vpop.f32.mrb[0].mxu0
        %v2680 = vadd.f32 %v2597, %v2679
        %v2681 = vpop.f32.mrb[0].mxu0
        %v2682 = vadd.f32 %v2599, %v2681
        %2683 = vmatprep.mubr.f32.mxu0 0.0
        %2684 = vmatmul.mubr.f32.gmra.mrb[0].mxu0 %v2611
        %v2685 = vpop.f32.mrb[0].mxu0
        %v2686 = vadd.f32 %v2603, %v2685
        %v2687 = vpop.f32.mrb[0].mxu0
        %v2688 = vadd.f32 %v2605, %v2687
        %2689 = vdwg.mxu0
        %v2690 = vld [vmem:[%s1532] sm:$0xff]
        %v2691 = vld [vmem:[%s1532 + $0x8] sm:$0xff]
        %v2692 = vld [vmem:[%s1532 + $0x10] sm:$0xff]
        %v2693 = vld [vmem:[%s1532 + $0x18] sm:$0xff]
        %v2694 = vld [vmem:[%s1532 + $0x20] sm:$0xff]
        %v2695 = vld [vmem:[%s1532 + $0x28] sm:$0xff]
        %v2696 = vld [vmem:[%s1532 + $0x30] sm:$0xff]
        %v2697 = vld [vmem:[%s1532 + $0x38] sm:$0xff]
        %v2699 = vsel %vm688, %v2500, 0
        %v2702 = vsel %vm688, %v2505, 0
        %2704 = vmatprep.subr.mxu0 %v2691
        %2705 = vmatpush1.msra.mxu0 %v2690
        %2706 = vmatprep.subr.mxu0 %v2693
        %2707 = vmatpush1.msra.mxu0 %v2692
        %2708 = vmatprep.subr.mxu0 %v2695
        %2709 = vmatpush1.msra.mxu0 %v2694
        %2710 = vmatprep.subr.mxu0 %v2697
        %2711 = vmatpush1.msra.mxu0 %v2696
        %2712 = vmatprep.subr.mxu0 0.0
        %2713 = vmatpush1.msra.mxu0 0.0
        %2714 = vmatprep.subr.mxu0 0.0
        %2715 = vmatpush1.msra.mxu0 0.0
        %2716 = vmatprep.subr.mxu0 0.0
        %2717 = vmatpush1.msra.mxu0 0.0
        %2718 = vmatprep.subr.mxu0 0.0
        %2719 = vmatpush1.msra.mxu0 0.0
        %2720 = vmatprep.subr.mxu0 0.0
        %2721 = vmatpush1.msra.mxu0 0.0
        %2722 = vmatprep.subr.mxu0 0.0
        %2723 = vmatpush1.msra.mxu0 0.0
        %2724 = vmatprep.subr.mxu0 0.0
        %2725 = vmatpush1.msra.mxu0 0.0
        %2726 = vmatprep.subr.mxu0 0.0
        %2727 = vmatpush1.msra.mxu0 0.0
        %2728 = vmatprep.subr.mxu0 0.0
        %2729 = vmatpush1.msra.mxu0 0.0
        %2730 = vmatprep.subr.mxu0 0.0
        %2731 = vmatpush1.msra.mxu0 0.0
        %2732 = vmatprep.subr.mxu0 0.0
        %2733 = vmatpush1.msra.mxu0 0.0
        %2734 = vmatprep.subr.mxu0 0.0
        %2735 = vmatpush1.msra.mxu0 0.0
        %2736 = vmatprep.subr.mxu0 0.0
        %2737 = vmatpush1.msra.mxu0 0.0
        %2738 = vmatprep.subr.mxu0 0.0
        %2739 = vmatpush1.msra.mxu0 0.0
        %2740 = vmatprep.subr.mxu0 0.0
        %2741 = vmatpush1.msra.mxu0 0.0
        %2742 = vmatprep.subr.mxu0 0.0
        %2743 = vmatpush1.msra.mxu0 0.0
        %2744 = vmatprep.subr.mxu0 0.0
        %2745 = vmatpush1.msra.mxu0 0.0
        %2746 = vmatprep.subr.mxu0 0.0
        %2747 = vmatpush1.msra.mxu0 0.0
        %2748 = vmatprep.subr.mxu0 0.0
        %2749 = vmatpush1.msra.mxu0 0.0
        %2750 = vmatprep.subr.mxu0 0.0
        %2751 = vmatpush1.msra.mxu0 0.0
        %2752 = vmatprep.subr.mxu0 0.0
        %2753 = vmatpush1.msra.mxu0 0.0
        %2754 = vmatprep.subr.mxu0 0.0
        %2755 = vmatpush1.msra.mxu0 0.0
        %2756 = vmatprep.subr.mxu0 0.0
        %2757 = vmatpush1.msra.mxu0 0.0
        %2758 = vmatprep.subr.mxu0 0.0
        %2759 = vmatpush1.msra.mxu0 0.0
        %2760 = vmatprep.subr.mxu0 0.0
        %2761 = vmatpush1.msra.mxu0 0.0
        %2762 = vmatprep.subr.mxu0 0.0
        %2763 = vmatpush1.msra.mxu0 0.0
        %2764 = vmatprep.subr.mxu0 0.0
        %2765 = vmatpush1.msra.mxu0 0.0
        %2766 = vmatprep.subr.mxu0 0.0
        %2767 = vmatpush1.msra.mxu0 0.0
        %2768 = vmatprep.mubr.f32.mxu0 0.0
        %2769 = vmatmul.mubr.f32.gmra.mrb[0].mxu0 %v2699
        %v2770 = vpop.f32.mrb[0].mxu0
        %v2771 = vadd.f32 0.0, %v2770
        %v2772 = vpop.f32.mrb[0].mxu0
        %v2773 = vadd.f32 0.0, %v2772
        %2774 = vmatprep.mubr.f32.mxu0 0.0
        %2775 = vmatmul.mubr.f32.gmra.mrb[0].mxu0 %v2702
        %v2776 = vpop.f32.mrb[0].mxu0
        %v2777 = vadd.f32 0.0, %v2776
        %v2778 = vpop.f32.mrb[0].mxu0
        %v2779 = vadd.f32 0.0, %v2778
        %2780 = vdwg.mxu0
        %v2781 = vadd.f32 %v2680, %v2771
        %v2782 = vadd.f32 %v2682, %v2773
        %v2783 = vadd.f32 %v2686, %v2777
        %v2784 = vadd.f32 %v2688, %v2779
        %v2785 = vmul.f32 %v2781, %v547
        %v2786 = vmul.f32 %v2782, %v548
        %v2787 = vmul.f32 %v2783, %v549
        %v2788 = vmul.f32 %v2784, %v550
        %2791 = vrot.lane.b32.xlu0 %v2785, 96
        %v2792 = vpop.permute.xlu0 %2791
        %2793 = vrot.lane.b32.xlu0 %v2787, 96
        %v2794 = vpop.permute.xlu0 %2793
        %v2797 = vadd.f32 %v2785, %v2792
        %v2798 = vadd.f32 %v2787, %v2794
        %2799 = vrot.lane.b32.xlu0 %v2785, 64
        %v2800 = vpop.permute.xlu0 %2799
        %2801 = vrot.lane.b32.xlu0 %v2787, 64
        %v2802 = vpop.permute.xlu0 %2801
        %v2805 = vadd.f32 %v2797, %v2800
        %v2806 = vadd.f32 %v2798, %v2802
        %2807 = vrot.lane.b32.xlu0 %v2785, 32
        %v2808 = vpop.permute.xlu0 %2807
        %2809 = vrot.lane.b32.xlu0 %v2787, 32
        %v2810 = vpop.permute.xlu0 %2809
        %v2813 = vadd.f32 %v2805, %v2808
        %v2814 = vadd.f32 %v2806, %v2810
        %v2815 = vadd.f32 %v2813, %v2786
        %v2816 = vadd.f32 %v2814, %v2788
        %2819 = vrot.lane.b32.xlu0 %v2786, 96
        %v2820 = vpop.permute.xlu0 %2819
        %2821 = vrot.lane.b32.xlu0 %v2788, 96
        %v2822 = vpop.permute.xlu0 %2821
        %v2825 = vadd.f32 %v2815, %v2820
        %v2826 = vadd.f32 %v2816, %v2822
        %2827 = vrot.lane.b32.xlu0 %v2786, 64
        %v2828 = vpop.permute.xlu0 %2827
        %2829 = vrot.lane.b32.xlu0 %v2788, 64
        %v2830 = vpop.permute.xlu0 %2829
        %v2833 = vadd.f32 %v2825, %v2828
        %v2834 = vadd.f32 %v2826, %v2830
        %2835 = vrot.lane.b32.xlu0 %v2786, 32
        %v2836 = vpop.permute.xlu0 %2835
        %2837 = vrot.lane.b32.xlu0 %v2788, 32
        %v2838 = vpop.permute.xlu0 %2837
        %v2841 = vadd.f32 %v2833, %v2836
        %v2842 = vadd.f32 %v2834, %v2838
        %v2843 = vadd.f32 %v2841, %v1728
        %v2844 = vadd.f32 %v2842, %v1729
        %v2845 = vtanh.pop %v2843
        %v2846 = vtanh.pop %v2844
        %2847 = vrot.lane.b32.xlu0 %v1730, 32
        %v2848 = vpop.permute.xlu0 %2847
        %2849 = vrot.lane.b32.xlu0 %v1731, 32
        %v2850 = vpop.permute.xlu0 %2849
        %v2853 = vmul.f32 %v2418, %v2848
        %v2854 = vmul.f32 %v2420, %v2850
        %v2855 = vsub.f32 1.0, %v2418
        %v2856 = vsub.f32 1.0, %v2420
        %2859 = vrot.lane.b32.xlu0 %v2845, 32
        %v2860 = vpop.permute.xlu0 %2859
        %2861 = vrot.lane.b32.xlu0 %v2846, 32
        %v2862 = vpop.permute.xlu0 %2861
        %v2865 = vmul.f32 %v2855, %v2860
        %v2866 = vmul.f32 %v2856, %v2862
        %v2867 = vadd.f32 %v2853, %v2865
        %v2868 = vadd.f32 %v2854, %v2866
        %2871 = vrot.lane.b32.xlu0 %v2867, 96
        %v2872 = vpop.permute.xlu0 %2871
        %2873 = vrot.lane.b32.xlu0 %v2868, 96
        %v2874 = vpop.permute.xlu0 %2873
        %2877 = vst.msk [vmem:[#allocation2] sm:$0xff] %vm688, %v2872
        %2878 = vst.msk [vmem:[#allocation2 + $0x8] sm:$0xff] %vm688, %v2874
        %s2879 = scalar_lea.vmem %s518, 16 [#allocation14]
        %2880 = vst.msk [vmem:[%s2879] sm:$0xff] %vm688, %v2872
        %2881 = vst.msk [vmem:[%s2879 + $0x8] sm:$0xff] %vm688, %v2874
        %s2882 = scalar_lea.vmem %s446, 32 [#allocation3]
        %v2883 = vld [vmem:[%s2882] sm:$0xff]
        %v2884 = vld [vmem:[%s2882 + $0x8] sm:$0xff]
        %s2885 = scalar_lea.vmem %s455, 32 [#allocation6]
        %v2886 = vld [vmem:[%s2885] sm:$0xff]
        %v2887 = vld [vmem:[%s2885 + $0x8] sm:$0xff]
        %v2888 = vld [vmem:[#allocation2] sm:$0xff]
        %v2889 = vld [vmem:[#allocation2 + $0x8] sm:$0xff]
        %2890 = vmatprep.subr.mxu0 0.0
        %2891 = vmatpush1.msra.mxu0 %v2888
        %2892 = vmatprep.subr.mxu0 0.0
        %2893 = vmatpush1.msra.mxu0 %v2889
        %2894 = vmatprep.subr.mxu0 0.0
        %2895 = vmatpush1.msra.mxu0 0.0
        %2896 = vmatprep.subr.mxu0 0.0
        %2897 = vmatpush1.msra.mxu0 0.0
        %2898 = vmatprep.subr.mxu0 0.0
        %2899 = vmatpush1.msra.mxu0 0.0
        %2900 = vmatprep.subr.mxu0 0.0
        %2901 = vmatpush1.msra.mxu0 0.0
        %2902 = vmatprep.subr.mxu0 0.0
        %2903 = vmatpush1.msra.mxu0 0.0
        %2904 = vmatprep.subr.mxu0 0.0
        %2905 = vmatpush1.msra.mxu0 0.0
        %2906 = vmatprep.subr.mxu0 0.0
        %2907 = vmatpush1.msra.mxu0 0.0
        %2908 = vmatprep.subr.mxu0 0.0
        %2909 = vmatpush1.msra.mxu0 0.0
        %2910 = vmatprep.subr.mxu0 0.0
        %2911 = vmatpush1.msra.mxu0 0.0
        %2912 = vmatprep.subr.mxu0 0.0
        %2913 = vmatpush1.msra.mxu0 0.0
        %2914 = vmatprep.subr.mxu0 0.0
        %2915 = vmatpush1.msra.mxu0 0.0
        %2916 = vmatprep.subr.mxu0 0.0
        %2917 = vmatpush1.msra.mxu0 0.0
        %2918 = vmatprep.subr.mxu0 0.0
        %2919 = vmatpush1.msra.mxu0 0.0
        %2920 = vmatprep.subr.mxu0 0.0
        %2921 = vmatpush1.msra.mxu0 0.0
        %2922 = vmatprep.subr.mxu0 0.0
        %2923 = vmatpush1.msra.mxu0 0.0
        %2924 = vmatprep.subr.mxu0 0.0
        %2925 = vmatpush1.msra.mxu0 0.0
        %2926 = vmatprep.subr.mxu0 0.0
        %2927 = vmatpush1.msra.mxu0 0.0
        %2928 = vmatprep.subr.mxu0 0.0
        %2929 = vmatpush1.msra.mxu0 0.0
        %2930 = vmatprep.subr.mxu0 0.0
        %2931 = vmatpush1.msra.mxu0 0.0
        %2932 = vmatprep.subr.mxu0 0.0
        %2933 = vmatpush1.msra.mxu0 0.0
        %2934 = vmatprep.subr.mxu0 0.0
        %2935 = vmatpush1.msra.mxu0 0.0
        %2936 = vmatprep.subr.mxu0 0.0
        %2937 = vmatpush1.msra.mxu0 0.0
        %2938 = vmatprep.subr.mxu0 0.0
        %2939 = vmatpush1.msra.mxu0 0.0
        %2940 = vmatprep.subr.mxu0 0.0
        %2941 = vmatpush1.msra.mxu0 0.0
        %2942 = vmatprep.subr.mxu0 0.0
        %2943 = vmatpush1.msra.mxu0 0.0
        %2944 = vmatprep.subr.mxu0 0.0
        %2945 = vmatpush1.msra.mxu0 0.0
        %2946 = vmatprep.subr.mxu0 0.0
        %2947 = vmatpush1.msra.mxu0 0.0
        %2948 = vmatprep.subr.mxu0 0.0
        %2949 = vmatpush1.msra.mxu0 0.0
        %2950 = vmatprep.subr.mxu0 0.0
        %2951 = vmatpush1.msra.mxu0 0.0
        %2952 = vmatprep.subr.mxu0 0.0
        %2953 = vmatpush1.msra.mxu0 0.0
        %2954 = vmatprep.mubr.f32.mxu0 0.0
        %2955 = vmatmul.mubr.f32.gmra.mrb[0].mxu0 %v559
        %v2956 = vpop.f32.mrb[0].mxu0
        %v2957 = vadd.f32 0.0, %v2956
        %v2958 = vpop.f32.mrb[0].mxu0
        %2959 = vmatprep.mubr.f32.mxu0 0.0
        %2960 = vmatmul.mubr.f32.gmra.mrb[0].mxu0 %v562
        %v2961 = vpop.f32.mrb[0].mxu0
        %v2962 = vadd.f32 0.0, %v2961
        %v2963 = vpop.f32.mrb[0].mxu0
        %2964 = vmatprep.mubr.f32.mxu0 0.0
        %2965 = vmatmul.mubr.f32.gmra.mrb[0].mxu0 %v565
        %v2966 = vpop.f32.mrb[0].mxu0
        %v2967 = vadd.f32 0.0, %v2966
        %v2968 = vpop.f32.mrb[0].mxu0
        %2969 = vmatprep.mubr.f32.mxu0 0.0
        %2970 = vmatmul.mubr.f32.gmra.mrb[0].mxu0 %v568
        %v2971 = vpop.f32.mrb[0].mxu0
        %v2972 = vadd.f32 0.0, %v2971
        %v2973 = vpop.f32.mrb[0].mxu0
        %2974 = vdwg.mxu0
        %v2975 = vld [vmem:[#allocation9] sm:$0xff]
        %v2976 = vld [vmem:[#allocation9 + $0x8] sm:$0xff]
        %v2977 = vld [vmem:[#allocation9 + $0x10] sm:$0xff]
        %v2978 = vld [vmem:[#allocation9 + $0x18] sm:$0xff]
        %v2979 = vld [vmem:[#allocation9 + $0x20] sm:$0xff]
        %v2980 = vld [vmem:[#allocation9 + $0x28] sm:$0xff]
        %v2981 = vld [vmem:[#allocation9 + $0x30] sm:$0xff]
        %v2982 = vld [vmem:[#allocation9 + $0x38] sm:$0xff]
        %v2983 = vld [vmem:[#allocation9 + $0x40] sm:$0xff]
        %v2984 = vld [vmem:[#allocation9 + $0x48] sm:$0xff]
        %v2985 = vld [vmem:[#allocation9 + $0x50] sm:$0xff]
        %v2986 = vld [vmem:[#allocation9 + $0x58] sm:$0xff]
        %v2987 = vld [vmem:[#allocation9 + $0x60] sm:$0xff]
        %v2988 = vld [vmem:[#allocation9 + $0x68] sm:$0xff]
        %v2989 = vld [vmem:[#allocation9 + $0x70] sm:$0xff]
        %v2990 = vld [vmem:[#allocation9 + $0x78] sm:$0xff]
        %v2991 = vld [vmem:[%s671] sm:$0xff]
        %v2992 = vld [vmem:[%s671 + $0x8] sm:$0xff]
        %v2993 = vld [vmem:[%s671 + $0x10] sm:$0xff]
        %v2994 = vld [vmem:[%s671 + $0x18] sm:$0xff]
        %v2995 = vld [vmem:[%s671 + $0x20] sm:$0xff]
        %v2996 = vld [vmem:[%s671 + $0x28] sm:$0xff]
        %v2997 = vld [vmem:[%s671 + $0x30] sm:$0xff]
        %v2998 = vld [vmem:[%s671 + $0x38] sm:$0xff]
        %v2999 = vld [vmem:[%s671 + $0x40] sm:$0xff]
        %v3000 = vld [vmem:[%s671 + $0x48] sm:$0xff]
        %v3001 = vld [vmem:[%s671 + $0x50] sm:$0xff]
        %v3002 = vld [vmem:[%s671 + $0x58] sm:$0xff]
        %v3003 = vld [vmem:[%s671 + $0x60] sm:$0xff]
        %v3004 = vld [vmem:[%s671 + $0x68] sm:$0xff]
        %v3005 = vld [vmem:[%s671 + $0x70] sm:$0xff]
        %v3006 = vld [vmem:[%s671 + $0x78] sm:$0xff]
        %v3008 = vsel %vm688, %v2957, 0
        %v3011 = vsel %vm688, %v2962, 0
        %3013 = vmatprep.subr.mxu0 %v2992
        %3014 = vmatpush1.msra.mxu0 %v2991
        %3015 = vmatprep.subr.mxu0 %v2996
        %3016 = vmatpush1.msra.mxu0 %v2995
        %3017 = vmatprep.subr.mxu0 %v3000
        %3018 = vmatpush1.msra.mxu0 %v2999
        %3019 = vmatprep.subr.mxu0 %v3004
        %3020 = vmatpush1.msra.mxu0 %v3003
        %3021 = vmatprep.subr.mxu0 0.0
        %3022 = vmatpush1.msra.mxu0 0.0
        %3023 = vmatprep.subr.mxu0 0.0
        %3024 = vmatpush1.msra.mxu0 0.0
        %3025 = vmatprep.subr.mxu0 0.0
        %3026 = vmatpush1.msra.mxu0 0.0
        %3027 = vmatprep.subr.mxu0 0.0
        %3028 = vmatpush1.msra.mxu0 0.0
        %3029 = vmatprep.subr.mxu0 0.0
        %3030 = vmatpush1.msra.mxu0 0.0
        %3031 = vmatprep.subr.mxu0 0.0
        %3032 = vmatpush1.msra.mxu0 0.0
        %3033 = vmatprep.subr.mxu0 0.0
        %3034 = vmatpush1.msra.mxu0 0.0
        %3035 = vmatprep.subr.mxu0 0.0
        %3036 = vmatpush1.msra.mxu0 0.0
        %3037 = vmatprep.subr.mxu0 0.0
        %3038 = vmatpush1.msra.mxu0 0.0
        %3039 = vmatprep.subr.mxu0 0.0
        %3040 = vmatpush1.msra.mxu0 0.0
        %3041 = vmatprep.subr.mxu0 0.0
        %3042 = vmatpush1.msra.mxu0 0.0
        %3043 = vmatprep.subr.mxu0 0.0
        %3044 = vmatpush1.msra.mxu0 0.0
        %3045 = vmatprep.subr.mxu0 0.0
        %3046 = vmatpush1.msra.mxu0 0.0
        %3047 = vmatprep.subr.mxu0 0.0
        %3048 = vmatpush1.msra.mxu0 0.0
        %3049 = vmatprep.subr.mxu0 0.0
        %3050 = vmatpush1.msra.mxu0 0.0
        %3051 = vmatprep.subr.mxu0 0.0
        %3052 = vmatpush1.msra.mxu0 0.0
        %3053 = vmatprep.subr.mxu0 0.0
        %3054 = vmatpush1.msra.mxu0 0.0
        %3055 = vmatprep.subr.mxu0 0.0
        %3056 = vmatpush1.msra.mxu0 0.0
        %3057 = vmatprep.subr.mxu0 0.0
        %3058 = vmatpush1.msra.mxu0 0.0
        %3059 = vmatprep.subr.mxu0 0.0
        %3060 = vmatpush1.msra.mxu0 0.0
        %3061 = vmatprep.subr.mxu0 0.0
        %3062 = vmatpush1.msra.mxu0 0.0
        %3063 = vmatprep.subr.mxu0 0.0
        %3064 = vmatpush1.msra.mxu0 0.0
        %3065 = vmatprep.subr.mxu0 0.0
        %3066 = vmatpush1.msra.mxu0 0.0
        %3067 = vmatprep.subr.mxu0 0.0
        %3068 = vmatpush1.msra.mxu0 0.0
        %3069 = vmatprep.subr.mxu0 0.0
        %3070 = vmatpush1.msra.mxu0 0.0
        %3071 = vmatprep.subr.mxu0 0.0
        %3072 = vmatpush1.msra.mxu0 0.0
        %3073 = vmatprep.subr.mxu0 0.0
        %3074 = vmatpush1.msra.mxu0 0.0
        %3075 = vmatprep.subr.mxu0 0.0
        %3076 = vmatpush1.msra.mxu0 0.0
        %3077 = vmatprep.mubr.f32.mxu0 0.0
        %3078 = vmatmul.mubr.f32.gmra.mrb[0].mxu0 %v3008
        %v3079 = vpop.f32.mrb[0].mxu0
        %v3080 = vadd.f32 0.0, %v3079
        %v3081 = vpop.f32.mrb[0].mxu0
        %v3082 = vadd.f32 0.0, %v3081
        %3083 = vmatprep.mubr.f32.mxu0 0.0
        %3084 = vmatmul.mubr.f32.gmra.mrb[0].mxu0 %v3011
        %v3085 = vpop.f32.mrb[0].mxu0
        %v3086 = vadd.f32 0.0, %v3085
        %v3087 = vpop.f32.mrb[0].mxu0
        %v3088 = vadd.f32 0.0, %v3087
        %3089 = vdwg.mxu0
        %3090 = vmatprep.subr.mxu0 %v2994
        %3091 = vmatpush1.msra.mxu0 %v2993
        %3092 = vmatprep.subr.mxu0 %v2998
        %3093 = vmatpush1.msra.mxu0 %v2997
        %3094 = vmatprep.subr.mxu0 %v3002
        %3095 = vmatpush1.msra.mxu0 %v3001
        %3096 = vmatprep.subr.mxu0 %v3006
        %3097 = vmatpush1.msra.mxu0 %v3005
        %3098 = vmatprep.subr.mxu0 0.0
        %3099 = vmatpush1.msra.mxu0 0.0
        %3100 = vmatprep.subr.mxu0 0.0
        %3101 = vmatpush1.msra.mxu0 0.0
        %3102 = vmatprep.subr.mxu0 0.0
        %3103 = vmatpush1.msra.mxu0 0.0
        %3104 = vmatprep.subr.mxu0 0.0
        %3105 = vmatpush1.msra.mxu0 0.0
        %3106 = vmatprep.subr.mxu0 0.0
        %3107 = vmatpush1.msra.mxu0 0.0
        %3108 = vmatprep.subr.mxu0 0.0
        %3109 = vmatpush1.msra.mxu0 0.0
        %3110 = vmatprep.subr.mxu0 0.0
        %3111 = vmatpush1.msra.mxu0 0.0
        %3112 = vmatprep.subr.mxu0 0.0
        %3113 = vmatpush1.msra.mxu0 0.0
        %3114 = vmatprep.subr.mxu0 0.0
        %3115 = vmatpush1.msra.mxu0 0.0
        %3116 = vmatprep.subr.mxu0 0.0
        %3117 = vmatpush1.msra.mxu0 0.0
        %3118 = vmatprep.subr.mxu0 0.0
        %3119 = vmatpush1.msra.mxu0 0.0
        %3120 = vmatprep.subr.mxu0 0.0
        %3121 = vmatpush1.msra.mxu0 0.0
        %3122 = vmatprep.subr.mxu0 0.0
        %3123 = vmatpush1.msra.mxu0 0.0
        %3124 = vmatprep.subr.mxu0 0.0
        %3125 = vmatpush1.msra.mxu0 0.0
        %3126 = vmatprep.subr.mxu0 0.0
        %3127 = vmatpush1.msra.mxu0 0.0
        %3128 = vmatprep.subr.mxu0 0.0
        %3129 = vmatpush1.msra.mxu0 0.0
        %3130 = vmatprep.subr.mxu0 0.0
        %3131 = vmatpush1.msra.mxu0 0.0
        %3132 = vmatprep.subr.mxu0 0.0
        %3133 = vmatpush1.msra.mxu0 0.0
        %3134 = vmatprep.subr.mxu0 0.0
        %3135 = vmatpush1.msra.mxu0 0.0
        %3136 = vmatprep.subr.mxu0 0.0
        %3137 = vmatpush1.msra.mxu0 0.0
        %3138 = vmatprep.subr.mxu0 0.0
        %3139 = vmatpush1.msra.mxu0 0.0
        %3140 = vmatprep.subr.mxu0 0.0
        %3141 = vmatpush1.msra.mxu0 0.0
        %3142 = vmatprep.subr.mxu0 0.0
        %3143 = vmatpush1.msra.mxu0 0.0
        %3144 = vmatprep.subr.mxu0 0.0
        %3145 = vmatpush1.msra.mxu0 0.0
        %3146 = vmatprep.subr.mxu0 0.0
        %3147 = vmatpush1.msra.mxu0 0.0
        %3148 = vmatprep.subr.mxu0 0.0
        %3149 = vmatpush1.msra.mxu0 0.0
        %3150 = vmatprep.subr.mxu0 0.0
        %3151 = vmatpush1.msra.mxu0 0.0
        %3152 = vmatprep.subr.mxu0 0.0
        %3153 = vmatpush1.msra.mxu0 0.0
        %3154 = vmatprep.mubr.f32.mxu0 0.0
        %3155 = vmatmul.mubr.f32.gmra.mrb[0].mxu0 %v3008
        %v3156 = vpop.f32.mrb[0].mxu0
        %v3157 = vadd.f32 0.0, %v3156
        %v3158 = vpop.f32.mrb[0].mxu0
        %v3159 = vadd.f32 0.0, %v3158
        %3160 = vmatprep.mubr.f32.mxu0 0.0
        %3161 = vmatmul.mubr.f32.gmra.mrb[0].mxu0 %v3011
        %v3162 = vpop.f32.mrb[0].mxu0
        %v3163 = vadd.f32 0.0, %v3162
        %v3164 = vpop.f32.mrb[0].mxu0
        %v3165 = vadd.f32 0.0, %v3164
        %3166 = vdwg.mxu0
        %v3168 = vsel %vm688, %v2888, 0
        %v3171 = vsel %vm688, %v2889, 0
        %3173 = vmatprep.subr.mxu0 %v2976
        %3174 = vmatpush1.msra.mxu0 %v2975
        %3175 = vmatprep.subr.mxu0 %v2980
        %3176 = vmatpush1.msra.mxu0 %v2979
        %3177 = vmatprep.subr.mxu0 %v2984
        %3178 = vmatpush1.msra.mxu0 %v2983
        %3179 = vmatprep.subr.mxu0 %v2988
        %3180 = vmatpush1.msra.mxu0 %v2987
        %3181 = vmatprep.subr.mxu0 0.0
        %3182 = vmatpush1.msra.mxu0 0.0
        %3183 = vmatprep.subr.mxu0 0.0
        %3184 = vmatpush1.msra.mxu0 0.0
        %3185 = vmatprep.subr.mxu0 0.0
        %3186 = vmatpush1.msra.mxu0 0.0
        %3187 = vmatprep.subr.mxu0 0.0
        %3188 = vmatpush1.msra.mxu0 0.0
        %3189 = vmatprep.subr.mxu0 0.0
        %3190 = vmatpush1.msra.mxu0 0.0
        %3191 = vmatprep.subr.mxu0 0.0
        %3192 = vmatpush1.msra.mxu0 0.0
        %3193 = vmatprep.subr.mxu0 0.0
        %3194 = vmatpush1.msra.mxu0 0.0
        %3195 = vmatprep.subr.mxu0 0.0
        %3196 = vmatpush1.msra.mxu0 0.0
        %3197 = vmatprep.subr.mxu0 0.0
        %3198 = vmatpush1.msra.mxu0 0.0
        %3199 = vmatprep.subr.mxu0 0.0
        %3200 = vmatpush1.msra.mxu0 0.0
        %3201 = vmatprep.subr.mxu0 0.0
        %3202 = vmatpush1.msra.mxu0 0.0
        %3203 = vmatprep.subr.mxu0 0.0
        %3204 = vmatpush1.msra.mxu0 0.0
        %3205 = vmatprep.subr.mxu0 0.0
        %3206 = vmatpush1.msra.mxu0 0.0
        %3207 = vmatprep.subr.mxu0 0.0
        %3208 = vmatpush1.msra.mxu0 0.0
        %3209 = vmatprep.subr.mxu0 0.0
        %3210 = vmatpush1.msra.mxu0 0.0
        %3211 = vmatprep.subr.mxu0 0.0
        %3212 = vmatpush1.msra.mxu0 0.0
        %3213 = vmatprep.subr.mxu0 0.0
        %3214 = vmatpush1.msra.mxu0 0.0
        %3215 = vmatprep.subr.mxu0 0.0
        %3216 = vmatpush1.msra.mxu0 0.0
        %3217 = vmatprep.subr.mxu0 0.0
        %3218 = vmatpush1.msra.mxu0 0.0
        %3219 = vmatprep.subr.mxu0 0.0
        %3220 = vmatpush1.msra.mxu0 0.0
        %3221 = vmatprep.subr.mxu0 0.0
        %3222 = vmatpush1.msra.mxu0 0.0
        %3223 = vmatprep.subr.mxu0 0.0
        %3224 = vmatpush1.msra.mxu0 0.0
        %3225 = vmatprep.subr.mxu0 0.0
        %3226 = vmatpush1.msra.mxu0 0.0
        %3227 = vmatprep.subr.mxu0 0.0
        %3228 = vmatpush1.msra.mxu0 0.0
        %3229 = vmatprep.subr.mxu0 0.0
        %3230 = vmatpush1.msra.mxu0 0.0
        %3231 = vmatprep.subr.mxu0 0.0
        %3232 = vmatpush1.msra.mxu0 0.0
        %3233 = vmatprep.subr.mxu0 0.0
        %3234 = vmatpush1.msra.mxu0 0.0
        %3235 = vmatprep.subr.mxu0 0.0
        %3236 = vmatpush1.msra.mxu0 0.0
        %3237 = vmatprep.mubr.f32.mxu0 0.0
        %3238 = vmatmul.mubr.f32.gmra.mrb[0].mxu0 %v3168
        %v3239 = vpop.f32.mrb[0].mxu0
        %v3240 = vadd.f32 %v3080, %v3239
        %v3241 = vpop.f32.mrb[0].mxu0
        %v3242 = vadd.f32 %v3082, %v3241
        %3243 = vmatprep.mubr.f32.mxu0 0.0
        %3244 = vmatmul.mubr.f32.gmra.mrb[0].mxu0 %v3171
        %v3245 = vpop.f32.mrb[0].mxu0
        %v3246 = vadd.f32 %v3086, %v3245
        %v3247 = vpop.f32.mrb[0].mxu0
        %v3248 = vadd.f32 %v3088, %v3247
        %3249 = vdwg.mxu0
        %3250 = vmatprep.subr.mxu0 %v2978
        %3251 = vmatpush1.msra.mxu0 %v2977
        %3252 = vmatprep.subr.mxu0 %v2982
        %3253 = vmatpush1.msra.mxu0 %v2981
        %3254 = vmatprep.subr.mxu0 %v2986
        %3255 = vmatpush1.msra.mxu0 %v2985
        %3256 = vmatprep.subr.mxu0 %v2990
        %3257 = vmatpush1.msra.mxu0 %v2989
        %3258 = vmatprep.subr.mxu0 0.0
        %3259 = vmatpush1.msra.mxu0 0.0
        %3260 = vmatprep.subr.mxu0 0.0
        %3261 = vmatpush1.msra.mxu0 0.0
        %3262 = vmatprep.subr.mxu0 0.0
        %3263 = vmatpush1.msra.mxu0 0.0
        %3264 = vmatprep.subr.mxu0 0.0
        %3265 = vmatpush1.msra.mxu0 0.0
        %3266 = vmatprep.subr.mxu0 0.0
        %3267 = vmatpush1.msra.mxu0 0.0
        %3268 = vmatprep.subr.mxu0 0.0
        %3269 = vmatpush1.msra.mxu0 0.0
        %3270 = vmatprep.subr.mxu0 0.0
        %3271 = vmatpush1.msra.mxu0 0.0
        %3272 = vmatprep.subr.mxu0 0.0
        %3273 = vmatpush1.msra.mxu0 0.0
        %3274 = vmatprep.subr.mxu0 0.0
        %3275 = vmatpush1.msra.mxu0 0.0
        %3276 = vmatprep.subr.mxu0 0.0
        %3277 = vmatpush1.msra.mxu0 0.0
        %3278 = vmatprep.subr.mxu0 0.0
        %3279 = vmatpush1.msra.mxu0 0.0
        %3280 = vmatprep.subr.mxu0 0.0
        %3281 = vmatpush1.msra.mxu0 0.0
        %3282 = vmatprep.subr.mxu0 0.0
        %3283 = vmatpush1.msra.mxu0 0.0
        %3284 = vmatprep.subr.mxu0 0.0
        %3285 = vmatpush1.msra.mxu0 0.0
        %3286 = vmatprep.subr.mxu0 0.0
        %3287 = vmatpush1.msra.mxu0 0.0
        %3288 = vmatprep.subr.mxu0 0.0
        %3289 = vmatpush1.msra.mxu0 0.0
        %3290 = vmatprep.subr.mxu0 0.0
        %3291 = vmatpush1.msra.mxu0 0.0
        %3292 = vmatprep.subr.mxu0 0.0
        %3293 = vmatpush1.msra.mxu0 0.0
        %3294 = vmatprep.subr.mxu0 0.0
        %3295 = vmatpush1.msra.mxu0 0.0
        %3296 = vmatprep.subr.mxu0 0.0
        %3297 = vmatpush1.msra.mxu0 0.0
        %3298 = vmatprep.subr.mxu0 0.0
        %3299 = vmatpush1.msra.mxu0 0.0
        %3300 = vmatprep.subr.mxu0 0.0
        %3301 = vmatpush1.msra.mxu0 0.0
        %3302 = vmatprep.subr.mxu0 0.0
        %3303 = vmatpush1.msra.mxu0 0.0
        %3304 = vmatprep.subr.mxu0 0.0
        %3305 = vmatpush1.msra.mxu0 0.0
        %3306 = vmatprep.subr.mxu0 0.0
        %3307 = vmatpush1.msra.mxu0 0.0
        %3308 = vmatprep.subr.mxu0 0.0
        %3309 = vmatpush1.msra.mxu0 0.0
        %3310 = vmatprep.subr.mxu0 0.0
        %3311 = vmatpush1.msra.mxu0 0.0
        %3312 = vmatprep.subr.mxu0 0.0
        %3313 = vmatpush1.msra.mxu0 0.0
        %3314 = vmatprep.mubr.f32.mxu0 0.0
        %3315 = vmatmul.mubr.f32.gmra.mrb[0].mxu0 %v3168
        %v3316 = vpop.f32.mrb[0].mxu0
        %v3317 = vadd.f32 %v3157, %v3316
        %v3318 = vpop.f32.mrb[0].mxu0
        %v3319 = vadd.f32 %v3159, %v3318
        %3320 = vmatprep.mubr.f32.mxu0 0.0
        %3321 = vmatmul.mubr.f32.gmra.mrb[0].mxu0 %v3171
        %v3322 = vpop.f32.mrb[0].mxu0
        %v3323 = vadd.f32 %v3163, %v3322
        %v3324 = vpop.f32.mrb[0].mxu0
        %v3325 = vadd.f32 %v3165, %v3324
        %3326 = vdwg.mxu0
        %v3327 = vld [vmem:[%s1009] sm:$0xff]
        %v3328 = vld [vmem:[%s1009 + $0x8] sm:$0xff]
        %v3329 = vld [vmem:[%s1009 + $0x10] sm:$0xff]
        %v3330 = vld [vmem:[%s1009 + $0x18] sm:$0xff]
        %v3331 = vld [vmem:[%s1009 + $0x20] sm:$0xff]
        %v3332 = vld [vmem:[%s1009 + $0x28] sm:$0xff]
        %v3333 = vld [vmem:[%s1009 + $0x30] sm:$0xff]
        %v3334 = vld [vmem:[%s1009 + $0x38] sm:$0xff]
        %v3335 = vld [vmem:[%s1009 + $0x40] sm:$0xff]
        %v3336 = vld [vmem:[%s1009 + $0x48] sm:$0xff]
        %v3337 = vld [vmem:[%s1009 + $0x50] sm:$0xff]
        %v3338 = vld [vmem:[%s1009 + $0x58] sm:$0xff]
        %v3339 = vld [vmem:[%s1009 + $0x60] sm:$0xff]
        %v3340 = vld [vmem:[%s1009 + $0x68] sm:$0xff]
        %v3341 = vld [vmem:[%s1009 + $0x70] sm:$0xff]
        %v3342 = vld [vmem:[%s1009 + $0x78] sm:$0xff]
        %v3344 = vsel %vm688, %v2967, 0
        %v3347 = vsel %vm688, %v2972, 0
        %3349 = vmatprep.subr.mxu0 %v3328
        %3350 = vmatpush1.msra.mxu0 %v3327
        %3351 = vmatprep.subr.mxu0 %v3332
        %3352 = vmatpush1.msra.mxu0 %v3331
        %3353 = vmatprep.subr.mxu0 %v3336
        %3354 = vmatpush1.msra.mxu0 %v3335
        %3355 = vmatprep.subr.mxu0 %v3340
        %3356 = vmatpush1.msra.mxu0 %v3339
        %3357 = vmatprep.subr.mxu0 0.0
        %3358 = vmatpush1.msra.mxu0 0.0
        %3359 = vmatprep.subr.mxu0 0.0
        %3360 = vmatpush1.msra.mxu0 0.0
        %3361 = vmatprep.subr.mxu0 0.0
        %3362 = vmatpush1.msra.mxu0 0.0
        %3363 = vmatprep.subr.mxu0 0.0
        %3364 = vmatpush1.msra.mxu0 0.0
        %3365 = vmatprep.subr.mxu0 0.0
        %3366 = vmatpush1.msra.mxu0 0.0
        %3367 = vmatprep.subr.mxu0 0.0
        %3368 = vmatpush1.msra.mxu0 0.0
        %3369 = vmatprep.subr.mxu0 0.0
        %3370 = vmatpush1.msra.mxu0 0.0
        %3371 = vmatprep.subr.mxu0 0.0
        %3372 = vmatpush1.msra.mxu0 0.0
        %3373 = vmatprep.subr.mxu0 0.0
        %3374 = vmatpush1.msra.mxu0 0.0
        %3375 = vmatprep.subr.mxu0 0.0
        %3376 = vmatpush1.msra.mxu0 0.0
        %3377 = vmatprep.subr.mxu0 0.0
        %3378 = vmatpush1.msra.mxu0 0.0
        %3379 = vmatprep.subr.mxu0 0.0
        %3380 = vmatpush1.msra.mxu0 0.0
        %3381 = vmatprep.subr.mxu0 0.0
        %3382 = vmatpush1.msra.mxu0 0.0
        %3383 = vmatprep.subr.mxu0 0.0
        %3384 = vmatpush1.msra.mxu0 0.0
        %3385 = vmatprep.subr.mxu0 0.0
        %3386 = vmatpush1.msra.mxu0 0.0
        %3387 = vmatprep.subr.mxu0 0.0
        %3388 = vmatpush1.msra.mxu0 0.0
        %3389 = vmatprep.subr.mxu0 0.0
        %3390 = vmatpush1.msra.mxu0 0.0
        %3391 = vmatprep.subr.mxu0 0.0
        %3392 = vmatpush1.msra.mxu0 0.0
        %3393 = vmatprep.subr.mxu0 0.0
        %3394 = vmatpush1.msra.mxu0 0.0
        %3395 = vmatprep.subr.mxu0 0.0
        %3396 = vmatpush1.msra.mxu0 0.0
        %3397 = vmatprep.subr.mxu0 0.0
        %3398 = vmatpush1.msra.mxu0 0.0
        %3399 = vmatprep.subr.mxu0 0.0
        %3400 = vmatpush1.msra.mxu0 0.0
        %3401 = vmatprep.subr.mxu0 0.0
        %3402 = vmatpush1.msra.mxu0 0.0
        %3403 = vmatprep.subr.mxu0 0.0
        %3404 = vmatpush1.msra.mxu0 0.0
        %3405 = vmatprep.subr.mxu0 0.0
        %3406 = vmatpush1.msra.mxu0 0.0
        %3407 = vmatprep.subr.mxu0 0.0
        %3408 = vmatpush1.msra.mxu0 0.0
        %3409 = vmatprep.subr.mxu0 0.0
        %3410 = vmatpush1.msra.mxu0 0.0
        %3411 = vmatprep.subr.mxu0 0.0
        %3412 = vmatpush1.msra.mxu0 0.0
        %3413 = vmatprep.mubr.f32.mxu0 0.0
        %3414 = vmatmul.mubr.f32.gmra.mrb[0].mxu0 %v3344
        %v3415 = vpop.f32.mrb[0].mxu0
        %v3416 = vadd.f32 0.0, %v3415
        %v3417 = vpop.f32.mrb[0].mxu0
        %v3418 = vadd.f32 0.0, %v3417
        %3419 = vmatprep.mubr.f32.mxu0 0.0
        %3420 = vmatmul.mubr.f32.gmra.mrb[0].mxu0 %v3347
        %v3421 = vpop.f32.mrb[0].mxu0
        %v3422 = vadd.f32 0.0, %v3421
        %v3423 = vpop.f32.mrb[0].mxu0
        %v3424 = vadd.f32 0.0, %v3423
        %3425 = vdwg.mxu0
        %3426 = vmatprep.subr.mxu0 %v3330
        %3427 = vmatpush1.msra.mxu0 %v3329
        %3428 = vmatprep.subr.mxu0 %v3334
        %3429 = vmatpush1.msra.mxu0 %v3333
        %3430 = vmatprep.subr.mxu0 %v3338
        %3431 = vmatpush1.msra.mxu0 %v3337
        %3432 = vmatprep.subr.mxu0 %v3342
        %3433 = vmatpush1.msra.mxu0 %v3341
        %3434 = vmatprep.subr.mxu0 0.0
        %3435 = vmatpush1.msra.mxu0 0.0
        %3436 = vmatprep.subr.mxu0 0.0
        %3437 = vmatpush1.msra.mxu0 0.0
        %3438 = vmatprep.subr.mxu0 0.0
        %3439 = vmatpush1.msra.mxu0 0.0
        %3440 = vmatprep.subr.mxu0 0.0
        %3441 = vmatpush1.msra.mxu0 0.0
        %3442 = vmatprep.subr.mxu0 0.0
        %3443 = vmatpush1.msra.mxu0 0.0
        %3444 = vmatprep.subr.mxu0 0.0
        %3445 = vmatpush1.msra.mxu0 0.0
        %3446 = vmatprep.subr.mxu0 0.0
        %3447 = vmatpush1.msra.mxu0 0.0
        %3448 = vmatprep.subr.mxu0 0.0
        %3449 = vmatpush1.msra.mxu0 0.0
        %3450 = vmatprep.subr.mxu0 0.0
        %3451 = vmatpush1.msra.mxu0 0.0
        %3452 = vmatprep.subr.mxu0 0.0
        %3453 = vmatpush1.msra.mxu0 0.0
        %3454 = vmatprep.subr.mxu0 0.0
        %3455 = vmatpush1.msra.mxu0 0.0
        %3456 = vmatprep.subr.mxu0 0.0
        %3457 = vmatpush1.msra.mxu0 0.0
        %3458 = vmatprep.subr.mxu0 0.0
        %3459 = vmatpush1.msra.mxu0 0.0
        %3460 = vmatprep.subr.mxu0 0.0
        %3461 = vmatpush1.msra.mxu0 0.0
        %3462 = vmatprep.subr.mxu0 0.0
        %3463 = vmatpush1.msra.mxu0 0.0
        %3464 = vmatprep.subr.mxu0 0.0
        %3465 = vmatpush1.msra.mxu0 0.0
        %3466 = vmatprep.subr.mxu0 0.0
        %3467 = vmatpush1.msra.mxu0 0.0
        %3468 = vmatprep.subr.mxu0 0.0
        %3469 = vmatpush1.msra.mxu0 0.0
        %3470 = vmatprep.subr.mxu0 0.0
        %3471 = vmatpush1.msra.mxu0 0.0
        %3472 = vmatprep.subr.mxu0 0.0
        %3473 = vmatpush1.msra.mxu0 0.0
        %3474 = vmatprep.subr.mxu0 0.0
        %3475 = vmatpush1.msra.mxu0 0.0
        %3476 = vmatprep.subr.mxu0 0.0
        %3477 = vmatpush1.msra.mxu0 0.0
        %3478 = vmatprep.subr.mxu0 0.0
        %3479 = vmatpush1.msra.mxu0 0.0
        %3480 = vmatprep.subr.mxu0 0.0
        %3481 = vmatpush1.msra.mxu0 0.0
        %3482 = vmatprep.subr.mxu0 0.0
        %3483 = vmatpush1.msra.mxu0 0.0
        %3484 = vmatprep.subr.mxu0 0.0
        %3485 = vmatpush1.msra.mxu0 0.0
        %3486 = vmatprep.subr.mxu0 0.0
        %3487 = vmatpush1.msra.mxu0 0.0
        %3488 = vmatprep.subr.mxu0 0.0
        %3489 = vmatpush1.msra.mxu0 0.0
        %3490 = vmatprep.mubr.f32.mxu0 0.0
        %3491 = vmatmul.mubr.f32.gmra.mrb[0].mxu0 %v3344
        %v3492 = vpop.f32.mrb[0].mxu0
        %v3493 = vadd.f32 0.0, %v3492
        %v3494 = vpop.f32.mrb[0].mxu0
        %v3495 = vadd.f32 0.0, %v3494
        %3496 = vmatprep.mubr.f32.mxu0 0.0
        %3497 = vmatmul.mubr.f32.gmra.mrb[0].mxu0 %v3347
        %v3498 = vpop.f32.mrb[0].mxu0
        %v3499 = vadd.f32 0.0, %v3498
        %v3500 = vpop.f32.mrb[0].mxu0
        %v3501 = vadd.f32 0.0, %v3500
        %3502 = vdwg.mxu0
        %v3503 = vadd.f32 %v3240, %v3416
        %v3504 = vadd.f32 %v3242, %v3418
        %v3505 = vadd.f32 %v3317, %v3493
        %v3506 = vadd.f32 %v3319, %v3495
        %v3507 = vadd.f32 %v3246, %v3422
        %v3508 = vadd.f32 %v3248, %v3424
        %v3509 = vadd.f32 %v3323, %v3499
        %v3510 = vadd.f32 %v3325, %v3501
        %v3511 = vmul.f32 %v3503, %v539
        %v3512 = vmul.f32 %v3504, %v540
        %v3513 = vmul.f32 %v3505, %v541
        %v3514 = vmul.f32 %v3506, %v542
        %v3515 = vmul.f32 %v3507, %v543
        %v3516 = vmul.f32 %v3508, %v544
        %v3517 = vmul.f32 %v3509, %v545
        %v3518 = vmul.f32 %v3510, %v546
        %3521 = vrot.lane.b32.xlu0 %v3511, 64
        %v3522 = vpop.permute.xlu0 %3521
        %3523 = vrot.lane.b32.xlu0 %v3515, 64
        %v3524 = vpop.permute.xlu0 %3523
        %v3527 = vadd.f32 %v3511, %v3522
        %v3528 = vadd.f32 %v3515, %v3524
        %v3529 = vadd.f32 %v3527, %v3512
        %v3530 = vadd.f32 %v3528, %v3516
        %3533 = vrot.lane.b32.xlu0 %v3512, 64
        %v3534 = vpop.permute.xlu0 %3533
        %3535 = vrot.lane.b32.xlu0 %v3516, 64
        %v3536 = vpop.permute.xlu0 %3535
        %v3539 = vadd.f32 %v3529, %v3534
        %v3540 = vadd.f32 %v3530, %v3536
        %v3541 = vadd.f32 %v3539, %v3513
        %v3542 = vadd.f32 %v3540, %v3517
        %3545 = vrot.lane.b32.xlu0 %v3513, 64
        %v3546 = vpop.permute.xlu0 %3545
        %3547 = vrot.lane.b32.xlu0 %v3517, 64
        %v3548 = vpop.permute.xlu0 %3547
        %v3551 = vadd.f32 %v3541, %v3546
        %v3552 = vadd.f32 %v3542, %v3548
        %v3553 = vadd.f32 %v3551, %v3514
        %v3554 = vadd.f32 %v3552, %v3518
        %3557 = vrot.lane.b32.xlu0 %v3514, 64
        %v3558 = vpop.permute.xlu0 %3557
        %3559 = vrot.lane.b32.xlu0 %v3518, 64
        %v3560 = vpop.permute.xlu0 %3559
        %v3563 = vadd.f32 %v3553, %v3558
        %v3564 = vadd.f32 %v3554, %v3560
        %v3565 = vadd.f32 %v3563, %v2883
        %v3566 = vadd.f32 %v3564, %v2884
        %v3567 = vxor.u32 %v3565, 2147483648
        %v3568 = vxor.u32 %v3566, 2147483648
        %v3569 = vmul.f32 %v3567, 1.442695
        %v3570 = vpow.pop %v3569
        %v3571 = vmul.f32 %v3568, 1.442695
        %v3572 = vpow.pop %v3571
        %v3573 = vadd.f32 %v3570, 1.0
        %v3574 = vadd.f32 %v3572, 1.0
        %v3575 = vrcp.pop %v3573
        %v3576 = vmul.f32 1.0, %v3575
        %v3577 = vrcp.pop %v3574
        %v3578 = vmul.f32 1.0, %v3577
        %v3579 = vmul.f32 %v3576, %v2888
        %v3580 = vmul.f32 %v3578, %v2889
        %3581 = vmatprep.subr.mxu0 0.0
        %3582 = vmatpush1.msra.mxu0 %v3579
        %3583 = vmatprep.subr.mxu0 0.0
        %3584 = vmatpush1.msra.mxu0 %v3580
        %3585 = vmatprep.subr.mxu0 0.0
        %3586 = vmatpush1.msra.mxu0 0.0
        %3587 = vmatprep.subr.mxu0 0.0
        %3588 = vmatpush1.msra.mxu0 0.0
        %3589 = vmatprep.subr.mxu0 0.0
        %3590 = vmatpush1.msra.mxu0 0.0
        %3591 = vmatprep.subr.mxu0 0.0
        %3592 = vmatpush1.msra.mxu0 0.0
        %3593 = vmatprep.subr.mxu0 0.0
        %3594 = vmatpush1.msra.mxu0 0.0
        %3595 = vmatprep.subr.mxu0 0.0
        %3596 = vmatpush1.msra.mxu0 0.0
        %3597 = vmatprep.subr.mxu0 0.0
        %3598 = vmatpush1.msra.mxu0 0.0
        %3599 = vmatprep.subr.mxu0 0.0
        %3600 = vmatpush1.msra.mxu0 0.0
        %3601 = vmatprep.subr.mxu0 0.0
        %3602 = vmatpush1.msra.mxu0 0.0
        %3603 = vmatprep.subr.mxu0 0.0
        %3604 = vmatpush1.msra.mxu0 0.0
        %3605 = vmatprep.subr.mxu0 0.0
        %3606 = vmatpush1.msra.mxu0 0.0
        %3607 = vmatprep.subr.mxu0 0.0
        %3608 = vmatpush1.msra.mxu0 0.0
        %3609 = vmatprep.subr.mxu0 0.0
        %3610 = vmatpush1.msra.mxu0 0.0
        %3611 = vmatprep.subr.mxu0 0.0
        %3612 = vmatpush1.msra.mxu0 0.0
        %3613 = vmatprep.subr.mxu0 0.0
        %3614 = vmatpush1.msra.mxu0 0.0
        %3615 = vmatprep.subr.mxu0 0.0
        %3616 = vmatpush1.msra.mxu0 0.0
        %3617 = vmatprep.subr.mxu0 0.0
        %3618 = vmatpush1.msra.mxu0 0.0
        %3619 = vmatprep.subr.mxu0 0.0
        %3620 = vmatpush1.msra.mxu0 0.0
        %3621 = vmatprep.subr.mxu0 0.0
        %3622 = vmatpush1.msra.mxu0 0.0
        %3623 = vmatprep.subr.mxu0 0.0
        %3624 = vmatpush1.msra.mxu0 0.0
        %3625 = vmatprep.subr.mxu0 0.0
        %3626 = vmatpush1.msra.mxu0 0.0
        %3627 = vmatprep.subr.mxu0 0.0
        %3628 = vmatpush1.msra.mxu0 0.0
        %3629 = vmatprep.subr.mxu0 0.0
        %3630 = vmatpush1.msra.mxu0 0.0
        %3631 = vmatprep.subr.mxu0 0.0
        %3632 = vmatpush1.msra.mxu0 0.0
        %3633 = vmatprep.subr.mxu0 0.0
        %3634 = vmatpush1.msra.mxu0 0.0
        %3635 = vmatprep.subr.mxu0 0.0
        %3636 = vmatpush1.msra.mxu0 0.0
        %3637 = vmatprep.subr.mxu0 0.0
        %3638 = vmatpush1.msra.mxu0 0.0
        %3639 = vmatprep.subr.mxu0 0.0
        %3640 = vmatpush1.msra.mxu0 0.0
        %3641 = vmatprep.subr.mxu0 0.0
        %3642 = vmatpush1.msra.mxu0 0.0
        %3643 = vmatprep.subr.mxu0 0.0
        %3644 = vmatpush1.msra.mxu0 0.0
        %3645 = vmatprep.mubr.f32.mxu0 0.0
        %3646 = vmatmul.mubr.f32.gmra.mrb[0].mxu0 %v559
        %v3647 = vpop.f32.mrb[0].mxu0
        %v3648 = vadd.f32 0.0, %v3647
        %v3649 = vpop.f32.mrb[0].mxu0
        %3650 = vmatprep.mubr.f32.mxu0 0.0
        %3651 = vmatmul.mubr.f32.gmra.mrb[0].mxu0 %v562
        %v3652 = vpop.f32.mrb[0].mxu0
        %v3653 = vadd.f32 0.0, %v3652
        %v3654 = vpop.f32.mrb[0].mxu0
        %3655 = vmatprep.mubr.f32.mxu0 0.0
        %3656 = vmatmul.mubr.f32.gmra.mrb[0].mxu0 %v565
        %v3657 = vpop.f32.mrb[0].mxu0
        %v3658 = vadd.f32 0.0, %v3657
        %v3659 = vpop.f32.mrb[0].mxu0
        %3660 = vmatprep.mubr.f32.mxu0 0.0
        %3661 = vmatmul.mubr.f32.gmra.mrb[0].mxu0 %v568
        %v3662 = vpop.f32.mrb[0].mxu0
        %v3663 = vadd.f32 0.0, %v3662
        %v3664 = vpop.f32.mrb[0].mxu0
        %3665 = vdwg.mxu0
        %v3666 = vld [vmem:[#allocation11] sm:$0xff]
        %v3667 = vld [vmem:[#allocation11 + $0x8] sm:$0xff]
        %v3668 = vld [vmem:[#allocation11 + $0x10] sm:$0xff]
        %v3669 = vld [vmem:[#allocation11 + $0x18] sm:$0xff]
        %v3670 = vld [vmem:[#allocation11 + $0x20] sm:$0xff]
        %v3671 = vld [vmem:[#allocation11 + $0x28] sm:$0xff]
        %v3672 = vld [vmem:[#allocation11 + $0x30] sm:$0xff]
        %v3673 = vld [vmem:[#allocation11 + $0x38] sm:$0xff]
        %v3674 = vld [vmem:[%s1357] sm:$0xff]
        %v3675 = vld [vmem:[%s1357 + $0x8] sm:$0xff]
        %v3676 = vld [vmem:[%s1357 + $0x10] sm:$0xff]
        %v3677 = vld [vmem:[%s1357 + $0x18] sm:$0xff]
        %v3678 = vld [vmem:[%s1357 + $0x20] sm:$0xff]
        %v3679 = vld [vmem:[%s1357 + $0x28] sm:$0xff]
        %v3680 = vld [vmem:[%s1357 + $0x30] sm:$0xff]
        %v3681 = vld [vmem:[%s1357 + $0x38] sm:$0xff]
        %v3683 = vsel %vm688, %v3648, 0
        %v3686 = vsel %vm688, %v3653, 0
        %3688 = vmatprep.subr.mxu0 %v3675
        %3689 = vmatpush1.msra.mxu0 %v3674
        %3690 = vmatprep.subr.mxu0 %v3677
        %3691 = vmatpush1.msra.mxu0 %v3676
        %3692 = vmatprep.subr.mxu0 %v3679
        %3693 = vmatpush1.msra.mxu0 %v3678
        %3694 = vmatprep.subr.mxu0 %v3681
        %3695 = vmatpush1.msra.mxu0 %v3680
        %3696 = vmatprep.subr.mxu0 0.0
        %3697 = vmatpush1.msra.mxu0 0.0
        %3698 = vmatprep.subr.mxu0 0.0
        %3699 = vmatpush1.msra.mxu0 0.0
        %3700 = vmatprep.subr.mxu0 0.0
        %3701 = vmatpush1.msra.mxu0 0.0
        %3702 = vmatprep.subr.mxu0 0.0
        %3703 = vmatpush1.msra.mxu0 0.0
        %3704 = vmatprep.subr.mxu0 0.0
        %3705 = vmatpush1.msra.mxu0 0.0
        %3706 = vmatprep.subr.mxu0 0.0
        %3707 = vmatpush1.msra.mxu0 0.0
        %3708 = vmatprep.subr.mxu0 0.0
        %3709 = vmatpush1.msra.mxu0 0.0
        %3710 = vmatprep.subr.mxu0 0.0
        %3711 = vmatpush1.msra.mxu0 0.0
        %3712 = vmatprep.subr.mxu0 0.0
        %3713 = vmatpush1.msra.mxu0 0.0
        %3714 = vmatprep.subr.mxu0 0.0
        %3715 = vmatpush1.msra.mxu0 0.0
        %3716 = vmatprep.subr.mxu0 0.0
        %3717 = vmatpush1.msra.mxu0 0.0
        %3718 = vmatprep.subr.mxu0 0.0
        %3719 = vmatpush1.msra.mxu0 0.0
        %3720 = vmatprep.subr.mxu0 0.0
        %3721 = vmatpush1.msra.mxu0 0.0
        %3722 = vmatprep.subr.mxu0 0.0
        %3723 = vmatpush1.msra.mxu0 0.0
        %3724 = vmatprep.subr.mxu0 0.0
        %3725 = vmatpush1.msra.mxu0 0.0
        %3726 = vmatprep.subr.mxu0 0.0
        %3727 = vmatpush1.msra.mxu0 0.0
        %3728 = vmatprep.subr.mxu0 0.0
        %3729 = vmatpush1.msra.mxu0 0.0
        %3730 = vmatprep.subr.mxu0 0.0
        %3731 = vmatpush1.msra.mxu0 0.0
        %3732 = vmatprep.subr.mxu0 0.0
        %3733 = vmatpush1.msra.mxu0 0.0
        %3734 = vmatprep.subr.mxu0 0.0
        %3735 = vmatpush1.msra.mxu0 0.0
        %3736 = vmatprep.subr.mxu0 0.0
        %3737 = vmatpush1.msra.mxu0 0.0
        %3738 = vmatprep.subr.mxu0 0.0
        %3739 = vmatpush1.msra.mxu0 0.0
        %3740 = vmatprep.subr.mxu0 0.0
        %3741 = vmatpush1.msra.mxu0 0.0
        %3742 = vmatprep.subr.mxu0 0.0
        %3743 = vmatpush1.msra.mxu0 0.0
        %3744 = vmatprep.subr.mxu0 0.0
        %3745 = vmatpush1.msra.mxu0 0.0
        %3746 = vmatprep.subr.mxu0 0.0
        %3747 = vmatpush1.msra.mxu0 0.0
        %3748 = vmatprep.subr.mxu0 0.0
        %3749 = vmatpush1.msra.mxu0 0.0
        %3750 = vmatprep.subr.mxu0 0.0
        %3751 = vmatpush1.msra.mxu0 0.0
        %3752 = vmatprep.mubr.f32.mxu0 0.0
        %3753 = vmatmul.mubr.f32.gmra.mrb[0].mxu0 %v3683
        %v3754 = vpop.f32.mrb[0].mxu0
        %v3755 = vadd.f32 0.0, %v3754
        %v3756 = vpop.f32.mrb[0].mxu0
        %v3757 = vadd.f32 0.0, %v3756
        %3758 = vmatprep.mubr.f32.mxu0 0.0
        %3759 = vmatmul.mubr.f32.gmra.mrb[0].mxu0 %v3686
        %v3760 = vpop.f32.mrb[0].mxu0
        %v3761 = vadd.f32 0.0, %v3760
        %v3762 = vpop.f32.mrb[0].mxu0
        %v3763 = vadd.f32 0.0, %v3762
        %3764 = vdwg.mxu0
        %v3766 = vsel %vm688, %v3579, 0
        %v3769 = vsel %vm688, %v3580, 0
        %3771 = vmatprep.subr.mxu0 %v3667
        %3772 = vmatpush1.msra.mxu0 %v3666
        %3773 = vmatprep.subr.mxu0 %v3669
        %3774 = vmatpush1.msra.mxu0 %v3668
        %3775 = vmatprep.subr.mxu0 %v3671
        %3776 = vmatpush1.msra.mxu0 %v3670
        %3777 = vmatprep.subr.mxu0 %v3673
        %3778 = vmatpush1.msra.mxu0 %v3672
        %3779 = vmatprep.subr.mxu0 0.0
        %3780 = vmatpush1.msra.mxu0 0.0
        %3781 = vmatprep.subr.mxu0 0.0
        %3782 = vmatpush1.msra.mxu0 0.0
        %3783 = vmatprep.subr.mxu0 0.0
        %3784 = vmatpush1.msra.mxu0 0.0
        %3785 = vmatprep.subr.mxu0 0.0
        %3786 = vmatpush1.msra.mxu0 0.0
        %3787 = vmatprep.subr.mxu0 0.0
        %3788 = vmatpush1.msra.mxu0 0.0
        %3789 = vmatprep.subr.mxu0 0.0
        %3790 = vmatpush1.msra.mxu0 0.0
        %3791 = vmatprep.subr.mxu0 0.0
        %3792 = vmatpush1.msra.mxu0 0.0
        %3793 = vmatprep.subr.mxu0 0.0
        %3794 = vmatpush1.msra.mxu0 0.0
        %3795 = vmatprep.subr.mxu0 0.0
        %3796 = vmatpush1.msra.mxu0 0.0
        %3797 = vmatprep.subr.mxu0 0.0
        %3798 = vmatpush1.msra.mxu0 0.0
        %3799 = vmatprep.subr.mxu0 0.0
        %3800 = vmatpush1.msra.mxu0 0.0
        %3801 = vmatprep.subr.mxu0 0.0
        %3802 = vmatpush1.msra.mxu0 0.0
        %3803 = vmatprep.subr.mxu0 0.0
        %3804 = vmatpush1.msra.mxu0 0.0
        %3805 = vmatprep.subr.mxu0 0.0
        %3806 = vmatpush1.msra.mxu0 0.0
        %3807 = vmatprep.subr.mxu0 0.0
        %3808 = vmatpush1.msra.mxu0 0.0
        %3809 = vmatprep.subr.mxu0 0.0
        %3810 = vmatpush1.msra.mxu0 0.0
        %3811 = vmatprep.subr.mxu0 0.0
        %3812 = vmatpush1.msra.mxu0 0.0
        %3813 = vmatprep.subr.mxu0 0.0
        %3814 = vmatpush1.msra.mxu0 0.0
        %3815 = vmatprep.subr.mxu0 0.0
        %3816 = vmatpush1.msra.mxu0 0.0
        %3817 = vmatprep.subr.mxu0 0.0
        %3818 = vmatpush1.msra.mxu0 0.0
        %3819 = vmatprep.subr.mxu0 0.0
        %3820 = vmatpush1.msra.mxu0 0.0
        %3821 = vmatprep.subr.mxu0 0.0
        %3822 = vmatpush1.msra.mxu0 0.0
        %3823 = vmatprep.subr.mxu0 0.0
        %3824 = vmatpush1.msra.mxu0 0.0
        %3825 = vmatprep.subr.mxu0 0.0
        %3826 = vmatpush1.msra.mxu0 0.0
        %3827 = vmatprep.subr.mxu0 0.0
        %3828 = vmatpush1.msra.mxu0 0.0
        %3829 = vmatprep.subr.mxu0 0.0
        %3830 = vmatpush1.msra.mxu0 0.0
        %3831 = vmatprep.subr.mxu0 0.0
        %3832 = vmatpush1.msra.mxu0 0.0
        %3833 = vmatprep.subr.mxu0 0.0
        %3834 = vmatpush1.msra.mxu0 0.0
        %3835 = vmatprep.mubr.f32.mxu0 0.0
        %3836 = vmatmul.mubr.f32.gmra.mrb[0].mxu0 %v3766
        %v3837 = vpop.f32.mrb[0].mxu0
        %v3838 = vadd.f32 %v3755, %v3837
        %v3839 = vpop.f32.mrb[0].mxu0
        %v3840 = vadd.f32 %v3757, %v3839
        %3841 = vmatprep.mubr.f32.mxu0 0.0
        %3842 = vmatmul.mubr.f32.gmra.mrb[0].mxu0 %v3769
        %v3843 = vpop.f32.mrb[0].mxu0
        %v3844 = vadd.f32 %v3761, %v3843
        %v3845 = vpop.f32.mrb[0].mxu0
        %v3846 = vadd.f32 %v3763, %v3845
        %3847 = vdwg.mxu0
        %v3848 = vld [vmem:[%s1532] sm:$0xff]
        %v3849 = vld [vmem:[%s1532 + $0x8] sm:$0xff]
        %v3850 = vld [vmem:[%s1532 + $0x10] sm:$0xff]
        %v3851 = vld [vmem:[%s1532 + $0x18] sm:$0xff]
        %v3852 = vld [vmem:[%s1532 + $0x20] sm:$0xff]
        %v3853 = vld [vmem:[%s1532 + $0x28] sm:$0xff]
        %v3854 = vld [vmem:[%s1532 + $0x30] sm:$0xff]
        %v3855 = vld [vmem:[%s1532 + $0x38] sm:$0xff]
        %v3857 = vsel %vm688, %v3658, 0
        %v3860 = vsel %vm688, %v3663, 0
        %3862 = vmatprep.subr.mxu0 %v3849
        %3863 = vmatpush1.msra.mxu0 %v3848
        %3864 = vmatprep.subr.mxu0 %v3851
        %3865 = vmatpush1.msra.mxu0 %v3850
        %3866 = vmatprep.subr.mxu0 %v3853
        %3867 = vmatpush1.msra.mxu0 %v3852
        %3868 = vmatprep.subr.mxu0 %v3855
        %3869 = vmatpush1.msra.mxu0 %v3854
        %3870 = vmatprep.subr.mxu0 0.0
        %3871 = vmatpush1.msra.mxu0 0.0
        %3872 = vmatprep.subr.mxu0 0.0
        %3873 = vmatpush1.msra.mxu0 0.0
        %3874 = vmatprep.subr.mxu0 0.0
        %3875 = vmatpush1.msra.mxu0 0.0
        %3876 = vmatprep.subr.mxu0 0.0
        %3877 = vmatpush1.msra.mxu0 0.0
        %3878 = vmatprep.subr.mxu0 0.0
        %3879 = vmatpush1.msra.mxu0 0.0
        %3880 = vmatprep.subr.mxu0 0.0
        %3881 = vmatpush1.msra.mxu0 0.0
        %3882 = vmatprep.subr.mxu0 0.0
        %3883 = vmatpush1.msra.mxu0 0.0
        %3884 = vmatprep.subr.mxu0 0.0
        %3885 = vmatpush1.msra.mxu0 0.0
        %3886 = vmatprep.subr.mxu0 0.0
        %3887 = vmatpush1.msra.mxu0 0.0
        %3888 = vmatprep.subr.mxu0 0.0
        %3889 = vmatpush1.msra.mxu0 0.0
        %3890 = vmatprep.subr.mxu0 0.0
        %3891 = vmatpush1.msra.mxu0 0.0
        %3892 = vmatprep.subr.mxu0 0.0
        %3893 = vmatpush1.msra.mxu0 0.0
        %3894 = vmatprep.subr.mxu0 0.0
        %3895 = vmatpush1.msra.mxu0 0.0
        %3896 = vmatprep.subr.mxu0 0.0
        %3897 = vmatpush1.msra.mxu0 0.0
        %3898 = vmatprep.subr.mxu0 0.0
        %3899 = vmatpush1.msra.mxu0 0.0
        %3900 = vmatprep.subr.mxu0 0.0
        %3901 = vmatpush1.msra.mxu0 0.0
        %3902 = vmatprep.subr.mxu0 0.0
        %3903 = vmatpush1.msra.mxu0 0.0
        %3904 = vmatprep.subr.mxu0 0.0
        %3905 = vmatpush1.msra.mxu0 0.0
        %3906 = vmatprep.subr.mxu0 0.0
        %3907 = vmatpush1.msra.mxu0 0.0
        %3908 = vmatprep.subr.mxu0 0.0
        %3909 = vmatpush1.msra.mxu0 0.0
        %3910 = vmatprep.subr.mxu0 0.0
        %3911 = vmatpush1.msra.mxu0 0.0
        %3912 = vmatprep.subr.mxu0 0.0
        %3913 = vmatpush1.msra.mxu0 0.0
        %3914 = vmatprep.subr.mxu0 0.0
        %3915 = vmatpush1.msra.mxu0 0.0
        %3916 = vmatprep.subr.mxu0 0.0
        %3917 = vmatpush1.msra.mxu0 0.0
        %3918 = vmatprep.subr.mxu0 0.0
        %3919 = vmatpush1.msra.mxu0 0.0
        %3920 = vmatprep.subr.mxu0 0.0
        %3921 = vmatpush1.msra.mxu0 0.0
        %3922 = vmatprep.subr.mxu0 0.0
        %3923 = vmatpush1.msra.mxu0 0.0
        %3924 = vmatprep.subr.mxu0 0.0
        %3925 = vmatpush1.msra.mxu0 0.0
        %3926 = vmatprep.mubr.f32.mxu0 0.0
        %3927 = vmatmul.mubr.f32.gmra.mrb[0].mxu0 %v3857
        %v3928 = vpop.f32.mrb[0].mxu0
        %v3929 = vadd.f32 0.0, %v3928
        %v3930 = vpop.f32.mrb[0].mxu0
        %v3931 = vadd.f32 0.0, %v3930
        %3932 = vmatprep.mubr.f32.mxu0 0.0
        %3933 = vmatmul.mubr.f32.gmra.mrb[0].mxu0 %v3860
        %v3934 = vpop.f32.mrb[0].mxu0
        %v3935 = vadd.f32 0.0, %v3934
        %v3936 = vpop.f32.mrb[0].mxu0
        %v3937 = vadd.f32 0.0, %v3936
        %3938 = vdwg.mxu0
        %v3939 = vadd.f32 %v3838, %v3929
        %v3940 = vadd.f32 %v3840, %v3931
        %v3941 = vadd.f32 %v3844, %v3935
        %v3942 = vadd.f32 %v3846, %v3937
        %v3943 = vmul.f32 %v3939, %v547
        %v3944 = vmul.f32 %v3940, %v548
        %v3945 = vmul.f32 %v3941, %v549
        %v3946 = vmul.f32 %v3942, %v550
        %3949 = vrot.lane.b32.xlu0 %v3943, 96
        %v3950 = vpop.permute.xlu0 %3949
        %3951 = vrot.lane.b32.xlu0 %v3945, 96
        %v3952 = vpop.permute.xlu0 %3951
        %v3955 = vadd.f32 %v3943, %v3950
        %v3956 = vadd.f32 %v3945, %v3952
        %3957 = vrot.lane.b32.xlu0 %v3943, 64
        %v3958 = vpop.permute.xlu0 %3957
        %3959 = vrot.lane.b32.xlu0 %v3945, 64
        %v3960 = vpop.permute.xlu0 %3959
        %v3963 = vadd.f32 %v3955, %v3958
        %v3964 = vadd.f32 %v3956, %v3960
        %3965 = vrot.lane.b32.xlu0 %v3943, 32
        %v3966 = vpop.permute.xlu0 %3965
        %3967 = vrot.lane.b32.xlu0 %v3945, 32
        %v3968 = vpop.permute.xlu0 %3967
        %v3971 = vadd.f32 %v3963, %v3966
        %v3972 = vadd.f32 %v3964, %v3968
        %v3973 = vadd.f32 %v3971, %v3944
        %v3974 = vadd.f32 %v3972, %v3946
        %3977 = vrot.lane.b32.xlu0 %v3944, 96
        %v3978 = vpop.permute.xlu0 %3977
        %3979 = vrot.lane.b32.xlu0 %v3946, 96
        %v3980 = vpop.permute.xlu0 %3979
        %v3983 = vadd.f32 %v3973, %v3978
        %v3984 = vadd.f32 %v3974, %v3980
        %3985 = vrot.lane.b32.xlu0 %v3944, 64
        %v3986 = vpop.permute.xlu0 %3985
        %3987 = vrot.lane.b32.xlu0 %v3946, 64
        %v3988 = vpop.permute.xlu0 %3987
        %v3991 = vadd.f32 %v3983, %v3986
        %v3992 = vadd.f32 %v3984, %v3988
        %3993 = vrot.lane.b32.xlu0 %v3944, 32
        %v3994 = vpop.permute.xlu0 %3993
        %3995 = vrot.lane.b32.xlu0 %v3946, 32
        %v3996 = vpop.permute.xlu0 %3995
        %v3999 = vadd.f32 %v3991, %v3994
        %v4000 = vadd.f32 %v3992, %v3996
        %v4001 = vadd.f32 %v3999, %v2886
        %v4002 = vadd.f32 %v4000, %v2887
        %v4003 = vtanh.pop %v4001
        %v4004 = vtanh.pop %v4002
        %4005 = vrot.lane.b32.xlu0 %v2888, 32
        %v4006 = vpop.permute.xlu0 %4005
        %4007 = vrot.lane.b32.xlu0 %v2889, 32
        %v4008 = vpop.permute.xlu0 %4007
        %v4011 = vmul.f32 %v3576, %v4006
        %v4012 = vmul.f32 %v3578, %v4008
        %v4013 = vsub.f32 1.0, %v3576
        %v4014 = vsub.f32 1.0, %v3578
        %4017 = vrot.lane.b32.xlu0 %v4003, 32
        %v4018 = vpop.permute.xlu0 %4017
        %4019 = vrot.lane.b32.xlu0 %v4004, 32
        %v4020 = vpop.permute.xlu0 %4019
        %v4023 = vmul.f32 %v4013, %v4018
        %v4024 = vmul.f32 %v4014, %v4020
        %v4025 = vadd.f32 %v4011, %v4023
        %v4026 = vadd.f32 %v4012, %v4024
        %4029 = vrot.lane.b32.xlu0 %v4025, 96
        %v4030 = vpop.permute.xlu0 %4029
        %4031 = vrot.lane.b32.xlu0 %v4026, 96
        %v4032 = vpop.permute.xlu0 %4031
        %4035 = vst.msk [vmem:[#allocation2] sm:$0xff] %vm688, %v4030
        %4036 = vst.msk [vmem:[#allocation2 + $0x8] sm:$0xff] %vm688, %v4032
        %s4037 = scalar_lea.vmem %s518, 32 [#allocation14]
        %4038 = vst.msk [vmem:[%s4037] sm:$0xff] %vm688, %v4030
        %4039 = vst.msk [vmem:[%s4037 + $0x8] sm:$0xff] %vm688, %v4032
        %s4040 = scalar_lea.vmem %s446, 48 [#allocation3]
        %v4041 = vld [vmem:[%s4040] sm:$0xff]
        %v4042 = vld [vmem:[%s4040 + $0x8] sm:$0xff]
        %s4043 = scalar_lea.vmem %s455, 48 [#allocation6]
        %v4044 = vld [vmem:[%s4043] sm:$0xff]
        %v4045 = vld [vmem:[%s4043 + $0x8] sm:$0xff]
        %v4046 = vld [vmem:[#allocation2] sm:$0xff]
        %v4047 = vld [vmem:[#allocation2 + $0x8] sm:$0xff]
        %4048 = vmatprep.subr.mxu0 0.0
        %4049 = vmatpush1.msra.mxu0 %v4046
        %4050 = vmatprep.subr.mxu0 0.0
        %4051 = vmatpush1.msra.mxu0 %v4047
        %4052 = vmatprep.subr.mxu0 0.0
        %4053 = vmatpush1.msra.mxu0 0.0
        %4054 = vmatprep.subr.mxu0 0.0
        %4055 = vmatpush1.msra.mxu0 0.0
        %4056 = vmatprep.subr.mxu0 0.0
        %4057 = vmatpush1.msra.mxu0 0.0
        %4058 = vmatprep.subr.mxu0 0.0
        %4059 = vmatpush1.msra.mxu0 0.0
        %4060 = vmatprep.subr.mxu0 0.0
        %4061 = vmatpush1.msra.mxu0 0.0
        %4062 = vmatprep.subr.mxu0 0.0
        %4063 = vmatpush1.msra.mxu0 0.0
        %4064 = vmatprep.subr.mxu0 0.0
        %4065 = vmatpush1.msra.mxu0 0.0
        %4066 = vmatprep.subr.mxu0 0.0
        %4067 = vmatpush1.msra.mxu0 0.0
        %4068 = vmatprep.subr.mxu0 0.0
        %4069 = vmatpush1.msra.mxu0 0.0
        %4070 = vmatprep.subr.mxu0 0.0
        %4071 = vmatpush1.msra.mxu0 0.0
        %4072 = vmatprep.subr.mxu0 0.0
        %4073 = vmatpush1.msra.mxu0 0.0
        %4074 = vmatprep.subr.mxu0 0.0
        %4075 = vmatpush1.msra.mxu0 0.0
        %4076 = vmatprep.subr.mxu0 0.0
        %4077 = vmatpush1.msra.mxu0 0.0
        %4078 = vmatprep.subr.mxu0 0.0
        %4079 = vmatpush1.msra.mxu0 0.0
        %4080 = vmatprep.subr.mxu0 0.0
        %4081 = vmatpush1.msra.mxu0 0.0
        %4082 = vmatprep.subr.mxu0 0.0
        %4083 = vmatpush1.msra.mxu0 0.0
        %4084 = vmatprep.subr.mxu0 0.0
        %4085 = vmatpush1.msra.mxu0 0.0
        %4086 = vmatprep.subr.mxu0 0.0
        %4087 = vmatpush1.msra.mxu0 0.0
        %4088 = vmatprep.subr.mxu0 0.0
        %4089 = vmatpush1.msra.mxu0 0.0
        %4090 = vmatprep.subr.mxu0 0.0
        %4091 = vmatpush1.msra.mxu0 0.0
        %4092 = vmatprep.subr.mxu0 0.0
        %4093 = vmatpush1.msra.mxu0 0.0
        %4094 = vmatprep.subr.mxu0 0.0
        %4095 = vmatpush1.msra.mxu0 0.0
        %4096 = vmatprep.subr.mxu0 0.0
        %4097 = vmatpush1.msra.mxu0 0.0
        %4098 = vmatprep.subr.mxu0 0.0
        %4099 = vmatpush1.msra.mxu0 0.0
        %4100 = vmatprep.subr.mxu0 0.0
        %4101 = vmatpush1.msra.mxu0 0.0
        %4102 = vmatprep.subr.mxu0 0.0
        %4103 = vmatpush1.msra.mxu0 0.0
        %4104 = vmatprep.subr.mxu0 0.0
        %4105 = vmatpush1.msra.mxu0 0.0
        %4106 = vmatprep.subr.mxu0 0.0
        %4107 = vmatpush1.msra.mxu0 0.0
        %4108 = vmatprep.subr.mxu0 0.0
        %4109 = vmatpush1.msra.mxu0 0.0
        %4110 = vmatprep.subr.mxu0 0.0
        %4111 = vmatpush1.msra.mxu0 0.0
        %4112 = vmatprep.mubr.f32.mxu0 0.0
        %4113 = vmatmul.mubr.f32.gmra.mrb[0].mxu0 %v559
        %v4114 = vpop.f32.mrb[0].mxu0
        %v4115 = vadd.f32 0.0, %v4114
        %v4116 = vpop.f32.mrb[0].mxu0
        %4117 = vmatprep.mubr.f32.mxu0 0.0
        %4118 = vmatmul.mubr.f32.gmra.mrb[0].mxu0 %v562
        %v4119 = vpop.f32.mrb[0].mxu0
        %v4120 = vadd.f32 0.0, %v4119
        %v4121 = vpop.f32.mrb[0].mxu0
        %4122 = vmatprep.mubr.f32.mxu0 0.0
        %4123 = vmatmul.mubr.f32.gmra.mrb[0].mxu0 %v565
        %v4124 = vpop.f32.mrb[0].mxu0
        %v4125 = vadd.f32 0.0, %v4124
        %v4126 = vpop.f32.mrb[0].mxu0
        %4127 = vmatprep.mubr.f32.mxu0 0.0
        %4128 = vmatmul.mubr.f32.gmra.mrb[0].mxu0 %v568
        %v4129 = vpop.f32.mrb[0].mxu0
        %v4130 = vadd.f32 0.0, %v4129
        %v4131 = vpop.f32.mrb[0].mxu0
        %4132 = vdwg.mxu0
        %v4133 = vld [vmem:[#allocation9] sm:$0xff]
        %v4134 = vld [vmem:[#allocation9 + $0x8] sm:$0xff]
        %v4135 = vld [vmem:[#allocation9 + $0x10] sm:$0xff]
        %v4136 = vld [vmem:[#allocation9 + $0x18] sm:$0xff]
        %v4137 = vld [vmem:[#allocation9 + $0x20] sm:$0xff]
        %v4138 = vld [vmem:[#allocation9 + $0x28] sm:$0xff]
        %v4139 = vld [vmem:[#allocation9 + $0x30] sm:$0xff]
        %v4140 = vld [vmem:[#allocation9 + $0x38] sm:$0xff]
        %v4141 = vld [vmem:[#allocation9 + $0x40] sm:$0xff]
        %v4142 = vld [vmem:[#allocation9 + $0x48] sm:$0xff]
        %v4143 = vld [vmem:[#allocation9 + $0x50] sm:$0xff]
        %v4144 = vld [vmem:[#allocation9 + $0x58] sm:$0xff]
        %v4145 = vld [vmem:[#allocation9 + $0x60] sm:$0xff]
        %v4146 = vld [vmem:[#allocation9 + $0x68] sm:$0xff]
        %v4147 = vld [vmem:[#allocation9 + $0x70] sm:$0xff]
        %v4148 = vld [vmem:[#allocation9 + $0x78] sm:$0xff]
        %v4149 = vld [vmem:[%s671] sm:$0xff]
        %v4150 = vld [vmem:[%s671 + $0x8] sm:$0xff]
        %v4151 = vld [vmem:[%s671 + $0x10] sm:$0xff]
        %v4152 = vld [vmem:[%s671 + $0x18] sm:$0xff]
        %v4153 = vld [vmem:[%s671 + $0x20] sm:$0xff]
        %v4154 = vld [vmem:[%s671 + $0x28] sm:$0xff]
        %v4155 = vld [vmem:[%s671 + $0x30] sm:$0xff]
        %v4156 = vld [vmem:[%s671 + $0x38] sm:$0xff]
        %v4157 = vld [vmem:[%s671 + $0x40] sm:$0xff]
        %v4158 = vld [vmem:[%s671 + $0x48] sm:$0xff]
        %v4159 = vld [vmem:[%s671 + $0x50] sm:$0xff]
        %v4160 = vld [vmem:[%s671 + $0x58] sm:$0xff]
        %v4161 = vld [vmem:[%s671 + $0x60] sm:$0xff]
        %v4162 = vld [vmem:[%s671 + $0x68] sm:$0xff]
        %v4163 = vld [vmem:[%s671 + $0x70] sm:$0xff]
        %v4164 = vld [vmem:[%s671 + $0x78] sm:$0xff]
        %v4166 = vsel %vm688, %v4115, 0
        %v4169 = vsel %vm688, %v4120, 0
        %4171 = vmatprep.subr.mxu0 %v4150
        %4172 = vmatpush1.msra.mxu0 %v4149
        %4173 = vmatprep.subr.mxu0 %v4154
        %4174 = vmatpush1.msra.mxu0 %v4153
        %4175 = vmatprep.subr.mxu0 %v4158
        %4176 = vmatpush1.msra.mxu0 %v4157
        %4177 = vmatprep.subr.mxu0 %v4162
        %4178 = vmatpush1.msra.mxu0 %v4161
        %4179 = vmatprep.subr.mxu0 0.0
        %4180 = vmatpush1.msra.mxu0 0.0
        %4181 = vmatprep.subr.mxu0 0.0
        %4182 = vmatpush1.msra.mxu0 0.0
        %4183 = vmatprep.subr.mxu0 0.0
        %4184 = vmatpush1.msra.mxu0 0.0
        %4185 = vmatprep.subr.mxu0 0.0
        %4186 = vmatpush1.msra.mxu0 0.0
        %4187 = vmatprep.subr.mxu0 0.0
        %4188 = vmatpush1.msra.mxu0 0.0
        %4189 = vmatprep.subr.mxu0 0.0
        %4190 = vmatpush1.msra.mxu0 0.0
        %4191 = vmatprep.subr.mxu0 0.0
        %4192 = vmatpush1.msra.mxu0 0.0
        %4193 = vmatprep.subr.mxu0 0.0
        %4194 = vmatpush1.msra.mxu0 0.0
        %4195 = vmatprep.subr.mxu0 0.0
        %4196 = vmatpush1.msra.mxu0 0.0
        %4197 = vmatprep.subr.mxu0 0.0
        %4198 = vmatpush1.msra.mxu0 0.0
        %4199 = vmatprep.subr.mxu0 0.0
        %4200 = vmatpush1.msra.mxu0 0.0
        %4201 = vmatprep.subr.mxu0 0.0
        %4202 = vmatpush1.msra.mxu0 0.0
        %4203 = vmatprep.subr.mxu0 0.0
        %4204 = vmatpush1.msra.mxu0 0.0
        %4205 = vmatprep.subr.mxu0 0.0
        %4206 = vmatpush1.msra.mxu0 0.0
        %4207 = vmatprep.subr.mxu0 0.0
        %4208 = vmatpush1.msra.mxu0 0.0
        %4209 = vmatprep.subr.mxu0 0.0
        %4210 = vmatpush1.msra.mxu0 0.0
        %4211 = vmatprep.subr.mxu0 0.0
        %4212 = vmatpush1.msra.mxu0 0.0
        %4213 = vmatprep.subr.mxu0 0.0
        %4214 = vmatpush1.msra.mxu0 0.0
        %4215 = vmatprep.subr.mxu0 0.0
        %4216 = vmatpush1.msra.mxu0 0.0
        %4217 = vmatprep.subr.mxu0 0.0
        %4218 = vmatpush1.msra.mxu0 0.0
        %4219 = vmatprep.subr.mxu0 0.0
        %4220 = vmatpush1.msra.mxu0 0.0
        %4221 = vmatprep.subr.mxu0 0.0
        %4222 = vmatpush1.msra.mxu0 0.0
        %4223 = vmatprep.subr.mxu0 0.0
        %4224 = vmatpush1.msra.mxu0 0.0
        %4225 = vmatprep.subr.mxu0 0.0
        %4226 = vmatpush1.msra.mxu0 0.0
        %4227 = vmatprep.subr.mxu0 0.0
        %4228 = vmatpush1.msra.mxu0 0.0
        %4229 = vmatprep.subr.mxu0 0.0
        %4230 = vmatpush1.msra.mxu0 0.0
        %4231 = vmatprep.subr.mxu0 0.0
        %4232 = vmatpush1.msra.mxu0 0.0
        %4233 = vmatprep.subr.mxu0 0.0
        %4234 = vmatpush1.msra.mxu0 0.0
        %4235 = vmatprep.mubr.f32.mxu0 0.0
        %4236 = vmatmul.mubr.f32.gmra.mrb[0].mxu0 %v4166
        %v4237 = vpop.f32.mrb[0].mxu0
        %v4238 = vadd.f32 0.0, %v4237
        %v4239 = vpop.f32.mrb[0].mxu0
        %v4240 = vadd.f32 0.0, %v4239
        %4241 = vmatprep.mubr.f32.mxu0 0.0
        %4242 = vmatmul.mubr.f32.gmra.mrb[0].mxu0 %v4169
        %v4243 = vpop.f32.mrb[0].mxu0
        %v4244 = vadd.f32 0.0, %v4243
        %v4245 = vpop.f32.mrb[0].mxu0
        %v4246 = vadd.f32 0.0, %v4245
        %4247 = vdwg.mxu0
        %4248 = vmatprep.subr.mxu0 %v4152
        %4249 = vmatpush1.msra.mxu0 %v4151
        %4250 = vmatprep.subr.mxu0 %v4156
        %4251 = vmatpush1.msra.mxu0 %v4155
        %4252 = vmatprep.subr.mxu0 %v4160
        %4253 = vmatpush1.msra.mxu0 %v4159
        %4254 = vmatprep.subr.mxu0 %v4164
        %4255 = vmatpush1.msra.mxu0 %v4163
        %4256 = vmatprep.subr.mxu0 0.0
        %4257 = vmatpush1.msra.mxu0 0.0
        %4258 = vmatprep.subr.mxu0 0.0
        %4259 = vmatpush1.msra.mxu0 0.0
        %4260 = vmatprep.subr.mxu0 0.0
        %4261 = vmatpush1.msra.mxu0 0.0
        %4262 = vmatprep.subr.mxu0 0.0
        %4263 = vmatpush1.msra.mxu0 0.0
        %4264 = vmatprep.subr.mxu0 0.0
        %4265 = vmatpush1.msra.mxu0 0.0
        %4266 = vmatprep.subr.mxu0 0.0
        %4267 = vmatpush1.msra.mxu0 0.0
        %4268 = vmatprep.subr.mxu0 0.0
        %4269 = vmatpush1.msra.mxu0 0.0
        %4270 = vmatprep.subr.mxu0 0.0
        %4271 = vmatpush1.msra.mxu0 0.0
        %4272 = vmatprep.subr.mxu0 0.0
        %4273 = vmatpush1.msra.mxu0 0.0
        %4274 = vmatprep.subr.mxu0 0.0
        %4275 = vmatpush1.msra.mxu0 0.0
        %4276 = vmatprep.subr.mxu0 0.0
        %4277 = vmatpush1.msra.mxu0 0.0
        %4278 = vmatprep.subr.mxu0 0.0
        %4279 = vmatpush1.msra.mxu0 0.0
        %4280 = vmatprep.subr.mxu0 0.0
        %4281 = vmatpush1.msra.mxu0 0.0
        %4282 = vmatprep.subr.mxu0 0.0
        %4283 = vmatpush1.msra.mxu0 0.0
        %4284 = vmatprep.subr.mxu0 0.0
        %4285 = vmatpush1.msra.mxu0 0.0
        %4286 = vmatprep.subr.mxu0 0.0
        %4287 = vmatpush1.msra.mxu0 0.0
        %4288 = vmatprep.subr.mxu0 0.0
        %4289 = vmatpush1.msra.mxu0 0.0
        %4290 = vmatprep.subr.mxu0 0.0
        %4291 = vmatpush1.msra.mxu0 0.0
        %4292 = vmatprep.subr.mxu0 0.0
        %4293 = vmatpush1.msra.mxu0 0.0
        %4294 = vmatprep.subr.mxu0 0.0
        %4295 = vmatpush1.msra.mxu0 0.0
        %4296 = vmatprep.subr.mxu0 0.0
        %4297 = vmatpush1.msra.mxu0 0.0
        %4298 = vmatprep.subr.mxu0 0.0
        %4299 = vmatpush1.msra.mxu0 0.0
        %4300 = vmatprep.subr.mxu0 0.0
        %4301 = vmatpush1.msra.mxu0 0.0
        %4302 = vmatprep.subr.mxu0 0.0
        %4303 = vmatpush1.msra.mxu0 0.0
        %4304 = vmatprep.subr.mxu0 0.0
        %4305 = vmatpush1.msra.mxu0 0.0
        %4306 = vmatprep.subr.mxu0 0.0
        %4307 = vmatpush1.msra.mxu0 0.0
        %4308 = vmatprep.subr.mxu0 0.0
        %4309 = vmatpush1.msra.mxu0 0.0
        %4310 = vmatprep.subr.mxu0 0.0
        %4311 = vmatpush1.msra.mxu0 0.0
        %4312 = vmatprep.mubr.f32.mxu0 0.0
        %4313 = vmatmul.mubr.f32.gmra.mrb[0].mxu0 %v4166
        %v4314 = vpop.f32.mrb[0].mxu0
        %v4315 = vadd.f32 0.0, %v4314
        %v4316 = vpop.f32.mrb[0].mxu0
        %v4317 = vadd.f32 0.0, %v4316
        %4318 = vmatprep.mubr.f32.mxu0 0.0
        %4319 = vmatmul.mubr.f32.gmra.mrb[0].mxu0 %v4169
        %v4320 = vpop.f32.mrb[0].mxu0
        %v4321 = vadd.f32 0.0, %v4320
        %v4322 = vpop.f32.mrb[0].mxu0
        %v4323 = vadd.f32 0.0, %v4322
        %4324 = vdwg.mxu0
        %v4326 = vsel %vm688, %v4046, 0
        %v4329 = vsel %vm688, %v4047, 0
        %4331 = vmatprep.subr.mxu0 %v4134
        %4332 = vmatpush1.msra.mxu0 %v4133
        %4333 = vmatprep.subr.mxu0 %v4138
        %4334 = vmatpush1.msra.mxu0 %v4137
        %4335 = vmatprep.subr.mxu0 %v4142
        %4336 = vmatpush1.msra.mxu0 %v4141
        %4337 = vmatprep.subr.mxu0 %v4146
        %4338 = vmatpush1.msra.mxu0 %v4145
        %4339 = vmatprep.subr.mxu0 0.0
        %4340 = vmatpush1.msra.mxu0 0.0
        %4341 = vmatprep.subr.mxu0 0.0
        %4342 = vmatpush1.msra.mxu0 0.0
        %4343 = vmatprep.subr.mxu0 0.0
        %4344 = vmatpush1.msra.mxu0 0.0
        %4345 = vmatprep.subr.mxu0 0.0
        %4346 = vmatpush1.msra.mxu0 0.0
        %4347 = vmatprep.subr.mxu0 0.0
        %4348 = vmatpush1.msra.mxu0 0.0
        %4349 = vmatprep.subr.mxu0 0.0
        %4350 = vmatpush1.msra.mxu0 0.0
        %4351 = vmatprep.subr.mxu0 0.0
        %4352 = vmatpush1.msra.mxu0 0.0
        %4353 = vmatprep.subr.mxu0 0.0
        %4354 = vmatpush1.msra.mxu0 0.0
        %4355 = vmatprep.subr.mxu0 0.0
        %4356 = vmatpush1.msra.mxu0 0.0
        %4357 = vmatprep.subr.mxu0 0.0
        %4358 = vmatpush1.msra.mxu0 0.0
        %4359 = vmatprep.subr.mxu0 0.0
        %4360 = vmatpush1.msra.mxu0 0.0
        %4361 = vmatprep.subr.mxu0 0.0
        %4362 = vmatpush1.msra.mxu0 0.0
        %4363 = vmatprep.subr.mxu0 0.0
        %4364 = vmatpush1.msra.mxu0 0.0
        %4365 = vmatprep.subr.mxu0 0.0
        %4366 = vmatpush1.msra.mxu0 0.0
        %4367 = vmatprep.subr.mxu0 0.0
        %4368 = vmatpush1.msra.mxu0 0.0
        %4369 = vmatprep.subr.mxu0 0.0
        %4370 = vmatpush1.msra.mxu0 0.0
        %4371 = vmatprep.subr.mxu0 0.0
        %4372 = vmatpush1.msra.mxu0 0.0
        %4373 = vmatprep.subr.mxu0 0.0
        %4374 = vmatpush1.msra.mxu0 0.0
        %4375 = vmatprep.subr.mxu0 0.0
        %4376 = vmatpush1.msra.mxu0 0.0
        %4377 = vmatprep.subr.mxu0 0.0
        %4378 = vmatpush1.msra.mxu0 0.0
        %4379 = vmatprep.subr.mxu0 0.0
        %4380 = vmatpush1.msra.mxu0 0.0
        %4381 = vmatprep.subr.mxu0 0.0
        %4382 = vmatpush1.msra.mxu0 0.0
        %4383 = vmatprep.subr.mxu0 0.0
        %4384 = vmatpush1.msra.mxu0 0.0
        %4385 = vmatprep.subr.mxu0 0.0
        %4386 = vmatpush1.msra.mxu0 0.0
        %4387 = vmatprep.subr.mxu0 0.0
        %4388 = vmatpush1.msra.mxu0 0.0
        %4389 = vmatprep.subr.mxu0 0.0
        %4390 = vmatpush1.msra.mxu0 0.0
        %4391 = vmatprep.subr.mxu0 0.0
        %4392 = vmatpush1.msra.mxu0 0.0
        %4393 = vmatprep.subr.mxu0 0.0
        %4394 = vmatpush1.msra.mxu0 0.0
        %4395 = vmatprep.mubr.f32.mxu0 0.0
        %4396 = vmatmul.mubr.f32.gmra.mrb[0].mxu0 %v4326
        %v4397 = vpop.f32.mrb[0].mxu0
        %v4398 = vadd.f32 %v4238, %v4397
        %v4399 = vpop.f32.mrb[0].mxu0
        %v4400 = vadd.f32 %v4240, %v4399
        %4401 = vmatprep.mubr.f32.mxu0 0.0
        %4402 = vmatmul.mubr.f32.gmra.mrb[0].mxu0 %v4329
        %v4403 = vpop.f32.mrb[0].mxu0
        %v4404 = vadd.f32 %v4244, %v4403
        %v4405 = vpop.f32.mrb[0].mxu0
        %v4406 = vadd.f32 %v4246, %v4405
        %4407 = vdwg.mxu0
        %4408 = vmatprep.subr.mxu0 %v4136
        %4409 = vmatpush1.msra.mxu0 %v4135
        %4410 = vmatprep.subr.mxu0 %v4140
        %4411 = vmatpush1.msra.mxu0 %v4139
        %4412 = vmatprep.subr.mxu0 %v4144
        %4413 = vmatpush1.msra.mxu0 %v4143
        %4414 = vmatprep.subr.mxu0 %v4148
        %4415 = vmatpush1.msra.mxu0 %v4147
        %4416 = vmatprep.subr.mxu0 0.0
        %4417 = vmatpush1.msra.mxu0 0.0
        %4418 = vmatprep.subr.mxu0 0.0
        %4419 = vmatpush1.msra.mxu0 0.0
        %4420 = vmatprep.subr.mxu0 0.0
        %4421 = vmatpush1.msra.mxu0 0.0
        %4422 = vmatprep.subr.mxu0 0.0
        %4423 = vmatpush1.msra.mxu0 0.0
        %4424 = vmatprep.subr.mxu0 0.0
        %4425 = vmatpush1.msra.mxu0 0.0
        %4426 = vmatprep.subr.mxu0 0.0
        %4427 = vmatpush1.msra.mxu0 0.0
        %4428 = vmatprep.subr.mxu0 0.0
        %4429 = vmatpush1.msra.mxu0 0.0
        %4430 = vmatprep.subr.mxu0 0.0
        %4431 = vmatpush1.msra.mxu0 0.0
        %4432 = vmatprep.subr.mxu0 0.0
        %4433 = vmatpush1.msra.mxu0 0.0
        %4434 = vmatprep.subr.mxu0 0.0
        %4435 = vmatpush1.msra.mxu0 0.0
        %4436 = vmatprep.subr.mxu0 0.0
        %4437 = vmatpush1.msra.mxu0 0.0
        %4438 = vmatprep.subr.mxu0 0.0
        %4439 = vmatpush1.msra.mxu0 0.0
        %4440 = vmatprep.subr.mxu0 0.0
        %4441 = vmatpush1.msra.mxu0 0.0
        %4442 = vmatprep.subr.mxu0 0.0
        %4443 = vmatpush1.msra.mxu0 0.0
        %4444 = vmatprep.subr.mxu0 0.0
        %4445 = vmatpush1.msra.mxu0 0.0
        %4446 = vmatprep.subr.mxu0 0.0
        %4447 = vmatpush1.msra.mxu0 0.0
        %4448 = vmatprep.subr.mxu0 0.0
        %4449 = vmatpush1.msra.mxu0 0.0
        %4450 = vmatprep.subr.mxu0 0.0
        %4451 = vmatpush1.msra.mxu0 0.0
        %4452 = vmatprep.subr.mxu0 0.0
        %4453 = vmatpush1.msra.mxu0 0.0
        %4454 = vmatprep.subr.mxu0 0.0
        %4455 = vmatpush1.msra.mxu0 0.0
        %4456 = vmatprep.subr.mxu0 0.0
        %4457 = vmatpush1.msra.mxu0 0.0
        %4458 = vmatprep.subr.mxu0 0.0
        %4459 = vmatpush1.msra.mxu0 0.0
        %4460 = vmatprep.subr.mxu0 0.0
        %4461 = vmatpush1.msra.mxu0 0.0
        %4462 = vmatprep.subr.mxu0 0.0
        %4463 = vmatpush1.msra.mxu0 0.0
        %4464 = vmatprep.subr.mxu0 0.0
        %4465 = vmatpush1.msra.mxu0 0.0
        %4466 = vmatprep.subr.mxu0 0.0
        %4467 = vmatpush1.msra.mxu0 0.0
        %4468 = vmatprep.subr.mxu0 0.0
        %4469 = vmatpush1.msra.mxu0 0.0
        %4470 = vmatprep.subr.mxu0 0.0
        %4471 = vmatpush1.msra.mxu0 0.0
        %4472 = vmatprep.mubr.f32.mxu0 0.0
        %4473 = vmatmul.mubr.f32.gmra.mrb[0].mxu0 %v4326
        %v4474 = vpop.f32.mrb[0].mxu0
        %v4475 = vadd.f32 %v4315, %v4474
        %v4476 = vpop.f32.mrb[0].mxu0
        %v4477 = vadd.f32 %v4317, %v4476
        %4478 = vmatprep.mubr.f32.mxu0 0.0
        %4479 = vmatmul.mubr.f32.gmra.mrb[0].mxu0 %v4329
        %v4480 = vpop.f32.mrb[0].mxu0
        %v4481 = vadd.f32 %v4321, %v4480
        %v4482 = vpop.f32.mrb[0].mxu0
        %v4483 = vadd.f32 %v4323, %v4482
        %4484 = vdwg.mxu0
        %v4485 = vld [vmem:[%s1009] sm:$0xff]
        %v4486 = vld [vmem:[%s1009 + $0x8] sm:$0xff]
        %v4487 = vld [vmem:[%s1009 + $0x10] sm:$0xff]
        %v4488 = vld [vmem:[%s1009 + $0x18] sm:$0xff]
        %v4489 = vld [vmem:[%s1009 + $0x20] sm:$0xff]
        %v4490 = vld [vmem:[%s1009 + $0x28] sm:$0xff]
        %v4491 = vld [vmem:[%s1009 + $0x30] sm:$0xff]
        %v4492 = vld [vmem:[%s1009 + $0x38] sm:$0xff]
        %v4493 = vld [vmem:[%s1009 + $0x40] sm:$0xff]
        %v4494 = vld [vmem:[%s1009 + $0x48] sm:$0xff]
        %v4495 = vld [vmem:[%s1009 + $0x50] sm:$0xff]
        %v4496 = vld [vmem:[%s1009 + $0x58] sm:$0xff]
        %v4497 = vld [vmem:[%s1009 + $0x60] sm:$0xff]
        %v4498 = vld [vmem:[%s1009 + $0x68] sm:$0xff]
        %v4499 = vld [vmem:[%s1009 + $0x70] sm:$0xff]
        %v4500 = vld [vmem:[%s1009 + $0x78] sm:$0xff]
        %v4502 = vsel %vm688, %v4125, 0
        %v4505 = vsel %vm688, %v4130, 0
        %4507 = vmatprep.subr.mxu0 %v4486
        %4508 = vmatpush1.msra.mxu0 %v4485
        %4509 = vmatprep.subr.mxu0 %v4490
        %4510 = vmatpush1.msra.mxu0 %v4489
        %4511 = vmatprep.subr.mxu0 %v4494
        %4512 = vmatpush1.msra.mxu0 %v4493
        %4513 = vmatprep.subr.mxu0 %v4498
        %4514 = vmatpush1.msra.mxu0 %v4497
        %4515 = vmatprep.subr.mxu0 0.0
        %4516 = vmatpush1.msra.mxu0 0.0
        %4517 = vmatprep.subr.mxu0 0.0
        %4518 = vmatpush1.msra.mxu0 0.0
        %4519 = vmatprep.subr.mxu0 0.0
        %4520 = vmatpush1.msra.mxu0 0.0
        %4521 = vmatprep.subr.mxu0 0.0
        %4522 = vmatpush1.msra.mxu0 0.0
        %4523 = vmatprep.subr.mxu0 0.0
        %4524 = vmatpush1.msra.mxu0 0.0
        %4525 = vmatprep.subr.mxu0 0.0
        %4526 = vmatpush1.msra.mxu0 0.0
        %4527 = vmatprep.subr.mxu0 0.0
        %4528 = vmatpush1.msra.mxu0 0.0
        %4529 = vmatprep.subr.mxu0 0.0
        %4530 = vmatpush1.msra.mxu0 0.0
        %4531 = vmatprep.subr.mxu0 0.0
        %4532 = vmatpush1.msra.mxu0 0.0
        %4533 = vmatprep.subr.mxu0 0.0
        %4534 = vmatpush1.msra.mxu0 0.0
        %4535 = vmatprep.subr.mxu0 0.0
        %4536 = vmatpush1.msra.mxu0 0.0
        %4537 = vmatprep.subr.mxu0 0.0
        %4538 = vmatpush1.msra.mxu0 0.0
        %4539 = vmatprep.subr.mxu0 0.0
        %4540 = vmatpush1.msra.mxu0 0.0
        %4541 = vmatprep.subr.mxu0 0.0
        %4542 = vmatpush1.msra.mxu0 0.0
        %4543 = vmatprep.subr.mxu0 0.0
        %4544 = vmatpush1.msra.mxu0 0.0
        %4545 = vmatprep.subr.mxu0 0.0
        %4546 = vmatpush1.msra.mxu0 0.0
        %4547 = vmatprep.subr.mxu0 0.0
        %4548 = vmatpush1.msra.mxu0 0.0
        %4549 = vmatprep.subr.mxu0 0.0
        %4550 = vmatpush1.msra.mxu0 0.0
        %4551 = vmatprep.subr.mxu0 0.0
        %4552 = vmatpush1.msra.mxu0 0.0
        %4553 = vmatprep.subr.mxu0 0.0
        %4554 = vmatpush1.msra.mxu0 0.0
        %4555 = vmatprep.subr.mxu0 0.0
        %4556 = vmatpush1.msra.mxu0 0.0
        %4557 = vmatprep.subr.mxu0 0.0
        %4558 = vmatpush1.msra.mxu0 0.0
        %4559 = vmatprep.subr.mxu0 0.0
        %4560 = vmatpush1.msra.mxu0 0.0
        %4561 = vmatprep.subr.mxu0 0.0
        %4562 = vmatpush1.msra.mxu0 0.0
        %4563 = vmatprep.subr.mxu0 0.0
        %4564 = vmatpush1.msra.mxu0 0.0
        %4565 = vmatprep.subr.mxu0 0.0
        %4566 = vmatpush1.msra.mxu0 0.0
        %4567 = vmatprep.subr.mxu0 0.0
        %4568 = vmatpush1.msra.mxu0 0.0
        %4569 = vmatprep.subr.mxu0 0.0
        %4570 = vmatpush1.msra.mxu0 0.0
        %4571 = vmatprep.mubr.f32.mxu0 0.0
        %4572 = vmatmul.mubr.f32.gmra.mrb[0].mxu0 %v4502
        %v4573 = vpop.f32.mrb[0].mxu0
        %v4574 = vadd.f32 0.0, %v4573
        %v4575 = vpop.f32.mrb[0].mxu0
        %v4576 = vadd.f32 0.0, %v4575
        %4577 = vmatprep.mubr.f32.mxu0 0.0
        %4578 = vmatmul.mubr.f32.gmra.mrb[0].mxu0 %v4505
        %v4579 = vpop.f32.mrb[0].mxu0
        %v4580 = vadd.f32 0.0, %v4579
        %v4581 = vpop.f32.mrb[0].mxu0
        %v4582 = vadd.f32 0.0, %v4581
        %4583 = vdwg.mxu0
        %4584 = vmatprep.subr.mxu0 %v4488
        %4585 = vmatpush1.msra.mxu0 %v4487
        %4586 = vmatprep.subr.mxu0 %v4492
        %4587 = vmatpush1.msra.mxu0 %v4491
        %4588 = vmatprep.subr.mxu0 %v4496
        %4589 = vmatpush1.msra.mxu0 %v4495
        %4590 = vmatprep.subr.mxu0 %v4500
        %4591 = vmatpush1.msra.mxu0 %v4499
        %4592 = vmatprep.subr.mxu0 0.0
        %4593 = vmatpush1.msra.mxu0 0.0
        %4594 = vmatprep.subr.mxu0 0.0
        %4595 = vmatpush1.msra.mxu0 0.0
        %4596 = vmatprep.subr.mxu0 0.0
        %4597 = vmatpush1.msra.mxu0 0.0
        %4598 = vmatprep.subr.mxu0 0.0
        %4599 = vmatpush1.msra.mxu0 0.0
        %4600 = vmatprep.subr.mxu0 0.0
        %4601 = vmatpush1.msra.mxu0 0.0
        %4602 = vmatprep.subr.mxu0 0.0
        %4603 = vmatpush1.msra.mxu0 0.0
        %4604 = vmatprep.subr.mxu0 0.0
        %4605 = vmatpush1.msra.mxu0 0.0
        %4606 = vmatprep.subr.mxu0 0.0
        %4607 = vmatpush1.msra.mxu0 0.0
        %4608 = vmatprep.subr.mxu0 0.0
        %4609 = vmatpush1.msra.mxu0 0.0
        %4610 = vmatprep.subr.mxu0 0.0
        %4611 = vmatpush1.msra.mxu0 0.0
        %4612 = vmatprep.subr.mxu0 0.0
        %4613 = vmatpush1.msra.mxu0 0.0
        %4614 = vmatprep.subr.mxu0 0.0
        %4615 = vmatpush1.msra.mxu0 0.0
        %4616 = vmatprep.subr.mxu0 0.0
        %4617 = vmatpush1.msra.mxu0 0.0
        %4618 = vmatprep.subr.mxu0 0.0
        %4619 = vmatpush1.msra.mxu0 0.0
        %4620 = vmatprep.subr.mxu0 0.0
        %4621 = vmatpush1.msra.mxu0 0.0
        %4622 = vmatprep.subr.mxu0 0.0
        %4623 = vmatpush1.msra.mxu0 0.0
        %4624 = vmatprep.subr.mxu0 0.0
        %4625 = vmatpush1.msra.mxu0 0.0
        %4626 = vmatprep.subr.mxu0 0.0
        %4627 = vmatpush1.msra.mxu0 0.0
        %4628 = vmatprep.subr.mxu0 0.0
        %4629 = vmatpush1.msra.mxu0 0.0
        %4630 = vmatprep.subr.mxu0 0.0
        %4631 = vmatpush1.msra.mxu0 0.0
        %4632 = vmatprep.subr.mxu0 0.0
        %4633 = vmatpush1.msra.mxu0 0.0
        %4634 = vmatprep.subr.mxu0 0.0
        %4635 = vmatpush1.msra.mxu0 0.0
        %4636 = vmatprep.subr.mxu0 0.0
        %4637 = vmatpush1.msra.mxu0 0.0
        %4638 = vmatprep.subr.mxu0 0.0
        %4639 = vmatpush1.msra.mxu0 0.0
        %4640 = vmatprep.subr.mxu0 0.0
        %4641 = vmatpush1.msra.mxu0 0.0
        %4642 = vmatprep.subr.mxu0 0.0
        %4643 = vmatpush1.msra.mxu0 0.0
        %4644 = vmatprep.subr.mxu0 0.0
        %4645 = vmatpush1.msra.mxu0 0.0
        %4646 = vmatprep.subr.mxu0 0.0
        %4647 = vmatpush1.msra.mxu0 0.0
        %4648 = vmatprep.mubr.f32.mxu0 0.0
        %4649 = vmatmul.mubr.f32.gmra.mrb[0].mxu0 %v4502
        %v4650 = vpop.f32.mrb[0].mxu0
        %v4651 = vadd.f32 0.0, %v4650
        %v4652 = vpop.f32.mrb[0].mxu0
        %v4653 = vadd.f32 0.0, %v4652
        %4654 = vmatprep.mubr.f32.mxu0 0.0
        %4655 = vmatmul.mubr.f32.gmra.mrb[0].mxu0 %v4505
        %v4656 = vpop.f32.mrb[0].mxu0
        %v4657 = vadd.f32 0.0, %v4656
        %v4658 = vpop.f32.mrb[0].mxu0
        %v4659 = vadd.f32 0.0, %v4658
        %4660 = vdwg.mxu0
        %v4661 = vadd.f32 %v4398, %v4574
        %v4662 = vadd.f32 %v4400, %v4576
        %v4663 = vadd.f32 %v4475, %v4651
        %v4664 = vadd.f32 %v4477, %v4653
        %v4665 = vadd.f32 %v4404, %v4580
        %v4666 = vadd.f32 %v4406, %v4582
        %v4667 = vadd.f32 %v4481, %v4657
        %v4668 = vadd.f32 %v4483, %v4659
        %v4669 = vmul.f32 %v4661, %v539
        %v4670 = vmul.f32 %v4662, %v540
        %v4671 = vmul.f32 %v4663, %v541
        %v4672 = vmul.f32 %v4664, %v542
        %v4673 = vmul.f32 %v4665, %v543
        %v4674 = vmul.f32 %v4666, %v544
        %v4675 = vmul.f32 %v4667, %v545
        %v4676 = vmul.f32 %v4668, %v546
        %4679 = vrot.lane.b32.xlu0 %v4669, 64
        %v4680 = vpop.permute.xlu0 %4679
        %4681 = vrot.lane.b32.xlu0 %v4673, 64
        %v4682 = vpop.permute.xlu0 %4681
        %v4685 = vadd.f32 %v4669, %v4680
        %v4686 = vadd.f32 %v4673, %v4682
        %v4687 = vadd.f32 %v4685, %v4670
        %v4688 = vadd.f32 %v4686, %v4674
        %4691 = vrot.lane.b32.xlu0 %v4670, 64
        %v4692 = vpop.permute.xlu0 %4691
        %4693 = vrot.lane.b32.xlu0 %v4674, 64
        %v4694 = vpop.permute.xlu0 %4693
        %v4697 = vadd.f32 %v4687, %v4692
        %v4698 = vadd.f32 %v4688, %v4694
        %v4699 = vadd.f32 %v4697, %v4671
        %v4700 = vadd.f32 %v4698, %v4675
        %4703 = vrot.lane.b32.xlu0 %v4671, 64
        %v4704 = vpop.permute.xlu0 %4703
        %4705 = vrot.lane.b32.xlu0 %v4675, 64
        %v4706 = vpop.permute.xlu0 %4705
        %v4709 = vadd.f32 %v4699, %v4704
        %v4710 = vadd.f32 %v4700, %v4706
        %v4711 = vadd.f32 %v4709, %v4672
        %v4712 = vadd.f32 %v4710, %v4676
        %4715 = vrot.lane.b32.xlu0 %v4672, 64
        %v4716 = vpop.permute.xlu0 %4715
        %4717 = vrot.lane.b32.xlu0 %v4676, 64
        %v4718 = vpop.permute.xlu0 %4717
        %v4721 = vadd.f32 %v4711, %v4716
        %v4722 = vadd.f32 %v4712, %v4718
        %v4723 = vadd.f32 %v4721, %v4041
        %v4724 = vadd.f32 %v4722, %v4042
        %v4725 = vxor.u32 %v4723, 2147483648
        %v4726 = vxor.u32 %v4724, 2147483648
        %v4727 = vmul.f32 %v4725, 1.442695
        %v4728 = vpow.pop %v4727
        %v4729 = vmul.f32 %v4726, 1.442695
        %v4730 = vpow.pop %v4729
        %v4731 = vadd.f32 %v4728, 1.0
        %v4732 = vadd.f32 %v4730, 1.0
        %v4733 = vrcp.pop %v4731
        %v4734 = vmul.f32 1.0, %v4733
        %v4735 = vrcp.pop %v4732
        %v4736 = vmul.f32 1.0, %v4735
        %v4737 = vmul.f32 %v4734, %v4046
        %v4738 = vmul.f32 %v4736, %v4047
        %4739 = vmatprep.subr.mxu0 0.0
        %4740 = vmatpush1.msra.mxu0 %v4737
        %4741 = vmatprep.subr.mxu0 0.0
        %4742 = vmatpush1.msra.mxu0 %v4738
        %4743 = vmatprep.subr.mxu0 0.0
        %4744 = vmatpush1.msra.mxu0 0.0
        %4745 = vmatprep.subr.mxu0 0.0
        %4746 = vmatpush1.msra.mxu0 0.0
        %4747 = vmatprep.subr.mxu0 0.0
        %4748 = vmatpush1.msra.mxu0 0.0
        %4749 = vmatprep.subr.mxu0 0.0
        %4750 = vmatpush1.msra.mxu0 0.0
        %4751 = vmatprep.subr.mxu0 0.0
        %4752 = vmatpush1.msra.mxu0 0.0
        %4753 = vmatprep.subr.mxu0 0.0
        %4754 = vmatpush1.msra.mxu0 0.0
        %4755 = vmatprep.subr.mxu0 0.0
        %4756 = vmatpush1.msra.mxu0 0.0
        %4757 = vmatprep.subr.mxu0 0.0
        %4758 = vmatpush1.msra.mxu0 0.0
        %4759 = vmatprep.subr.mxu0 0.0
        %4760 = vmatpush1.msra.mxu0 0.0
        %4761 = vmatprep.subr.mxu0 0.0
        %4762 = vmatpush1.msra.mxu0 0.0
        %4763 = vmatprep.subr.mxu0 0.0
        %4764 = vmatpush1.msra.mxu0 0.0
        %4765 = vmatprep.subr.mxu0 0.0
        %4766 = vmatpush1.msra.mxu0 0.0
        %4767 = vmatprep.subr.mxu0 0.0
        %4768 = vmatpush1.msra.mxu0 0.0
        %4769 = vmatprep.subr.mxu0 0.0
        %4770 = vmatpush1.msra.mxu0 0.0
        %4771 = vmatprep.subr.mxu0 0.0
        %4772 = vmatpush1.msra.mxu0 0.0
        %4773 = vmatprep.subr.mxu0 0.0
        %4774 = vmatpush1.msra.mxu0 0.0
        %4775 = vmatprep.subr.mxu0 0.0
        %4776 = vmatpush1.msra.mxu0 0.0
        %4777 = vmatprep.subr.mxu0 0.0
        %4778 = vmatpush1.msra.mxu0 0.0
        %4779 = vmatprep.subr.mxu0 0.0
        %4780 = vmatpush1.msra.mxu0 0.0
        %4781 = vmatprep.subr.mxu0 0.0
        %4782 = vmatpush1.msra.mxu0 0.0
        %4783 = vmatprep.subr.mxu0 0.0
        %4784 = vmatpush1.msra.mxu0 0.0
        %4785 = vmatprep.subr.mxu0 0.0
        %4786 = vmatpush1.msra.mxu0 0.0
        %4787 = vmatprep.subr.mxu0 0.0
        %4788 = vmatpush1.msra.mxu0 0.0
        %4789 = vmatprep.subr.mxu0 0.0
        %4790 = vmatpush1.msra.mxu0 0.0
        %4791 = vmatprep.subr.mxu0 0.0
        %4792 = vmatpush1.msra.mxu0 0.0
        %4793 = vmatprep.subr.mxu0 0.0
        %4794 = vmatpush1.msra.mxu0 0.0
        %4795 = vmatprep.subr.mxu0 0.0
        %4796 = vmatpush1.msra.mxu0 0.0
        %4797 = vmatprep.subr.mxu0 0.0
        %4798 = vmatpush1.msra.mxu0 0.0
        %4799 = vmatprep.subr.mxu0 0.0
        %4800 = vmatpush1.msra.mxu0 0.0
        %4801 = vmatprep.subr.mxu0 0.0
        %4802 = vmatpush1.msra.mxu0 0.0
        %4803 = vmatprep.mubr.f32.mxu0 0.0
        %4804 = vmatmul.mubr.f32.gmra.mrb[0].mxu0 %v559
        %v4805 = vpop.f32.mrb[0].mxu0
        %v4806 = vadd.f32 0.0, %v4805
        %v4807 = vpop.f32.mrb[0].mxu0
        %4808 = vmatprep.mubr.f32.mxu0 0.0
        %4809 = vmatmul.mubr.f32.gmra.mrb[0].mxu0 %v562
        %v4810 = vpop.f32.mrb[0].mxu0
        %v4811 = vadd.f32 0.0, %v4810
        %v4812 = vpop.f32.mrb[0].mxu0
        %4813 = vmatprep.mubr.f32.mxu0 0.0
        %4814 = vmatmul.mubr.f32.gmra.mrb[0].mxu0 %v565
        %v4815 = vpop.f32.mrb[0].mxu0
        %v4816 = vadd.f32 0.0, %v4815
        %v4817 = vpop.f32.mrb[0].mxu0
        %4818 = vmatprep.mubr.f32.mxu0 0.0
        %4819 = vmatmul.mubr.f32.gmra.mrb[0].mxu0 %v568
        %v4820 = vpop.f32.mrb[0].mxu0
        %v4821 = vadd.f32 0.0, %v4820
        %v4822 = vpop.f32.mrb[0].mxu0
        %4823 = vdwg.mxu0
        %v4824 = vld [vmem:[#allocation11] sm:$0xff]
        %v4825 = vld [vmem:[#allocation11 + $0x8] sm:$0xff]
        %v4826 = vld [vmem:[#allocation11 + $0x10] sm:$0xff]
        %v4827 = vld [vmem:[#allocation11 + $0x18] sm:$0xff]
        %v4828 = vld [vmem:[#allocation11 + $0x20] sm:$0xff]
        %v4829 = vld [vmem:[#allocation11 + $0x28] sm:$0xff]
        %v4830 = vld [vmem:[#allocation11 + $0x30] sm:$0xff]
        %v4831 = vld [vmem:[#allocation11 + $0x38] sm:$0xff]
        %v4832 = vld [vmem:[%s1357] sm:$0xff]
        %v4833 = vld [vmem:[%s1357 + $0x8] sm:$0xff]
        %v4834 = vld [vmem:[%s1357 + $0x10] sm:$0xff]
        %v4835 = vld [vmem:[%s1357 + $0x18] sm:$0xff]
        %v4836 = vld [vmem:[%s1357 + $0x20] sm:$0xff]
        %v4837 = vld [vmem:[%s1357 + $0x28] sm:$0xff]
        %v4838 = vld [vmem:[%s1357 + $0x30] sm:$0xff]
        %v4839 = vld [vmem:[%s1357 + $0x38] sm:$0xff]
        %v4841 = vsel %vm688, %v4806, 0
        %v4844 = vsel %vm688, %v4811, 0
        %4846 = vmatprep.subr.mxu0 %v4833
        %4847 = vmatpush1.msra.mxu0 %v4832
        %4848 = vmatprep.subr.mxu0 %v4835
        %4849 = vmatpush1.msra.mxu0 %v4834
        %4850 = vmatprep.subr.mxu0 %v4837
        %4851 = vmatpush1.msra.mxu0 %v4836
        %4852 = vmatprep.subr.mxu0 %v4839
        %4853 = vmatpush1.msra.mxu0 %v4838
        %4854 = vmatprep.subr.mxu0 0.0
        %4855 = vmatpush1.msra.mxu0 0.0
        %4856 = vmatprep.subr.mxu0 0.0
        %4857 = vmatpush1.msra.mxu0 0.0
        %4858 = vmatprep.subr.mxu0 0.0
        %4859 = vmatpush1.msra.mxu0 0.0
        %4860 = vmatprep.subr.mxu0 0.0
        %4861 = vmatpush1.msra.mxu0 0.0
        %4862 = vmatprep.subr.mxu0 0.0
        %4863 = vmatpush1.msra.mxu0 0.0
        %4864 = vmatprep.subr.mxu0 0.0
        %4865 = vmatpush1.msra.mxu0 0.0
        %4866 = vmatprep.subr.mxu0 0.0
        %4867 = vmatpush1.msra.mxu0 0.0
        %4868 = vmatprep.subr.mxu0 0.0
        %4869 = vmatpush1.msra.mxu0 0.0
        %4870 = vmatprep.subr.mxu0 0.0
        %4871 = vmatpush1.msra.mxu0 0.0
        %4872 = vmatprep.subr.mxu0 0.0
        %4873 = vmatpush1.msra.mxu0 0.0
        %4874 = vmatprep.subr.mxu0 0.0
        %4875 = vmatpush1.msra.mxu0 0.0
        %4876 = vmatprep.subr.mxu0 0.0
        %4877 = vmatpush1.msra.mxu0 0.0
        %4878 = vmatprep.subr.mxu0 0.0
        %4879 = vmatpush1.msra.mxu0 0.0
        %4880 = vmatprep.subr.mxu0 0.0
        %4881 = vmatpush1.msra.mxu0 0.0
        %4882 = vmatprep.subr.mxu0 0.0
        %4883 = vmatpush1.msra.mxu0 0.0
        %4884 = vmatprep.subr.mxu0 0.0
        %4885 = vmatpush1.msra.mxu0 0.0
        %4886 = vmatprep.subr.mxu0 0.0
        %4887 = vmatpush1.msra.mxu0 0.0
        %4888 = vmatprep.subr.mxu0 0.0
        %4889 = vmatpush1.msra.mxu0 0.0
        %4890 = vmatprep.subr.mxu0 0.0
        %4891 = vmatpush1.msra.mxu0 0.0
        %4892 = vmatprep.subr.mxu0 0.0
        %4893 = vmatpush1.msra.mxu0 0.0
        %4894 = vmatprep.subr.mxu0 0.0
        %4895 = vmatpush1.msra.mxu0 0.0
        %4896 = vmatprep.subr.mxu0 0.0
        %4897 = vmatpush1.msra.mxu0 0.0
        %4898 = vmatprep.subr.mxu0 0.0
        %4899 = vmatpush1.msra.mxu0 0.0
        %4900 = vmatprep.subr.mxu0 0.0
        %4901 = vmatpush1.msra.mxu0 0.0
        %4902 = vmatprep.subr.mxu0 0.0
        %4903 = vmatpush1.msra.mxu0 0.0
        %4904 = vmatprep.subr.mxu0 0.0
        %4905 = vmatpush1.msra.mxu0 0.0
        %4906 = vmatprep.subr.mxu0 0.0
        %4907 = vmatpush1.msra.mxu0 0.0
        %4908 = vmatprep.subr.mxu0 0.0
        %4909 = vmatpush1.msra.mxu0 0.0
        %4910 = vmatprep.mubr.f32.mxu0 0.0
        %4911 = vmatmul.mubr.f32.gmra.mrb[0].mxu0 %v4841
        %v4912 = vpop.f32.mrb[0].mxu0
        %v4913 = vadd.f32 0.0, %v4912
        %v4914 = vpop.f32.mrb[0].mxu0
        %v4915 = vadd.f32 0.0, %v4914
        %4916 = vmatprep.mubr.f32.mxu0 0.0
        %4917 = vmatmul.mubr.f32.gmra.mrb[0].mxu0 %v4844
        %v4918 = vpop.f32.mrb[0].mxu0
        %v4919 = vadd.f32 0.0, %v4918
        %v4920 = vpop.f32.mrb[0].mxu0
        %v4921 = vadd.f32 0.0, %v4920
        %4922 = vdwg.mxu0
        %v4924 = vsel %vm688, %v4737, 0
        %v4927 = vsel %vm688, %v4738, 0
        %4929 = vmatprep.subr.mxu0 %v4825
        %4930 = vmatpush1.msra.mxu0 %v4824
        %4931 = vmatprep.subr.mxu0 %v4827
        %4932 = vmatpush1.msra.mxu0 %v4826
        %4933 = vmatprep.subr.mxu0 %v4829
        %4934 = vmatpush1.msra.mxu0 %v4828
        %4935 = vmatprep.subr.mxu0 %v4831
        %4936 = vmatpush1.msra.mxu0 %v4830
        %4937 = vmatprep.subr.mxu0 0.0
        %4938 = vmatpush1.msra.mxu0 0.0
        %4939 = vmatprep.subr.mxu0 0.0
        %4940 = vmatpush1.msra.mxu0 0.0
        %4941 = vmatprep.subr.mxu0 0.0
        %4942 = vmatpush1.msra.mxu0 0.0
        %4943 = vmatprep.subr.mxu0 0.0
        %4944 = vmatpush1.msra.mxu0 0.0
        %4945 = vmatprep.subr.mxu0 0.0
        %4946 = vmatpush1.msra.mxu0 0.0
        %4947 = vmatprep.subr.mxu0 0.0
        %4948 = vmatpush1.msra.mxu0 0.0
        %4949 = vmatprep.subr.mxu0 0.0
        %4950 = vmatpush1.msra.mxu0 0.0
        %4951 = vmatprep.subr.mxu0 0.0
        %4952 = vmatpush1.msra.mxu0 0.0
        %4953 = vmatprep.subr.mxu0 0.0
        %4954 = vmatpush1.msra.mxu0 0.0
        %4955 = vmatprep.subr.mxu0 0.0
        %4956 = vmatpush1.msra.mxu0 0.0
        %4957 = vmatprep.subr.mxu0 0.0
        %4958 = vmatpush1.msra.mxu0 0.0
        %4959 = vmatprep.subr.mxu0 0.0
        %4960 = vmatpush1.msra.mxu0 0.0
        %4961 = vmatprep.subr.mxu0 0.0
        %4962 = vmatpush1.msra.mxu0 0.0
        %4963 = vmatprep.subr.mxu0 0.0
        %4964 = vmatpush1.msra.mxu0 0.0
        %4965 = vmatprep.subr.mxu0 0.0
        %4966 = vmatpush1.msra.mxu0 0.0
        %4967 = vmatprep.subr.mxu0 0.0
        %4968 = vmatpush1.msra.mxu0 0.0
        %4969 = vmatprep.subr.mxu0 0.0
        %4970 = vmatpush1.msra.mxu0 0.0
        %4971 = vmatprep.subr.mxu0 0.0
        %4972 = vmatpush1.msra.mxu0 0.0
        %4973 = vmatprep.subr.mxu0 0.0
        %4974 = vmatpush1.msra.mxu0 0.0
        %4975 = vmatprep.subr.mxu0 0.0
        %4976 = vmatpush1.msra.mxu0 0.0
        %4977 = vmatprep.subr.mxu0 0.0
        %4978 = vmatpush1.msra.mxu0 0.0
        %4979 = vmatprep.subr.mxu0 0.0
        %4980 = vmatpush1.msra.mxu0 0.0
        %4981 = vmatprep.subr.mxu0 0.0
        %4982 = vmatpush1.msra.mxu0 0.0
        %4983 = vmatprep.subr.mxu0 0.0
        %4984 = vmatpush1.msra.mxu0 0.0
        %4985 = vmatprep.subr.mxu0 0.0
        %4986 = vmatpush1.msra.mxu0 0.0
        %4987 = vmatprep.subr.mxu0 0.0
        %4988 = vmatpush1.msra.mxu0 0.0
        %4989 = vmatprep.subr.mxu0 0.0
        %4990 = vmatpush1.msra.mxu0 0.0
        %4991 = vmatprep.subr.mxu0 0.0
        %4992 = vmatpush1.msra.mxu0 0.0
        %4993 = vmatprep.mubr.f32.mxu0 0.0
        %4994 = vmatmul.mubr.f32.gmra.mrb[0].mxu0 %v4924
        %v4995 = vpop.f32.mrb[0].mxu0
        %v4996 = vadd.f32 %v4913, %v4995
        %v4997 = vpop.f32.mrb[0].mxu0
        %v4998 = vadd.f32 %v4915, %v4997
        %4999 = vmatprep.mubr.f32.mxu0 0.0
        %5000 = vmatmul.mubr.f32.gmra.mrb[0].mxu0 %v4927
        %v5001 = vpop.f32.mrb[0].mxu0
        %v5002 = vadd.f32 %v4919, %v5001
        %v5003 = vpop.f32.mrb[0].mxu0
        %v5004 = vadd.f32 %v4921, %v5003
        %5005 = vdwg.mxu0
        %v5006 = vld [vmem:[%s1532] sm:$0xff]
        %v5007 = vld [vmem:[%s1532 + $0x8] sm:$0xff]
        %v5008 = vld [vmem:[%s1532 + $0x10] sm:$0xff]
        %v5009 = vld [vmem:[%s1532 + $0x18] sm:$0xff]
        %v5010 = vld [vmem:[%s1532 + $0x20] sm:$0xff]
        %v5011 = vld [vmem:[%s1532 + $0x28] sm:$0xff]
        %v5012 = vld [vmem:[%s1532 + $0x30] sm:$0xff]
        %v5013 = vld [vmem:[%s1532 + $0x38] sm:$0xff]
        %v5015 = vsel %vm688, %v4816, 0
        %v5018 = vsel %vm688, %v4821, 0
        %5020 = vmatprep.subr.mxu0 %v5007
        %5021 = vmatpush1.msra.mxu0 %v5006
        %5022 = vmatprep.subr.mxu0 %v5009
        %5023 = vmatpush1.msra.mxu0 %v5008
        %5024 = vmatprep.subr.mxu0 %v5011
        %5025 = vmatpush1.msra.mxu0 %v5010
        %5026 = vmatprep.subr.mxu0 %v5013
        %5027 = vmatpush1.msra.mxu0 %v5012
        %5028 = vmatprep.subr.mxu0 0.0
        %5029 = vmatpush1.msra.mxu0 0.0
        %5030 = vmatprep.subr.mxu0 0.0
        %5031 = vmatpush1.msra.mxu0 0.0
        %5032 = vmatprep.subr.mxu0 0.0
        %5033 = vmatpush1.msra.mxu0 0.0
        %5034 = vmatprep.subr.mxu0 0.0
        %5035 = vmatpush1.msra.mxu0 0.0
        %5036 = vmatprep.subr.mxu0 0.0
        %5037 = vmatpush1.msra.mxu0 0.0
        %5038 = vmatprep.subr.mxu0 0.0
        %5039 = vmatpush1.msra.mxu0 0.0
        %5040 = vmatprep.subr.mxu0 0.0
        %5041 = vmatpush1.msra.mxu0 0.0
        %5042 = vmatprep.subr.mxu0 0.0
        %5043 = vmatpush1.msra.mxu0 0.0
        %5044 = vmatprep.subr.mxu0 0.0
        %5045 = vmatpush1.msra.mxu0 0.0
        %5046 = vmatprep.subr.mxu0 0.0
        %5047 = vmatpush1.msra.mxu0 0.0
        %5048 = vmatprep.subr.mxu0 0.0
        %5049 = vmatpush1.msra.mxu0 0.0
        %5050 = vmatprep.subr.mxu0 0.0
        %5051 = vmatpush1.msra.mxu0 0.0
        %5052 = vmatprep.subr.mxu0 0.0
        %5053 = vmatpush1.msra.mxu0 0.0
        %5054 = vmatprep.subr.mxu0 0.0
        %5055 = vmatpush1.msra.mxu0 0.0
        %5056 = vmatprep.subr.mxu0 0.0
        %5057 = vmatpush1.msra.mxu0 0.0
        %5058 = vmatprep.subr.mxu0 0.0
        %5059 = vmatpush1.msra.mxu0 0.0
        %5060 = vmatprep.subr.mxu0 0.0
        %5061 = vmatpush1.msra.mxu0 0.0
        %5062 = vmatprep.subr.mxu0 0.0
        %5063 = vmatpush1.msra.mxu0 0.0
        %5064 = vmatprep.subr.mxu0 0.0
        %5065 = vmatpush1.msra.mxu0 0.0
        %5066 = vmatprep.subr.mxu0 0.0
        %5067 = vmatpush1.msra.mxu0 0.0
        %5068 = vmatprep.subr.mxu0 0.0
        %5069 = vmatpush1.msra.mxu0 0.0
        %5070 = vmatprep.subr.mxu0 0.0
        %5071 = vmatpush1.msra.mxu0 0.0
        %5072 = vmatprep.subr.mxu0 0.0
        %5073 = vmatpush1.msra.mxu0 0.0
        %5074 = vmatprep.subr.mxu0 0.0
        %5075 = vmatpush1.msra.mxu0 0.0
        %5076 = vmatprep.subr.mxu0 0.0
        %5077 = vmatpush1.msra.mxu0 0.0
        %5078 = vmatprep.subr.mxu0 0.0
        %5079 = vmatpush1.msra.mxu0 0.0
        %5080 = vmatprep.subr.mxu0 0.0
        %5081 = vmatpush1.msra.mxu0 0.0
        %5082 = vmatprep.subr.mxu0 0.0
        %5083 = vmatpush1.msra.mxu0 0.0
        %5084 = vmatprep.mubr.f32.mxu0 0.0
        %5085 = vmatmul.mubr.f32.gmra.mrb[0].mxu0 %v5015
        %v5086 = vpop.f32.mrb[0].mxu0
        %v5087 = vadd.f32 0.0, %v5086
        %v5088 = vpop.f32.mrb[0].mxu0
        %v5089 = vadd.f32 0.0, %v5088
        %5090 = vmatprep.mubr.f32.mxu0 0.0
        %5091 = vmatmul.mubr.f32.gmra.mrb[0].mxu0 %v5018
        %v5092 = vpop.f32.mrb[0].mxu0
        %v5093 = vadd.f32 0.0, %v5092
        %v5094 = vpop.f32.mrb[0].mxu0
        %v5095 = vadd.f32 0.0, %v5094
        %5096 = vdwg.mxu0
        %v5097 = vadd.f32 %v4996, %v5087
        %v5098 = vadd.f32 %v4998, %v5089
        %v5099 = vadd.f32 %v5002, %v5093
        %v5100 = vadd.f32 %v5004, %v5095
        %v5101 = vmul.f32 %v5097, %v547
        %v5102 = vmul.f32 %v5098, %v548
        %v5103 = vmul.f32 %v5099, %v549
        %v5104 = vmul.f32 %v5100, %v550
        %5107 = vrot.lane.b32.xlu0 %v5101, 96
        %v5108 = vpop.permute.xlu0 %5107
        %5109 = vrot.lane.b32.xlu0 %v5103, 96
        %v5110 = vpop.permute.xlu0 %5109
        %v5113 = vadd.f32 %v5101, %v5108
        %v5114 = vadd.f32 %v5103, %v5110
        %5115 = vrot.lane.b32.xlu0 %v5101, 64
        %v5116 = vpop.permute.xlu0 %5115
        %5117 = vrot.lane.b32.xlu0 %v5103, 64
        %v5118 = vpop.permute.xlu0 %5117
        %v5121 = vadd.f32 %v5113, %v5116
        %v5122 = vadd.f32 %v5114, %v5118
        %5123 = vrot.lane.b32.xlu0 %v5101, 32
        %v5124 = vpop.permute.xlu0 %5123
        %5125 = vrot.lane.b32.xlu0 %v5103, 32
        %v5126 = vpop.permute.xlu0 %5125
        %v5129 = vadd.f32 %v5121, %v5124
        %v5130 = vadd.f32 %v5122, %v5126
        %v5131 = vadd.f32 %v5129, %v5102
        %v5132 = vadd.f32 %v5130, %v5104
        %5135 = vrot.lane.b32.xlu0 %v5102, 96
        %v5136 = vpop.permute.xlu0 %5135
        %5137 = vrot.lane.b32.xlu0 %v5104, 96
        %v5138 = vpop.permute.xlu0 %5137
        %v5141 = vadd.f32 %v5131, %v5136
        %v5142 = vadd.f32 %v5132, %v5138
        %5143 = vrot.lane.b32.xlu0 %v5102, 64
        %v5144 = vpop.permute.xlu0 %5143
        %5145 = vrot.lane.b32.xlu0 %v5104, 64
        %v5146 = vpop.permute.xlu0 %5145
        %v5149 = vadd.f32 %v5141, %v5144
        %v5150 = vadd.f32 %v5142, %v5146
        %5151 = vrot.lane.b32.xlu0 %v5102, 32
        %v5152 = vpop.permute.xlu0 %5151
        %5153 = vrot.lane.b32.xlu0 %v5104, 32
        %v5154 = vpop.permute.xlu0 %5153
        %v5157 = vadd.f32 %v5149, %v5152
        %v5158 = vadd.f32 %v5150, %v5154
        %v5159 = vadd.f32 %v5157, %v4044
        %v5160 = vadd.f32 %v5158, %v4045
        %v5161 = vtanh.pop %v5159
        %v5162 = vtanh.pop %v5160
        %5163 = vrot.lane.b32.xlu0 %v4046, 32
        %v5164 = vpop.permute.xlu0 %5163
        %5165 = vrot.lane.b32.xlu0 %v4047, 32
        %v5166 = vpop.permute.xlu0 %5165
        %v5169 = vmul.f32 %v4734, %v5164
        %v5170 = vmul.f32 %v4736, %v5166
        %v5171 = vsub.f32 1.0, %v4734
        %v5172 = vsub.f32 1.0, %v4736
        %5175 = vrot.lane.b32.xlu0 %v5161, 32
        %v5176 = vpop.permute.xlu0 %5175
        %5177 = vrot.lane.b32.xlu0 %v5162, 32
        %v5178 = vpop.permute.xlu0 %5177
        %v5181 = vmul.f32 %v5171, %v5176
        %v5182 = vmul.f32 %v5172, %v5178
        %v5183 = vadd.f32 %v5169, %v5181
        %v5184 = vadd.f32 %v5170, %v5182
        %5187 = vrot.lane.b32.xlu0 %v5183, 96
        %v5188 = vpop.permute.xlu0 %5187
        %5189 = vrot.lane.b32.xlu0 %v5184, 96
        %v5190 = vpop.permute.xlu0 %5189
        %5193 = vst.msk [vmem:[#allocation2] sm:$0xff] %vm688, %v5188
        %5194 = vst.msk [vmem:[#allocation2 + $0x8] sm:$0xff] %vm688, %v5190
        %s5195 = scalar_lea.vmem %s518, 48 [#allocation14]
        %5196 = vst.msk [vmem:[%s5195] sm:$0xff] %vm688, %v5188
        %5197 = vst.msk [vmem:[%s5195 + $0x8] sm:$0xff] %vm688, %v5190
        %s5198 = sand.u32 %s239, 1
        %s5199 = scalar_lea.sflag [#allocation5], %s5198
        %s5200 = sand.u32 %s239, 1
        %s5201 = smul.addr %s5200, 64
        %s5202 = scalar_lea.vmem [#allocation14], %s5201
        // Predicated region
        $region81: #{tpu_custom_call.1} parent=51 // pred_check
          %p5203 = pneg %p249
        $region82: #{tpu_custom_call.1} parent=51 // pred_check_branch
          %5205 = sbr.rel (%p5203) target = $region84
        $region83: #{tpu_custom_call.1} parent=51 // pred_region
          #allocation20 [shape = 'u32[6]{0}', space=smem, size = 0x18, scoped, tag = 'DMA stride descriptor']
          %s5206 = smul.u32 4, %s35
          %s5207 = smul.u32 2, %s34
          %s5209 = ssub.s32 1024, 1024
          %5210 = vsyncadd %s5199, %s5209
          %s5211 = smul.addr %s5206, 4
          %s5212 = sadd.s32 %s5207, %s5211
          %s5213 = smul.addr %s5212, 128
          %s5214 = scalar_lea.hbm %s8, %s5213
          %s5216 = sshll.u32 1, 14
          %s5217 = sxor.u32 4294967295, %s5216
          %s5220 = sshll.u32 7, 18
          %s5221 = sxor.u32 4294967295, %s5220
          %s5222 = sand.u32 0, %s5221
          %s5224 = sor.u32 %s5222, 0
          %s5226 = sshll.u32 3, 24
          %s5227 = sxor.u32 4294967295, %s5226
          %s5228 = sand.u32 %s5224, %s5227
          %s5230 = sor.u32 %s5228, 0
          %s5231 = sshll.u32 %s5202, 4
          %s5232 = int_to_ptr.vmem [resolvable:$true] %s5231
          %5238 = sst [smem:[#allocation20]] 256
          %s5239 = scalar_lea.smem [#allocation20], 1
          %5240 = sst [smem:[%s5239]] 512
          %s5241 = scalar_lea.smem [#allocation20], 2
          %5242 = sst [smem:[%s5241]] 2
          %s5243 = scalar_lea.smem [#allocation20], 3
          %5244 = sst [smem:[%s5243]] 128
          %s5245 = scalar_lea.smem [#allocation20], 4
          %5246 = sst [smem:[%s5245]] 128
          %s5247 = scalar_lea.smem [#allocation20], 5
          %5248 = sst [smem:[%s5247]] 8
          %5250 = dma.general %s5232, 1024, %s5214, %s5199, [#allocation19], [#allocation20], %s5230, 0
        $region84: #{tpu_custom_call.1} parent=51 // pred_fallthru
          _
      $region52: #{tpu_custom_call.1} parent=5 // pred_fallthru
        _
      %p5251 = scmp.le.s32.totalorder 2, %s25
      // Predicated region
      $region85: #{tpu_custom_call.1} parent=5 // pred_check
        %p5252 = pneg %p5251
      $region86: #{tpu_custom_call.1} parent=5 // pred_check_branch
        %5254 = sbr.rel (%p5252) target = $region88
      $region87: #{tpu_custom_call.1} parent=5 // pred_region
        %s5255 = ssub.s32 %s25, 2
        // Predicated region
        $region89: #{tpu_custom_call.1} parent=87 // pred_check
          %p5256 = pneg %p255
        $region90: #{tpu_custom_call.1} parent=87 // pred_check_branch
          %5258 = sbr.rel (%p5256) target = $region92
        $region91: #{tpu_custom_call.1} parent=87 // pred_region
          %s5259 = sand.u32 %s240, 1
          %s5260 = scalar_lea.sflag [#allocation5], %s5259
          %s5261 = sand.u32 %s240, 1
          %s5262 = smul.addr %s5261, 64
          %s5263 = scalar_lea.vmem [#allocation14], %s5262
          %5264 = dma.done %s5260, 1024
        $region92: #{tpu_custom_call.1} parent=87 // pred_fallthru
          _
      $region88: #{tpu_custom_call.1} parent=5 // pred_fallthru
        _
    $region6: #{tpu_custom_call.1} parent=1 // loop_footer
      %s29 = sadd.s32 1, %s25
    $region7: #{tpu_custom_call.1} parent=1 // loop_footer_branch
      %24 = sbr.rel target = $region3
    $region8: #{tpu_custom_call.1} parent=1 // loop_exit
      _
    %5265 = vsyncpa [#allocation4], 1
    %s5266 = scalar_lea.sflag [#allocation4], 1
    %5267 = vsyncpa %s5266, 1
    %5268 = vsyncpa [#allocation7], 1
    %s5269 = scalar_lea.sflag [#allocation7], 1
    %5270 = vsyncpa %s5269, 1
    %5271 = vsyncpa [#allocation10], 1
    %5272 = vsyncpa [#allocation13], 1
    %5273 = vsyncpa [#allocation5], 1
    %s5274 = scalar_lea.sflag [#allocation5], 1
    %5275 = vsyncpa %s5274, 1

</llo_original>
